<compile_context>
chip_gen: v7x
topology: tpu7x:2x2x1
jax: 0.10.0
libtpu: 0.0.40
codegen_flags: <defaults>
</compile_context>

<pallas_src>
import functools

import jax
import jax.numpy as jnp
from jax import lax
from jax.experimental import pallas as pl
from jax.experimental.pallas import tpu as pltpu

# ---- small, self-consistent hyperparameters (scaled-down GptModel) ---------
EMBED = 32           # embeddings_count
TOKEN_SIZE = 8       # token_size (max sequence length)
NUM_HEADS = 4        # num_heads
HEAD_DIM = EMBED // NUM_HEADS
NUM_LAYERS = 2       # num_layer
VOCAB = 16           # chars_num
VOCAB_PAD = 128      # lane-dense padded vocab width for the logits store
HIDDEN = 4 * EMBED   # FFN hidden width (128 — lane dense)
LN_EPS = 1e-5


def _layer_norm(x, gamma, beta):
    mu = jnp.mean(x, axis=-1, keepdims=True)
    var = jnp.mean(jnp.square(x - mu), axis=-1, keepdims=True)
    return (x - mu) * lax.rsqrt(var + LN_EPS) * gamma + beta


# ---------------------------------------------------------------------------
# Fused forward kernel (one grid step = one batch row):
#   embed gather+pos -> [LN1 -> batched causal MHA -> +res -> LN2 -> FFN
#   -> +res] x L -> LNf -> vocab projection (padded to 128 lanes)
# ---------------------------------------------------------------------------
def gpt_kernel(idx_ref,                                  # SMEM (B, T) int32
               tok_ref, pos_ref,
               ln1g_ref, ln1b_ref, wq_ref, wk_ref, wv_ref, wo_ref, bo_ref,
               ln2g_ref, ln2b_ref, w1_ref, b1_ref, w2_ref, b2_ref,
               lnfg_ref, lnfb_ref, wout_ref, bout_ref,
               out_ref,
               x_vmem,                                   # VMEM (T, C) scratch
               *, seq_len):
    T = seq_len
    C = EMBED
    H = NUM_HEADS
    hs = HEAD_DIM
    scale = hs ** -0.5
    b = pl.program_id(0)

    # ---- fused embedding gather + positional add ---------------------------
    # tok_emb is stored (V, 1, C): a dynamic leading-axis load yields one
    # (1, C) row with plain address arithmetic (no sublane shuffles).
    for t in range(T):
        tok_row = tok_ref[idx_ref[b, t]]                  # (1, C)
        x_vmem[pl.ds(t, 1), :] = tok_row + pos_ref[pl.ds(t, 1), :]
    x = x_vmem[...]                                       # (T, C) f32

    # causal additive mask (finite), computed once, reused across layers.
    rows = lax.broadcasted_iota(jnp.int32, (T, T), 0)
    cols = lax.broadcasted_iota(jnp.int32, (T, T), 1)
    neg_mask = jnp.where(rows >= cols, 0.0, -1e9).astype(jnp.float32)

    for l in range(NUM_LAYERS):                           # static unroll (L=2)
        # ---- LayerNorm 1 + Q/K/V projections (each starts at lane 0) -------
        xln = _layer_norm(x, ln1g_ref[l], ln1b_ref[l])
        q = jnp.dot(xln, wq_ref[l], preferred_element_type=jnp.float32)
        k = jnp.dot(xln, wk_ref[l], preferred_element_type=jnp.float32)
        v = jnp.dot(xln, wv_ref[l], preferred_element_type=jnp.float32)

        # head-batched layouts via cheap 2D transposes + sublane-split reshape
        qh = jnp.swapaxes(q.T.reshape(H, hs, T), 1, 2)    # (H, T, hs)
        kh = k.T.reshape(H, hs, T)                        # (H, hs, T)
        vh = v.T.reshape(H, hs, T)                        # (H, hs, T)

        # ---- causal attention: ONE batched dot over all heads --------------
        s = jnp.einsum('hqd,hdk->hqk', qh, kh,
                       preferred_element_type=jnp.float32) * scale
        s = s + neg_mask[None, :, :]
        s = s - jnp.max(s, axis=-1, keepdims=True)
        p = jnp.exp(s)
        p = p / jnp.sum(p, axis=-1, keepdims=True)        # exact divide
        # TODO(synk): attention dropout skipped — eval mode.

        # P @ V for all heads (batched), produced head-major-transposed so a
        # single 2D transpose recovers the (T, C) head-concat layout.
        o_t = jnp.einsum('hdk,hqk->hdq', vh, p,
                         preferred_element_type=jnp.float32)   # (H, hs, T)
        attn = o_t.reshape(C, T).T                             # (T, C)

        attn = jnp.dot(attn, wo_ref[l],
                       preferred_element_type=jnp.float32) + bo_ref[l]
        x = x + attn                                           # residual

        # ---- LayerNorm 2 + feed-forward -------------------------------------
        xln2 = _layer_norm(x, ln2g_ref[l], ln2b_ref[l])
        h1 = jnp.dot(xln2, w1_ref[l],
                     preferred_element_type=jnp.float32) + b1_ref[l]
        h1 = jnp.maximum(h1, 0.0)                              # ReLU
        ff = jnp.dot(h1, w2_ref[l],
                     preferred_element_type=jnp.float32) + b2_ref[l]
        x = x + ff                                             # residual
        # TODO(synk): proj / FFN dropout skipped — eval mode.

    # ---- final LayerNorm + vocab head (lane-dense padded output) -----------
    xf = _layer_norm(x, lnfg_ref[...], lnfb_ref[...])
    logits = jnp.dot(xf, wout_ref[...],
                     preferred_element_type=jnp.float32) + bout_ref[...]
    out_ref[...] = logits.astype(out_ref.dtype)           # (T, 128) unmasked vst


# ---------------------------------------------------------------------------
# Full GptModel forward (only the optional loss is plain-JAX glue)
# ---------------------------------------------------------------------------
def gpt_forward(index, params, targets=None):
    B, T = index.shape
    C, L = EMBED, NUM_LAYERS

    kernel = functools.partial(gpt_kernel, seq_len=T)
    grid_spec = pltpu.PrefetchScalarGridSpec(
        num_scalar_prefetch=1,                  # `index` -> SMEM
        grid=(B,),                              # one grid step per batch row
        in_specs=[
            pl.BlockSpec((VOCAB, 1, C), lambda b, idx: (0, 0, 0)),      # tok_emb
            pl.BlockSpec((TOKEN_SIZE, C), lambda b, idx: (0, 0)),       # pos_emb
            pl.BlockSpec((L, C), lambda b, idx: (0, 0)),                # ln1_g
            pl.BlockSpec((L, C), lambda b, idx: (0, 0)),                # ln1_b
            pl.BlockSpec((L, C, C), lambda b, idx: (0, 0, 0)),          # wq
            pl.BlockSpec((L, C, C), lambda b, idx: (0, 0, 0)),          # wk
            pl.BlockSpec((L, C, C), lambda b, idx: (0, 0, 0)),          # wv
            pl.BlockSpec((L, C, C), lambda b, idx: (0, 0, 0)),          # wo
            pl.BlockSpec((L, C), lambda b, idx: (0, 0)),                # bo
            pl.BlockSpec((L, C), lambda b, idx: (0, 0)),                # ln2_g
            pl.BlockSpec((L, C), lambda b, idx: (0, 0)),                # ln2_b
            pl.BlockSpec((L, C, HIDDEN), lambda b, idx: (0, 0, 0)),     # w1
            pl.BlockSpec((L, HIDDEN), lambda b, idx: (0, 0)),           # b1
            pl.BlockSpec((L, HIDDEN, C), lambda b, idx: (0, 0, 0)),     # w2
            pl.BlockSpec((L, C), lambda b, idx: (0, 0)),                # b2
            pl.BlockSpec((1, C), lambda b, idx: (0, 0)),                # lnf_g
            pl.BlockSpec((1, C), lambda b, idx: (0, 0)),                # lnf_b
            pl.BlockSpec((C, VOCAB_PAD), lambda b, idx: (0, 0)),        # w_out_pad
            pl.BlockSpec((1, VOCAB_PAD), lambda b, idx: (0, 0)),        # b_out_pad
        ],
        out_specs=pl.BlockSpec((T, VOCAB_PAD), lambda b, idx: (b, 0)),
        scratch_shapes=[pltpu.VMEM((T, C), jnp.float32)],
    )

    logits_pad = pl.pallas_call(
        kernel,
        out_shape=jax.ShapeDtypeStruct((B * T, VOCAB_PAD), jnp.float32),
        grid_spec=grid_spec,
        compiler_params=pltpu.CompilerParams(
            dimension_semantics=("parallel",)),   # v7x: 2 TCs split the batch
    )(index.astype(jnp.int32),
      params['tok_emb'], params['pos_emb'],
      params['ln1_g'], params['ln1_b'],
      params['wq'], params['wk'], params['wv'], params['wo'], params['bo'],
      params['ln2_g'], params['ln2_b'],
      params['w1'], params['b1'], params['w2'], params['b2'],
      params['lnf_g'], params['lnf_b'],
      params['w_out_pad'], params['b_out_pad'])

    logits = logits_pad[:, :VOCAB].reshape(B, T, VOCAB)

    loss = None
    if targets is not None:
        flat = logits.reshape(B * T, VOCAB)
        tflat = targets.reshape(B * T)
        logz = jax.nn.logsumexp(flat, axis=-1)
        picked = jnp.take_along_axis(flat, tflat[:, None], axis=-1)[:, 0]
        loss = jnp.mean(logz - picked)
    return logits, loss


# ---------------------------------------------------------------------------
# Deterministic parameter initialization (layer-stacked, all float32)
# ---------------------------------------------------------------------------
def init_params(key):
    C, V, T, L, HID = EMBED, VOCAB, TOKEN_SIZE, NUM_LAYERS, HIDDEN

    def nrm(k, shape, scale=0.02):
        return (scale * jax.random.normal(k, shape)).astype(jnp.float32)

    keys = jax.random.split(key, 9)

    w_out = nrm(keys[2], (C, V))
    w_out_pad = jnp.zeros((C, VOCAB_PAD), jnp.float32).at[:, :V].set(w_out)

    params = {
        # (V, 1, C): dynamic leading-axis row loads inside the kernel.
        'tok_emb': nrm(keys[0], (V, 1, C)),
        'pos_emb': nrm(keys[1], (T, C)),
        # per-layer params stacked on a leading layer axis (flattened biases).
        'ln1_g': jnp.ones((L, C), jnp.float32),
        'ln1_b': jnp.zeros((L, C), jnp.float32),
        # q/k/v as separate (C, C) mats; columns ordered [head0 | head1 | ...]
        # to match the torch per-Head Linear concatenation order.
        'wq': nrm(keys[3], (L, C, C)),
        'wk': nrm(keys[4], (L, C, C)),
        'wv': nrm(keys[5], (L, C, C)),
        'wo': nrm(keys[6], (L, C, C)),
        'bo': jnp.zeros((L, C), jnp.float32),
        'ln2_g': jnp.ones((L, C), jnp.float32),
        'ln2_b': jnp.zeros((L, C), jnp.float32),
        'w1': nrm(keys[7], (L, C, HID)),
        'b1': jnp.zeros((L, HID), jnp.float32),
        'w2': nrm(keys[8], (L, HID, C)),
        'b2': jnp.zeros((L, C), jnp.float32),
        'lnf_g': jnp.ones((1, C), jnp.float32),
        'lnf_b': jnp.zeros((1, C), jnp.float32),
        # vocab projection zero-padded to a lane-dense 128-wide output.
        'w_out_pad': w_out_pad,
        'b_out_pad': jnp.zeros((1, VOCAB_PAD), jnp.float32),
    }
    return params


# ---------------------------------------------------------------------------
# Pure-JAX reference (mirrors the kernel math) — used only for a sanity check
# ---------------------------------------------------------------------------
def gpt_forward_ref(index, params):
    B, T = index.shape
    C, H, hs = EMBED, NUM_HEADS, HEAD_DIM
    tok = params['tok_emb'][:, 0, :][index]                   # (B, T, C)
    x = tok + params['pos_emb'][:T][None, :, :]
    mask = jnp.tril(jnp.ones((T, T), bool))
    for l in range(NUM_LAYERS):
        xln = _layer_norm(x, params['ln1_g'][l], params['ln1_b'][l])
        q = (xln @ params['wq'][l]).reshape(B, T, H, hs).transpose(0, 2, 1, 3)
        k = (xln @ params['wk'][l]).reshape(B, T, H, hs).transpose(0, 2, 1, 3)
        v = (xln @ params['wv'][l]).reshape(B, T, H, hs).transpose(0, 2, 1, 3)
        s = (q @ jnp.swapaxes(k, -1, -2)) * (hs ** -0.5)
        s = jnp.where(mask[None, None], s, -1e9)
        p = jax.nn.softmax(s, axis=-1)
        o = (p @ v).transpose(0, 2, 1, 3).reshape(B, T, C)
        x = x + o @ params['wo'][l] + params['bo'][l]
        xln2 = _layer_norm(x, params['ln2_g'][l], params['ln2_b'][l])
        h1 = jax.nn.relu(xln2 @ params['w1'][l] + params['b1'][l])
        x = x + h1 @ params['w2'][l] + params['b2'][l]
    x = _layer_norm(x, params['lnf_g'][0], params['lnf_b'][0])
    return x @ params['w_out_pad'][:, :VOCAB] + params['b_out_pad'][0, :VOCAB]


if __name__ == "__main__":
    key = jax.random.PRNGKey(0)
    kp, kx = jax.random.split(key)
    params = init_params(kp)

    B, T = 2, TOKEN_SIZE
    index = jax.random.randint(kx, (B, T), 0, VOCAB, dtype=jnp.int32)

    logits, loss = gpt_forward(index, params, targets=None)
    logits = jax.block_until_ready(logits)

    assert logits.shape == (B, T, VOCAB), logits.shape
    assert bool(jnp.all(jnp.isfinite(logits))), "non-finite logits"
    assert loss is None

    ref = gpt_forward_ref(index, params)
    max_err = float(jnp.max(jnp.abs(logits - ref)))
    assert bool(jnp.allclose(logits, ref, atol=1e-3, rtol=1e-3)), max_err

    print("KERNEL_OK")
</pallas_src>

<mosaic_0001>
module attributes {stable_mosaic.version = 11 : i64} {
  func.func @gpt_kernel(%arg0: i32, %arg1: memref<2x8xi32, #tpu.memory_space<smem>>, %arg2: memref<16x1x32xf32, #tpu.memory_space<vmem>>, %arg3: memref<8x32xf32, #tpu.memory_space<vmem>>, %arg4: memref<2x32xf32, #tpu.memory_space<vmem>>, %arg5: memref<2x32xf32, #tpu.memory_space<vmem>>, %arg6: memref<2x32x32xf32, #tpu.memory_space<vmem>>, %arg7: memref<2x32x32xf32, #tpu.memory_space<vmem>>, %arg8: memref<2x32x32xf32, #tpu.memory_space<vmem>>, %arg9: memref<2x32x32xf32, #tpu.memory_space<vmem>>, %arg10: memref<2x32xf32, #tpu.memory_space<vmem>>, %arg11: memref<2x32xf32, #tpu.memory_space<vmem>>, %arg12: memref<2x32xf32, #tpu.memory_space<vmem>>, %arg13: memref<2x32x128xf32, #tpu.memory_space<vmem>>, %arg14: memref<2x128xf32, #tpu.memory_space<vmem>>, %arg15: memref<2x128x32xf32, #tpu.memory_space<vmem>>, %arg16: memref<2x32xf32, #tpu.memory_space<vmem>>, %arg17: memref<1x32xf32, #tpu.memory_space<vmem>>, %arg18: memref<1x32xf32, #tpu.memory_space<vmem>>, %arg19: memref<32x128xf32, #tpu.memory_space<vmem>>, %arg20: memref<1x128xf32, #tpu.memory_space<vmem>>, %arg21: memref<8x128xf32, #tpu.memory_space<vmem>>, %arg22: memref<8x32xf32, #tpu.memory_space<vmem>>) attributes {dimension_semantics = [#tpu.dimension_semantics<parallel>], iteration_bounds = array<i64: 2>, scalar_prefetch = 1 : i64, scratch_operands = 1 : i64, tpu.core_type = #tpu.core_type<tc>, window_params = [{pipeline_mode = #tpu.pipeline_mode<synchronous>, transform_indices = @transform_0, window_bounds = array<i64: 16, 1, 32>}, {pipeline_mode = #tpu.pipeline_mode<synchronous>, transform_indices = @transform_1, window_bounds = array<i64: 8, 32>}, {pipeline_mode = #tpu.pipeline_mode<synchronous>, transform_indices = @transform_2, window_bounds = array<i64: 2, 32>}, {pipeline_mode = #tpu.pipeline_mode<synchronous>, transform_indices = @transform_3, window_bounds = array<i64: 2, 32>}, {pipeline_mode = #tpu.pipeline_mode<synchronous>, transform_indices = @transform_4, window_bounds = array<i64: 2, 32, 32>}, {pipeline_mode = #tpu.pipeline_mode<synchronous>, transform_indices = @transform_5, window_bounds = array<i64: 2, 32, 32>}, {pipeline_mode = #tpu.pipeline_mode<synchronous>, transform_indices = @transform_6, window_bounds = array<i64: 2, 32, 32>}, {pipeline_mode = #tpu.pipeline_mode<synchronous>, transform_indices = @transform_7, window_bounds = array<i64: 2, 32, 32>}, {pipeline_mode = #tpu.pipeline_mode<synchronous>, transform_indices = @transform_8, window_bounds = array<i64: 2, 32>}, {pipeline_mode = #tpu.pipeline_mode<synchronous>, transform_indices = @transform_9, window_bounds = array<i64: 2, 32>}, {pipeline_mode = #tpu.pipeline_mode<synchronous>, transform_indices = @transform_10, window_bounds = array<i64: 2, 32>}, {pipeline_mode = #tpu.pipeline_mode<synchronous>, transform_indices = @transform_11, window_bounds = array<i64: 2, 32, 128>}, {pipeline_mode = #tpu.pipeline_mode<synchronous>, transform_indices = @transform_12, window_bounds = array<i64: 2, 128>}, {pipeline_mode = #tpu.pipeline_mode<synchronous>, transform_indices = @transform_13, window_bounds = array<i64: 2, 128, 32>}, {pipeline_mode = #tpu.pipeline_mode<synchronous>, transform_indices = @transform_14, window_bounds = array<i64: 2, 32>}, {pipeline_mode = #tpu.pipeline_mode<synchronous>, transform_indices = @transform_15, window_bounds = array<i64: 1, 32>}, {pipeline_mode = #tpu.pipeline_mode<synchronous>, transform_indices = @transform_16, window_bounds = array<i64: 1, 32>}, {pipeline_mode = #tpu.pipeline_mode<synchronous>, transform_indices = @transform_17, window_bounds = array<i64: 32, 128>}, {pipeline_mode = #tpu.pipeline_mode<synchronous>, transform_indices = @transform_18, window_bounds = array<i64: 1, 128>}, {transform_indices = @transform_19, window_bounds = array<i64: 8, 128>}]} {
    %0 = arith.index_cast %arg0 : i32 to index
    %c0 = arith.constant 0 : index
    %1 = memref.load %arg1[%0, %c0] : memref<2x8xi32, #tpu.memory_space<smem>>
    %2 = arith.index_cast %1 : i32 to index
    %c0_0 = arith.constant 0 : index
    %c0_1 = arith.constant 0 : index
    %3 = vector.load %arg2[%2, %c0_0, %c0_1] : memref<16x1x32xf32, #tpu.memory_space<vmem>>, vector<1x1x32xf32>
    %4 = vector.shape_cast %3 : vector<1x1x32xf32> to vector<1x32xf32>
    %c0_2 = arith.constant 0 : index
    %c0_3 = arith.constant 0 : index
    %5 = vector.load %arg3[%c0_2, %c0_3] : memref<8x32xf32, #tpu.memory_space<vmem>>, vector<1x32xf32>
    %6 = arith.addf %4, %5 : vector<1x32xf32>
    %c0_4 = arith.constant 0 : index
    %c0_5 = arith.constant 0 : index
    %7 = vector.load %arg22[%c0_4, %c0_5] : memref<8x32xf32, #tpu.memory_space<vmem>>, vector<1x32xf32>
    tpu.vector_store %arg22[%c0_4, %c0_5], %6 {strides = array<i32>} : memref<8x32xf32, #tpu.memory_space<vmem>>, vector<1x32xf32>,
    %8 = arith.index_cast %arg0 : i32 to index
    %c1 = arith.constant 1 : index
    %9 = memref.load %arg1[%8, %c1] : memref<2x8xi32, #tpu.memory_space<smem>>
    %10 = arith.index_cast %9 : i32 to index
    %c0_6 = arith.constant 0 : index
    %c0_7 = arith.constant 0 : index
    %11 = vector.load %arg2[%10, %c0_6, %c0_7] : memref<16x1x32xf32, #tpu.memory_space<vmem>>, vector<1x1x32xf32>
    %12 = vector.shape_cast %11 : vector<1x1x32xf32> to vector<1x32xf32>
    %c1_8 = arith.constant 1 : index
    %c0_9 = arith.constant 0 : index
    %13 = vector.load %arg3[%c1_8, %c0_9] : memref<8x32xf32, #tpu.memory_space<vmem>>, vector<1x32xf32>
    %14 = arith.addf %12, %13 : vector<1x32xf32>
    %c1_10 = arith.constant 1 : index
    %c0_11 = arith.constant 0 : index
    %15 = vector.load %arg22[%c1_10, %c0_11] : memref<8x32xf32, #tpu.memory_space<vmem>>, vector<1x32xf32>
    tpu.vector_store %arg22[%c1_10, %c0_11], %14 {strides = array<i32>} : memref<8x32xf32, #tpu.memory_space<vmem>>, vector<1x32xf32>,
    %16 = arith.index_cast %arg0 : i32 to index
    %c2 = arith.constant 2 : index
    %17 = memref.load %arg1[%16, %c2] : memref<2x8xi32, #tpu.memory_space<smem>>
    %18 = arith.index_cast %17 : i32 to index
    %c0_12 = arith.constant 0 : index
    %c0_13 = arith.constant 0 : index
    %19 = vector.load %arg2[%18, %c0_12, %c0_13] : memref<16x1x32xf32, #tpu.memory_space<vmem>>, vector<1x1x32xf32>
    %20 = vector.shape_cast %19 : vector<1x1x32xf32> to vector<1x32xf32>
    %c2_14 = arith.constant 2 : index
    %c0_15 = arith.constant 0 : index
    %21 = vector.load %arg3[%c2_14, %c0_15] : memref<8x32xf32, #tpu.memory_space<vmem>>, vector<1x32xf32>
    %22 = arith.addf %20, %21 : vector<1x32xf32>
    %c2_16 = arith.constant 2 : index
    %c0_17 = arith.constant 0 : index
    %23 = vector.load %arg22[%c2_16, %c0_17] : memref<8x32xf32, #tpu.memory_space<vmem>>, vector<1x32xf32>
    tpu.vector_store %arg22[%c2_16, %c0_17], %22 {strides = array<i32>} : memref<8x32xf32, #tpu.memory_space<vmem>>, vector<1x32xf32>,
    %24 = arith.index_cast %arg0 : i32 to index
    %c3 = arith.constant 3 : index
    %25 = memref.load %arg1[%24, %c3] : memref<2x8xi32, #tpu.memory_space<smem>>
    %26 = arith.index_cast %25 : i32 to index
    %c0_18 = arith.constant 0 : index
    %c0_19 = arith.constant 0 : index
    %27 = vector.load %arg2[%26, %c0_18, %c0_19] : memref<16x1x32xf32, #tpu.memory_space<vmem>>, vector<1x1x32xf32>
    %28 = vector.shape_cast %27 : vector<1x1x32xf32> to vector<1x32xf32>
    %c3_20 = arith.constant 3 : index
    %c0_21 = arith.constant 0 : index
    %29 = vector.load %arg3[%c3_20, %c0_21] : memref<8x32xf32, #tpu.memory_space<vmem>>, vector<1x32xf32>
    %30 = arith.addf %28, %29 : vector<1x32xf32>
    %c3_22 = arith.constant 3 : index
    %c0_23 = arith.constant 0 : index
    %31 = vector.load %arg22[%c3_22, %c0_23] : memref<8x32xf32, #tpu.memory_space<vmem>>, vector<1x32xf32>
    tpu.vector_store %arg22[%c3_22, %c0_23], %30 {strides = array<i32>} : memref<8x32xf32, #tpu.memory_space<vmem>>, vector<1x32xf32>,
    %32 = arith.index_cast %arg0 : i32 to index
    %c4 = arith.constant 4 : index
    %33 = memref.load %arg1[%32, %c4] : memref<2x8xi32, #tpu.memory_space<smem>>
    %34 = arith.index_cast %33 : i32 to index
    %c0_24 = arith.constant 0 : index
    %c0_25 = arith.constant 0 : index
    %35 = vector.load %arg2[%34, %c0_24, %c0_25] : memref<16x1x32xf32, #tpu.memory_space<vmem>>, vector<1x1x32xf32>
    %36 = vector.shape_cast %35 : vector<1x1x32xf32> to vector<1x32xf32>
    %c4_26 = arith.constant 4 : index
    %c0_27 = arith.constant 0 : index
    %37 = vector.load %arg3[%c4_26, %c0_27] : memref<8x32xf32, #tpu.memory_space<vmem>>, vector<1x32xf32>
    %38 = arith.addf %36, %37 : vector<1x32xf32>
    %c4_28 = arith.constant 4 : index
    %c0_29 = arith.constant 0 : index
    %39 = vector.load %arg22[%c4_28, %c0_29] : memref<8x32xf32, #tpu.memory_space<vmem>>, vector<1x32xf32>
    tpu.vector_store %arg22[%c4_28, %c0_29], %38 {strides = array<i32>} : memref<8x32xf32, #tpu.memory_space<vmem>>, vector<1x32xf32>,
    %40 = arith.index_cast %arg0 : i32 to index
    %c5 = arith.constant 5 : index
    %41 = memref.load %arg1[%40, %c5] : memref<2x8xi32, #tpu.memory_space<smem>>
    %42 = arith.index_cast %41 : i32 to index
    %c0_30 = arith.constant 0 : index
    %c0_31 = arith.constant 0 : index
    %43 = vector.load %arg2[%42, %c0_30, %c0_31] : memref<16x1x32xf32, #tpu.memory_space<vmem>>, vector<1x1x32xf32>
    %44 = vector.shape_cast %43 : vector<1x1x32xf32> to vector<1x32xf32>
    %c5_32 = arith.constant 5 : index
    %c0_33 = arith.constant 0 : index
    %45 = vector.load %arg3[%c5_32, %c0_33] : memref<8x32xf32, #tpu.memory_space<vmem>>, vector<1x32xf32>
    %46 = arith.addf %44, %45 : vector<1x32xf32>
    %c5_34 = arith.constant 5 : index
    %c0_35 = arith.constant 0 : index
    %47 = vector.load %arg22[%c5_34, %c0_35] : memref<8x32xf32, #tpu.memory_space<vmem>>, vector<1x32xf32>
    tpu.vector_store %arg22[%c5_34, %c0_35], %46 {strides = array<i32>} : memref<8x32xf32, #tpu.memory_space<vmem>>, vector<1x32xf32>,
    %48 = arith.index_cast %arg0 : i32 to index
    %c6 = arith.constant 6 : index
    %49 = memref.load %arg1[%48, %c6] : memref<2x8xi32, #tpu.memory_space<smem>>
    %50 = arith.index_cast %49 : i32 to index
    %c0_36 = arith.constant 0 : index
    %c0_37 = arith.constant 0 : index
    %51 = vector.load %arg2[%50, %c0_36, %c0_37] : memref<16x1x32xf32, #tpu.memory_space<vmem>>, vector<1x1x32xf32>
    %52 = vector.shape_cast %51 : vector<1x1x32xf32> to vector<1x32xf32>
    %c6_38 = arith.constant 6 : index
    %c0_39 = arith.constant 0 : index
    %53 = vector.load %arg3[%c6_38, %c0_39] : memref<8x32xf32, #tpu.memory_space<vmem>>, vector<1x32xf32>
    %54 = arith.addf %52, %53 : vector<1x32xf32>
    %c6_40 = arith.constant 6 : index
    %c0_41 = arith.constant 0 : index
    %55 = vector.load %arg22[%c6_40, %c0_41] : memref<8x32xf32, #tpu.memory_space<vmem>>, vector<1x32xf32>
    tpu.vector_store %arg22[%c6_40, %c0_41], %54 {strides = array<i32>} : memref<8x32xf32, #tpu.memory_space<vmem>>, vector<1x32xf32>,
    %56 = arith.index_cast %arg0 : i32 to index
    %c7 = arith.constant 7 : index
    %57 = memref.load %arg1[%56, %c7] : memref<2x8xi32, #tpu.memory_space<smem>>
    %58 = arith.index_cast %57 : i32 to index
    %c0_42 = arith.constant 0 : index
    %c0_43 = arith.constant 0 : index
    %59 = vector.load %arg2[%58, %c0_42, %c0_43] : memref<16x1x32xf32, #tpu.memory_space<vmem>>, vector<1x1x32xf32>
    %60 = vector.shape_cast %59 : vector<1x1x32xf32> to vector<1x32xf32>
    %c7_44 = arith.constant 7 : index
    %c0_45 = arith.constant 0 : index
    %61 = vector.load %arg3[%c7_44, %c0_45] : memref<8x32xf32, #tpu.memory_space<vmem>>, vector<1x32xf32>
    %62 = arith.addf %60, %61 : vector<1x32xf32>
    %c7_46 = arith.constant 7 : index
    %c0_47 = arith.constant 0 : index
    %63 = vector.load %arg22[%c7_46, %c0_47] : memref<8x32xf32, #tpu.memory_space<vmem>>, vector<1x32xf32>
    tpu.vector_store %arg22[%c7_46, %c0_47], %62 {strides = array<i32>} : memref<8x32xf32, #tpu.memory_space<vmem>>, vector<1x32xf32>,
    %c0_48 = arith.constant 0 : index
    %c0_49 = arith.constant 0 : index
    %64 = vector.load %arg22[%c0_48, %c0_49] : memref<8x32xf32, #tpu.memory_space<vmem>>, vector<8x32xf32>
    %65 = tpu.iota {dimensions = array<i32: 0>} : vector<8x8xi32>
    %66 = tpu.iota {dimensions = array<i32: 1>} : vector<8x8xi32>
    %67 = arith.cmpi sge, %65, %66 : vector<8x8xi32>
    %cst = arith.constant 0.000000e+00 : f32
    %cst_50 = arith.constant -1.000000e+09 : f32
    %68 = vector.broadcast %cst : f32 to vector<8x8xf32>
    %69 = vector.broadcast %cst_50 : f32 to vector<8x8xf32>
    %70 = arith.select %67, %68, %69 : vector<8x8xi1>, vector<8x8xf32>
    %c0_51 = arith.constant 0 : index
    %c0_52 = arith.constant 0 : index
    %71 = vector.load %arg4[%c0_51, %c0_52] : memref<2x32xf32, #tpu.memory_space<vmem>>, vector<1x32xf32>
    %72 = vector.shape_cast %71 : vector<1x32xf32> to vector<32xf32>
    %c0_53 = arith.constant 0 : index
    %c0_54 = arith.constant 0 : index
    %73 = vector.load %arg5[%c0_53, %c0_54] : memref<2x32xf32, #tpu.memory_space<vmem>>, vector<1x32xf32>
    %74 = vector.shape_cast %73 : vector<1x32xf32> to vector<32xf32>
    %cst_55 = arith.constant dense<0.000000e+00> : vector<8xf32>
    %75 = vector.multi_reduction <add>, %64, %cst_55 [1] : vector<8x32xf32> to vector<8xf32>
    %76 = vector.shape_cast %75 : vector<8xf32> to vector<8x1xf32>
    %cst_56 = arith.constant 3.200000e+01 : f32
    %77 = vector.broadcast %cst_56 : f32 to vector<8x1xf32>
    %78 = arith.divf %76, %77 : vector<8x1xf32>
    %79 = vector.broadcast %78 : vector<8x1xf32> to vector<8x32xf32>
    %80 = arith.subf %64, %79 : vector<8x32xf32>
    %81 = arith.mulf %80, %80 : vector<8x32xf32>
    %cst_57 = arith.constant dense<0.000000e+00> : vector<8xf32>
    %82 = vector.multi_reduction <add>, %81, %cst_57 [1] : vector<8x32xf32> to vector<8xf32>
    %83 = vector.shape_cast %82 : vector<8xf32> to vector<8x1xf32>
    %cst_58 = arith.constant 3.200000e+01 : f32
    %84 = vector.broadcast %cst_58 : f32 to vector<8x1xf32>
    %85 = arith.divf %83, %84 : vector<8x1xf32>
    %86 = vector.broadcast %78 : vector<8x1xf32> to vector<8x32xf32>
    %87 = arith.subf %64, %86 : vector<8x32xf32>
    %cst_59 = arith.constant 9.99999974E-6 : f32
    %88 = vector.broadcast %cst_59 : f32 to vector<8x1xf32>
    %89 = arith.addf %85, %88 : vector<8x1xf32>
    %90 = math.rsqrt %89 : vector<8x1xf32>
    %91 = vector.broadcast %90 : vector<8x1xf32> to vector<8x32xf32>
    %92 = arith.mulf %87, %91 : vector<8x32xf32>
    %93 = vector.shape_cast %72 : vector<32xf32> to vector<1x32xf32>
    %94 = vector.broadcast %93 : vector<1x32xf32> to vector<8x32xf32>
    %95 = arith.mulf %92, %94 : vector<8x32xf32>
    %96 = vector.shape_cast %74 : vector<32xf32> to vector<1x32xf32>
    %97 = vector.broadcast %96 : vector<1x32xf32> to vector<8x32xf32>
    %98 = arith.addf %95, %97 : vector<8x32xf32>
    %c0_60 = arith.constant 0 : index
    %c0_61 = arith.constant 0 : index
    %c0_62 = arith.constant 0 : index
    %99 = vector.load %arg6[%c0_60, %c0_61, %c0_62] : memref<2x32x32xf32, #tpu.memory_space<vmem>>, vector<1x32x32xf32>
    %100 = vector.shape_cast %99 : vector<1x32x32xf32> to vector<32x32xf32>
    %cst_63 = arith.constant dense<0.000000e+00> : vector<8x32xf32>
    %101 = tpu.matmul %98, %100, %cst_63 {dimension_numbers = #tpu.dot_dimension_numbers<[1], [0], [0], [1], [0, 0, 1, 1], [], []>} : vector<8x32xf32>, vector<32x32xf32>, vector<8x32xf32> -> vector<8x32xf32>
    %c0_64 = arith.constant 0 : index
    %c0_65 = arith.constant 0 : index
    %c0_66 = arith.constant 0 : index
    %102 = vector.load %arg7[%c0_64, %c0_65, %c0_66] : memref<2x32x32xf32, #tpu.memory_space<vmem>>, vector<1x32x32xf32>
    %103 = vector.shape_cast %102 : vector<1x32x32xf32> to vector<32x32xf32>
    %cst_67 = arith.constant dense<0.000000e+00> : vector<8x32xf32>
    %104 = tpu.matmul %98, %103, %cst_67 {dimension_numbers = #tpu.dot_dimension_numbers<[1], [0], [0], [1], [0, 0, 1, 1], [], []>} : vector<8x32xf32>, vector<32x32xf32>, vector<8x32xf32> -> vector<8x32xf32>
    %c0_68 = arith.constant 0 : index
    %c0_69 = arith.constant 0 : index
    %c0_70 = arith.constant 0 : index
    %105 = vector.load %arg8[%c0_68, %c0_69, %c0_70] : memref<2x32x32xf32, #tpu.memory_space<vmem>>, vector<1x32x32xf32>
    %106 = vector.shape_cast %105 : vector<1x32x32xf32> to vector<32x32xf32>
    %cst_71 = arith.constant dense<0.000000e+00> : vector<8x32xf32>
    %107 = tpu.matmul %98, %106, %cst_71 {dimension_numbers = #tpu.dot_dimension_numbers<[1], [0], [0], [1], [0, 0, 1, 1], [], []>} : vector<8x32xf32>, vector<32x32xf32>, vector<8x32xf32> -> vector<8x32xf32>
    %108 = tpu.transpose %101, [1, 0] : vector<8x32xf32> -> vector<32x8xf32>
    %109 = vector.shape_cast %108 : vector<32x8xf32> to vector<4x8x8xf32>
    %110 = tpu.transpose %109, [0, 2, 1] : vector<4x8x8xf32> -> vector<4x8x8xf32>
    %111 = tpu.transpose %104, [1, 0] : vector<8x32xf32> -> vector<32x8xf32>
    %112 = vector.shape_cast %111 : vector<32x8xf32> to vector<4x8x8xf32>
    %113 = tpu.transpose %107, [1, 0] : vector<8x32xf32> -> vector<32x8xf32>
    %114 = vector.shape_cast %113 : vector<32x8xf32> to vector<4x8x8xf32>
    "tpu.trace_start"() <{level = 10 : i32, message = "hqd,hdk->hqk"}> : () -> ()
    %cst_72 = arith.constant dense<0.000000e+00> : vector<4x8x8xf32>
    %115 = tpu.matmul %110, %112, %cst_72 {dimension_numbers = #tpu.dot_dimension_numbers<[2], [1], [1], [2], [0, 0, 0, 1, 1, 2], [0], [0]>} : vector<4x8x8xf32>, vector<4x8x8xf32>, vector<4x8x8xf32> -> vector<4x8x8xf32>
    "tpu.trace_stop"() : () -> ()
    %cst_73 = arith.constant 0.353553385 : f32
    %116 = vector.broadcast %cst_73 : f32 to vector<4x8x8xf32>
    %117 = arith.mulf %115, %116 : vector<4x8x8xf32>
    %118 = vector.shape_cast %70 : vector<8x8xf32> to vector<1x8x8xf32>
    %119 = vector.broadcast %118 : vector<1x8x8xf32> to vector<4x8x8xf32>
    %120 = arith.addf %117, %119 : vector<4x8x8xf32>
    %cst_74 = arith.constant dense<0xFF800000> : vector<4x8xf32>
    %121 = vector.multi_reduction <maximumf>, %120, %cst_74 [2] : vector<4x8x8xf32> to vector<4x8xf32>
    %122 = vector.shape_cast %121 : vector<4x8xf32> to vector<4x8x1xf32>
    %123 = vector.broadcast %122 : vector<4x8x1xf32> to vector<4x8x8xf32>
    %124 = arith.subf %120, %123 : vector<4x8x8xf32>
    %125 = math.exp %124 : vector<4x8x8xf32>
    %cst_75 = arith.constant dense<0.000000e+00> : vector<4x8xf32>
    %126 = vector.multi_reduction <add>, %125, %cst_75 [2] : vector<4x8x8xf32> to vector<4x8xf32>
    %127 = vector.shape_cast %126 : vector<4x8xf32> to vector<4x8x1xf32>
    %128 = vector.broadcast %127 : vector<4x8x1xf32> to vector<4x8x8xf32>
    %129 = arith.divf %125, %128 : vector<4x8x8xf32>
    "tpu.trace_start"() <{level = 10 : i32, message = "hdk,hqk->hdq"}> : () -> ()
    %cst_76 = arith.constant dense<0.000000e+00> : vector<4x8x8xf32>
    %130 = tpu.matmul %114, %129, %cst_76 {dimension_numbers = #tpu.dot_dimension_numbers<[2], [2], [1], [1], [0, 0, 0, 1, 1, 1], [0], [0]>} : vector<4x8x8xf32>, vector<4x8x8xf32>, vector<4x8x8xf32> -> vector<4x8x8xf32>
    "tpu.trace_stop"() : () -> ()
    %131 = vector.shape_cast %130 : vector<4x8x8xf32> to vector<32x8xf32>
    %132 = tpu.transpose %131, [1, 0] : vector<32x8xf32> -> vector<8x32xf32>
    %c0_77 = arith.constant 0 : index
    %c0_78 = arith.constant 0 : index
    %c0_79 = arith.constant 0 : index
    %133 = vector.load %arg9[%c0_77, %c0_78, %c0_79] : memref<2x32x32xf32, #tpu.memory_space<vmem>>, vector<1x32x32xf32>
    %134 = vector.shape_cast %133 : vector<1x32x32xf32> to vector<32x32xf32>
    %cst_80 = arith.constant dense<0.000000e+00> : vector<8x32xf32>
    %135 = tpu.matmul %132, %134, %cst_80 {dimension_numbers = #tpu.dot_dimension_numbers<[1], [0], [0], [1], [0, 0, 1, 1], [], []>} : vector<8x32xf32>, vector<32x32xf32>, vector<8x32xf32> -> vector<8x32xf32>
    %c0_81 = arith.constant 0 : index
    %c0_82 = arith.constant 0 : index
    %136 = vector.load %arg10[%c0_81, %c0_82] : memref<2x32xf32, #tpu.memory_space<vmem>>, vector<1x32xf32>
    %137 = vector.shape_cast %136 : vector<1x32xf32> to vector<32xf32>
    %138 = vector.shape_cast %137 : vector<32xf32> to vector<1x32xf32>
    %139 = vector.broadcast %138 : vector<1x32xf32> to vector<8x32xf32>
    %140 = arith.addf %135, %139 : vector<8x32xf32>
    %141 = arith.addf %64, %140 : vector<8x32xf32>
    %c0_83 = arith.constant 0 : index
    %c0_84 = arith.constant 0 : index
    %142 = vector.load %arg11[%c0_83, %c0_84] : memref<2x32xf32, #tpu.memory_space<vmem>>, vector<1x32xf32>
    %143 = vector.shape_cast %142 : vector<1x32xf32> to vector<32xf32>
    %c0_85 = arith.constant 0 : index
    %c0_86 = arith.constant 0 : index
    %144 = vector.load %arg12[%c0_85, %c0_86] : memref<2x32xf32, #tpu.memory_space<vmem>>, vector<1x32xf32>
    %145 = vector.shape_cast %144 : vector<1x32xf32> to vector<32xf32>
    %cst_87 = arith.constant dense<0.000000e+00> : vector<8xf32>
    %146 = vector.multi_reduction <add>, %141, %cst_87 [1] : vector<8x32xf32> to vector<8xf32>
    %147 = vector.shape_cast %146 : vector<8xf32> to vector<8x1xf32>
    %cst_88 = arith.constant 3.200000e+01 : f32
    %148 = vector.broadcast %cst_88 : f32 to vector<8x1xf32>
    %149 = arith.divf %147, %148 : vector<8x1xf32>
    %150 = vector.broadcast %149 : vector<8x1xf32> to vector<8x32xf32>
    %151 = arith.subf %141, %150 : vector<8x32xf32>
    %152 = arith.mulf %151, %151 : vector<8x32xf32>
    %cst_89 = arith.constant dense<0.000000e+00> : vector<8xf32>
    %153 = vector.multi_reduction <add>, %152, %cst_89 [1] : vector<8x32xf32> to vector<8xf32>
    %154 = vector.shape_cast %153 : vector<8xf32> to vector<8x1xf32>
    %cst_90 = arith.constant 3.200000e+01 : f32
    %155 = vector.broadcast %cst_90 : f32 to vector<8x1xf32>
    %156 = arith.divf %154, %155 : vector<8x1xf32>
    %157 = vector.broadcast %149 : vector<8x1xf32> to vector<8x32xf32>
    %158 = arith.subf %141, %157 : vector<8x32xf32>
    %cst_91 = arith.constant 9.99999974E-6 : f32
    %159 = vector.broadcast %cst_91 : f32 to vector<8x1xf32>
    %160 = arith.addf %156, %159 : vector<8x1xf32>
    %161 = math.rsqrt %160 : vector<8x1xf32>
    %162 = vector.broadcast %161 : vector<8x1xf32> to vector<8x32xf32>
    %163 = arith.mulf %158, %162 : vector<8x32xf32>
    %164 = vector.shape_cast %143 : vector<32xf32> to vector<1x32xf32>
    %165 = vector.broadcast %164 : vector<1x32xf32> to vector<8x32xf32>
    %166 = arith.mulf %163, %165 : vector<8x32xf32>
    %167 = vector.shape_cast %145 : vector<32xf32> to vector<1x32xf32>
    %168 = vector.broadcast %167 : vector<1x32xf32> to vector<8x32xf32>
    %169 = arith.addf %166, %168 : vector<8x32xf32>
    %c0_92 = arith.constant 0 : index
    %c0_93 = arith.constant 0 : index
    %c0_94 = arith.constant 0 : index
    %170 = vector.load %arg13[%c0_92, %c0_93, %c0_94] : memref<2x32x128xf32, #tpu.memory_space<vmem>>, vector<1x32x128xf32>
    %171 = vector.shape_cast %170 : vector<1x32x128xf32> to vector<32x128xf32>
    %cst_95 = arith.constant dense<0.000000e+00> : vector<8x128xf32>
    %172 = tpu.matmul %169, %171, %cst_95 {dimension_numbers = #tpu.dot_dimension_numbers<[1], [0], [0], [1], [0, 0, 1, 1], [], []>} : vector<8x32xf32>, vector<32x128xf32>, vector<8x128xf32> -> vector<8x128xf32>
    %c0_96 = arith.constant 0 : index
    %c0_97 = arith.constant 0 : index
    %173 = vector.load %arg14[%c0_96, %c0_97] : memref<2x128xf32, #tpu.memory_space<vmem>>, vector<1x128xf32>
    %174 = vector.shape_cast %173 : vector<1x128xf32> to vector<128xf32>
    %175 = vector.shape_cast %174 : vector<128xf32> to vector<1x128xf32>
    %176 = vector.broadcast %175 : vector<1x128xf32> to vector<8x128xf32>
    %177 = arith.addf %172, %176 : vector<8x128xf32>
    %cst_98 = arith.constant 0.000000e+00 : f32
    %178 = vector.broadcast %cst_98 : f32 to vector<8x128xf32>
    %179 = arith.maximumf %177, %178 : vector<8x128xf32>
    %c0_99 = arith.constant 0 : index
    %c0_100 = arith.constant 0 : index
    %c0_101 = arith.constant 0 : index
    %180 = vector.load %arg15[%c0_99, %c0_100, %c0_101] : memref<2x128x32xf32, #tpu.memory_space<vmem>>, vector<1x128x32xf32>
    %181 = vector.shape_cast %180 : vector<1x128x32xf32> to vector<128x32xf32>
    %cst_102 = arith.constant dense<0.000000e+00> : vector<8x32xf32>
    %182 = tpu.matmul %179, %181, %cst_102 {dimension_numbers = #tpu.dot_dimension_numbers<[1], [0], [0], [1], [0, 0, 1, 1], [], []>} : vector<8x128xf32>, vector<128x32xf32>, vector<8x32xf32> -> vector<8x32xf32>
    %c0_103 = arith.constant 0 : index
    %c0_104 = arith.constant 0 : index
    %183 = vector.load %arg16[%c0_103, %c0_104] : memref<2x32xf32, #tpu.memory_space<vmem>>, vector<1x32xf32>
    %184 = vector.shape_cast %183 : vector<1x32xf32> to vector<32xf32>
    %185 = vector.shape_cast %184 : vector<32xf32> to vector<1x32xf32>
    %186 = vector.broadcast %185 : vector<1x32xf32> to vector<8x32xf32>
    %187 = arith.addf %182, %186 : vector<8x32xf32>
    %188 = arith.addf %141, %187 : vector<8x32xf32>
    %c1_105 = arith.constant 1 : index
    %c0_106 = arith.constant 0 : index
    %189 = vector.load %arg4[%c1_105, %c0_106] : memref<2x32xf32, #tpu.memory_space<vmem>>, vector<1x32xf32>
    %190 = vector.shape_cast %189 : vector<1x32xf32> to vector<32xf32>
    %c1_107 = arith.constant 1 : index
    %c0_108 = arith.constant 0 : index
    %191 = vector.load %arg5[%c1_107, %c0_108] : memref<2x32xf32, #tpu.memory_space<vmem>>, vector<1x32xf32>
    %192 = vector.shape_cast %191 : vector<1x32xf32> to vector<32xf32>
    %cst_109 = arith.constant dense<0.000000e+00> : vector<8xf32>
    %193 = vector.multi_reduction <add>, %188, %cst_109 [1] : vector<8x32xf32> to vector<8xf32>
    %194 = vector.shape_cast %193 : vector<8xf32> to vector<8x1xf32>
    %cst_110 = arith.constant 3.200000e+01 : f32
    %195 = vector.broadcast %cst_110 : f32 to vector<8x1xf32>
    %196 = arith.divf %194, %195 : vector<8x1xf32>
    %197 = vector.broadcast %196 : vector<8x1xf32> to vector<8x32xf32>
    %198 = arith.subf %188, %197 : vector<8x32xf32>
    %199 = arith.mulf %198, %198 : vector<8x32xf32>
    %cst_111 = arith.constant dense<0.000000e+00> : vector<8xf32>
    %200 = vector.multi_reduction <add>, %199, %cst_111 [1] : vector<8x32xf32> to vector<8xf32>
    %201 = vector.shape_cast %200 : vector<8xf32> to vector<8x1xf32>
    %cst_112 = arith.constant 3.200000e+01 : f32
    %202 = vector.broadcast %cst_112 : f32 to vector<8x1xf32>
    %203 = arith.divf %201, %202 : vector<8x1xf32>
    %204 = vector.broadcast %196 : vector<8x1xf32> to vector<8x32xf32>
    %205 = arith.subf %188, %204 : vector<8x32xf32>
    %cst_113 = arith.constant 9.99999974E-6 : f32
    %206 = vector.broadcast %cst_113 : f32 to vector<8x1xf32>
    %207 = arith.addf %203, %206 : vector<8x1xf32>
    %208 = math.rsqrt %207 : vector<8x1xf32>
    %209 = vector.broadcast %208 : vector<8x1xf32> to vector<8x32xf32>
    %210 = arith.mulf %205, %209 : vector<8x32xf32>
    %211 = vector.shape_cast %190 : vector<32xf32> to vector<1x32xf32>
    %212 = vector.broadcast %211 : vector<1x32xf32> to vector<8x32xf32>
    %213 = arith.mulf %210, %212 : vector<8x32xf32>
    %214 = vector.shape_cast %192 : vector<32xf32> to vector<1x32xf32>
    %215 = vector.broadcast %214 : vector<1x32xf32> to vector<8x32xf32>
    %216 = arith.addf %213, %215 : vector<8x32xf32>
    %c1_114 = arith.constant 1 : index
    %c0_115 = arith.constant 0 : index
    %c0_116 = arith.constant 0 : index
    %217 = vector.load %arg6[%c1_114, %c0_115, %c0_116] : memref<2x32x32xf32, #tpu.memory_space<vmem>>, vector<1x32x32xf32>
    %218 = vector.shape_cast %217 : vector<1x32x32xf32> to vector<32x32xf32>
    %cst_117 = arith.constant dense<0.000000e+00> : vector<8x32xf32>
    %219 = tpu.matmul %216, %218, %cst_117 {dimension_numbers = #tpu.dot_dimension_numbers<[1], [0], [0], [1], [0, 0, 1, 1], [], []>} : vector<8x32xf32>, vector<32x32xf32>, vector<8x32xf32> -> vector<8x32xf32>
    %c1_118 = arith.constant 1 : index
    %c0_119 = arith.constant 0 : index
    %c0_120 = arith.constant 0 : index
    %220 = vector.load %arg7[%c1_118, %c0_119, %c0_120] : memref<2x32x32xf32, #tpu.memory_space<vmem>>, vector<1x32x32xf32>
    %221 = vector.shape_cast %220 : vector<1x32x32xf32> to vector<32x32xf32>
    %cst_121 = arith.constant dense<0.000000e+00> : vector<8x32xf32>
    %222 = tpu.matmul %216, %221, %cst_121 {dimension_numbers = #tpu.dot_dimension_numbers<[1], [0], [0], [1], [0, 0, 1, 1], [], []>} : vector<8x32xf32>, vector<32x32xf32>, vector<8x32xf32> -> vector<8x32xf32>
    %c1_122 = arith.constant 1 : index
    %c0_123 = arith.constant 0 : index
    %c0_124 = arith.constant 0 : index
    %223 = vector.load %arg8[%c1_122, %c0_123, %c0_124] : memref<2x32x32xf32, #tpu.memory_space<vmem>>, vector<1x32x32xf32>
    %224 = vector.shape_cast %223 : vector<1x32x32xf32> to vector<32x32xf32>
    %cst_125 = arith.constant dense<0.000000e+00> : vector<8x32xf32>
    %225 = tpu.matmul %216, %224, %cst_125 {dimension_numbers = #tpu.dot_dimension_numbers<[1], [0], [0], [1], [0, 0, 1, 1], [], []>} : vector<8x32xf32>, vector<32x32xf32>, vector<8x32xf32> -> vector<8x32xf32>
    %226 = tpu.transpose %219, [1, 0] : vector<8x32xf32> -> vector<32x8xf32>
    %227 = vector.shape_cast %226 : vector<32x8xf32> to vector<4x8x8xf32>
    %228 = tpu.transpose %227, [0, 2, 1] : vector<4x8x8xf32> -> vector<4x8x8xf32>
    %229 = tpu.transpose %222, [1, 0] : vector<8x32xf32> -> vector<32x8xf32>
    %230 = vector.shape_cast %229 : vector<32x8xf32> to vector<4x8x8xf32>
    %231 = tpu.transpose %225, [1, 0] : vector<8x32xf32> -> vector<32x8xf32>
    %232 = vector.shape_cast %231 : vector<32x8xf32> to vector<4x8x8xf32>
    "tpu.trace_start"() <{level = 10 : i32, message = "hqd,hdk->hqk"}> : () -> ()
    %cst_126 = arith.constant dense<0.000000e+00> : vector<4x8x8xf32>
    %233 = tpu.matmul %228, %230, %cst_126 {dimension_numbers = #tpu.dot_dimension_numbers<[2], [1], [1], [2], [0, 0, 0, 1, 1, 2], [0], [0]>} : vector<4x8x8xf32>, vector<4x8x8xf32>, vector<4x8x8xf32> -> vector<4x8x8xf32>
    "tpu.trace_stop"() : () -> ()
    %cst_127 = arith.constant 0.353553385 : f32
    %234 = vector.broadcast %cst_127 : f32 to vector<4x8x8xf32>
    %235 = arith.mulf %233, %234 : vector<4x8x8xf32>
    %236 = vector.shape_cast %70 : vector<8x8xf32> to vector<1x8x8xf32>
    %237 = vector.broadcast %236 : vector<1x8x8xf32> to vector<4x8x8xf32>
    %238 = arith.addf %235, %237 : vector<4x8x8xf32>
    %cst_128 = arith.constant dense<0xFF800000> : vector<4x8xf32>
    %239 = vector.multi_reduction <maximumf>, %238, %cst_128 [2] : vector<4x8x8xf32> to vector<4x8xf32>
    %240 = vector.shape_cast %239 : vector<4x8xf32> to vector<4x8x1xf32>
    %241 = vector.broadcast %240 : vector<4x8x1xf32> to vector<4x8x8xf32>
    %242 = arith.subf %238, %241 : vector<4x8x8xf32>
    %243 = math.exp %242 : vector<4x8x8xf32>
    %cst_129 = arith.constant dense<0.000000e+00> : vector<4x8xf32>
    %244 = vector.multi_reduction <add>, %243, %cst_129 [2] : vector<4x8x8xf32> to vector<4x8xf32>
    %245 = vector.shape_cast %244 : vector<4x8xf32> to vector<4x8x1xf32>
    %246 = vector.broadcast %245 : vector<4x8x1xf32> to vector<4x8x8xf32>
    %247 = arith.divf %243, %246 : vector<4x8x8xf32>
    "tpu.trace_start"() <{level = 10 : i32, message = "hdk,hqk->hdq"}> : () -> ()
    %cst_130 = arith.constant dense<0.000000e+00> : vector<4x8x8xf32>
    %248 = tpu.matmul %232, %247, %cst_130 {dimension_numbers = #tpu.dot_dimension_numbers<[2], [2], [1], [1], [0, 0, 0, 1, 1, 1], [0], [0]>} : vector<4x8x8xf32>, vector<4x8x8xf32>, vector<4x8x8xf32> -> vector<4x8x8xf32>
    "tpu.trace_stop"() : () -> ()
    %249 = vector.shape_cast %248 : vector<4x8x8xf32> to vector<32x8xf32>
    %250 = tpu.transpose %249, [1, 0] : vector<32x8xf32> -> vector<8x32xf32>
    %c1_131 = arith.constant 1 : index
    %c0_132 = arith.constant 0 : index
    %c0_133 = arith.constant 0 : index
    %251 = vector.load %arg9[%c1_131, %c0_132, %c0_133] : memref<2x32x32xf32, #tpu.memory_space<vmem>>, vector<1x32x32xf32>
    %252 = vector.shape_cast %251 : vector<1x32x32xf32> to vector<32x32xf32>
    %cst_134 = arith.constant dense<0.000000e+00> : vector<8x32xf32>
    %253 = tpu.matmul %250, %252, %cst_134 {dimension_numbers = #tpu.dot_dimension_numbers<[1], [0], [0], [1], [0, 0, 1, 1], [], []>} : vector<8x32xf32>, vector<32x32xf32>, vector<8x32xf32> -> vector<8x32xf32>
    %c1_135 = arith.constant 1 : index
    %c0_136 = arith.constant 0 : index
    %254 = vector.load %arg10[%c1_135, %c0_136] : memref<2x32xf32, #tpu.memory_space<vmem>>, vector<1x32xf32>
    %255 = vector.shape_cast %254 : vector<1x32xf32> to vector<32xf32>
    %256 = vector.shape_cast %255 : vector<32xf32> to vector<1x32xf32>
    %257 = vector.broadcast %256 : vector<1x32xf32> to vector<8x32xf32>
    %258 = arith.addf %253, %257 : vector<8x32xf32>
    %259 = arith.addf %188, %258 : vector<8x32xf32>
    %c1_137 = arith.constant 1 : index
    %c0_138 = arith.constant 0 : index
    %260 = vector.load %arg11[%c1_137, %c0_138] : memref<2x32xf32, #tpu.memory_space<vmem>>, vector<1x32xf32>
    %261 = vector.shape_cast %260 : vector<1x32xf32> to vector<32xf32>
    %c1_139 = arith.constant 1 : index
    %c0_140 = arith.constant 0 : index
    %262 = vector.load %arg12[%c1_139, %c0_140] : memref<2x32xf32, #tpu.memory_space<vmem>>, vector<1x32xf32>
    %263 = vector.shape_cast %262 : vector<1x32xf32> to vector<32xf32>
    %cst_141 = arith.constant dense<0.000000e+00> : vector<8xf32>
    %264 = vector.multi_reduction <add>, %259, %cst_141 [1] : vector<8x32xf32> to vector<8xf32>
    %265 = vector.shape_cast %264 : vector<8xf32> to vector<8x1xf32>
    %cst_142 = arith.constant 3.200000e+01 : f32
    %266 = vector.broadcast %cst_142 : f32 to vector<8x1xf32>
    %267 = arith.divf %265, %266 : vector<8x1xf32>
    %268 = vector.broadcast %267 : vector<8x1xf32> to vector<8x32xf32>
    %269 = arith.subf %259, %268 : vector<8x32xf32>
    %270 = arith.mulf %269, %269 : vector<8x32xf32>
    %cst_143 = arith.constant dense<0.000000e+00> : vector<8xf32>
    %271 = vector.multi_reduction <add>, %270, %cst_143 [1] : vector<8x32xf32> to vector<8xf32>
    %272 = vector.shape_cast %271 : vector<8xf32> to vector<8x1xf32>
    %cst_144 = arith.constant 3.200000e+01 : f32
    %273 = vector.broadcast %cst_144 : f32 to vector<8x1xf32>
    %274 = arith.divf %272, %273 : vector<8x1xf32>
    %275 = vector.broadcast %267 : vector<8x1xf32> to vector<8x32xf32>
    %276 = arith.subf %259, %275 : vector<8x32xf32>
    %cst_145 = arith.constant 9.99999974E-6 : f32
    %277 = vector.broadcast %cst_145 : f32 to vector<8x1xf32>
    %278 = arith.addf %274, %277 : vector<8x1xf32>
    %279 = math.rsqrt %278 : vector<8x1xf32>
    %280 = vector.broadcast %279 : vector<8x1xf32> to vector<8x32xf32>
    %281 = arith.mulf %276, %280 : vector<8x32xf32>
    %282 = vector.shape_cast %261 : vector<32xf32> to vector<1x32xf32>
    %283 = vector.broadcast %282 : vector<1x32xf32> to vector<8x32xf32>
    %284 = arith.mulf %281, %283 : vector<8x32xf32>
    %285 = vector.shape_cast %263 : vector<32xf32> to vector<1x32xf32>
    %286 = vector.broadcast %285 : vector<1x32xf32> to vector<8x32xf32>
    %287 = arith.addf %284, %286 : vector<8x32xf32>
    %c1_146 = arith.constant 1 : index
    %c0_147 = arith.constant 0 : index
    %c0_148 = arith.constant 0 : index
    %288 = vector.load %arg13[%c1_146, %c0_147, %c0_148] : memref<2x32x128xf32, #tpu.memory_space<vmem>>, vector<1x32x128xf32>
    %289 = vector.shape_cast %288 : vector<1x32x128xf32> to vector<32x128xf32>
    %cst_149 = arith.constant dense<0.000000e+00> : vector<8x128xf32>
    %290 = tpu.matmul %287, %289, %cst_149 {dimension_numbers = #tpu.dot_dimension_numbers<[1], [0], [0], [1], [0, 0, 1, 1], [], []>} : vector<8x32xf32>, vector<32x128xf32>, vector<8x128xf32> -> vector<8x128xf32>
    %c1_150 = arith.constant 1 : index
    %c0_151 = arith.constant 0 : index
    %291 = vector.load %arg14[%c1_150, %c0_151] : memref<2x128xf32, #tpu.memory_space<vmem>>, vector<1x128xf32>
    %292 = vector.shape_cast %291 : vector<1x128xf32> to vector<128xf32>
    %293 = vector.shape_cast %292 : vector<128xf32> to vector<1x128xf32>
    %294 = vector.broadcast %293 : vector<1x128xf32> to vector<8x128xf32>
    %295 = arith.addf %290, %294 : vector<8x128xf32>
    %cst_152 = arith.constant 0.000000e+00 : f32
    %296 = vector.broadcast %cst_152 : f32 to vector<8x128xf32>
    %297 = arith.maximumf %295, %296 : vector<8x128xf32>
    %c1_153 = arith.constant 1 : index
    %c0_154 = arith.constant 0 : index
    %c0_155 = arith.constant 0 : index
    %298 = vector.load %arg15[%c1_153, %c0_154, %c0_155] : memref<2x128x32xf32, #tpu.memory_space<vmem>>, vector<1x128x32xf32>
    %299 = vector.shape_cast %298 : vector<1x128x32xf32> to vector<128x32xf32>
    %cst_156 = arith.constant dense<0.000000e+00> : vector<8x32xf32>
    %300 = tpu.matmul %297, %299, %cst_156 {dimension_numbers = #tpu.dot_dimension_numbers<[1], [0], [0], [1], [0, 0, 1, 1], [], []>} : vector<8x128xf32>, vector<128x32xf32>, vector<8x32xf32> -> vector<8x32xf32>
    %c1_157 = arith.constant 1 : index
    %c0_158 = arith.constant 0 : index
    %301 = vector.load %arg16[%c1_157, %c0_158] : memref<2x32xf32, #tpu.memory_space<vmem>>, vector<1x32xf32>
    %302 = vector.shape_cast %301 : vector<1x32xf32> to vector<32xf32>
    %303 = vector.shape_cast %302 : vector<32xf32> to vector<1x32xf32>
    %304 = vector.broadcast %303 : vector<1x32xf32> to vector<8x32xf32>
    %305 = arith.addf %300, %304 : vector<8x32xf32>
    %306 = arith.addf %259, %305 : vector<8x32xf32>
    %c0_159 = arith.constant 0 : index
    %c0_160 = arith.constant 0 : index
    %307 = vector.load %arg17[%c0_159, %c0_160] : memref<1x32xf32, #tpu.memory_space<vmem>>, vector<1x32xf32>
    %c0_161 = arith.constant 0 : index
    %c0_162 = arith.constant 0 : index
    %308 = vector.load %arg18[%c0_161, %c0_162] : memref<1x32xf32, #tpu.memory_space<vmem>>, vector<1x32xf32>
    %cst_163 = arith.constant dense<0.000000e+00> : vector<8xf32>
    %309 = vector.multi_reduction <add>, %306, %cst_163 [1] : vector<8x32xf32> to vector<8xf32>
    %310 = vector.shape_cast %309 : vector<8xf32> to vector<8x1xf32>
    %cst_164 = arith.constant 3.200000e+01 : f32
    %311 = vector.broadcast %cst_164 : f32 to vector<8x1xf32>
    %312 = arith.divf %310, %311 : vector<8x1xf32>
    %313 = vector.broadcast %312 : vector<8x1xf32> to vector<8x32xf32>
    %314 = arith.subf %306, %313 : vector<8x32xf32>
    %315 = arith.mulf %314, %314 : vector<8x32xf32>
    %cst_165 = arith.constant dense<0.000000e+00> : vector<8xf32>
    %316 = vector.multi_reduction <add>, %315, %cst_165 [1] : vector<8x32xf32> to vector<8xf32>
    %317 = vector.shape_cast %316 : vector<8xf32> to vector<8x1xf32>
    %cst_166 = arith.constant 3.200000e+01 : f32
    %318 = vector.broadcast %cst_166 : f32 to vector<8x1xf32>
    %319 = arith.divf %317, %318 : vector<8x1xf32>
    %320 = vector.broadcast %312 : vector<8x1xf32> to vector<8x32xf32>
    %321 = arith.subf %306, %320 : vector<8x32xf32>
    %cst_167 = arith.constant 9.99999974E-6 : f32
    %322 = vector.broadcast %cst_167 : f32 to vector<8x1xf32>
    %323 = arith.addf %319, %322 : vector<8x1xf32>
    %324 = math.rsqrt %323 : vector<8x1xf32>
    %325 = vector.broadcast %324 : vector<8x1xf32> to vector<8x32xf32>
    %326 = arith.mulf %321, %325 : vector<8x32xf32>
    %327 = vector.broadcast %307 : vector<1x32xf32> to vector<8x32xf32>
    %328 = arith.mulf %326, %327 : vector<8x32xf32>
    %329 = vector.broadcast %308 : vector<1x32xf32> to vector<8x32xf32>
    %330 = arith.addf %328, %329 : vector<8x32xf32>
    %c0_168 = arith.constant 0 : index
    %c0_169 = arith.constant 0 : index
    %331 = vector.load %arg19[%c0_168, %c0_169] : memref<32x128xf32, #tpu.memory_space<vmem>>, vector<32x128xf32>
    %cst_170 = arith.constant dense<0.000000e+00> : vector<8x128xf32>
    %332 = tpu.matmul %330, %331, %cst_170 {dimension_numbers = #tpu.dot_dimension_numbers<[1], [0], [0], [1], [0, 0, 1, 1], [], []>} : vector<8x32xf32>, vector<32x128xf32>, vector<8x128xf32> -> vector<8x128xf32>
    %c0_171 = arith.constant 0 : index
    %c0_172 = arith.constant 0 : index
    %333 = vector.load %arg20[%c0_171, %c0_172] : memref<1x128xf32, #tpu.memory_space<vmem>>, vector<1x128xf32>
    %334 = vector.broadcast %333 : vector<1x128xf32> to vector<8x128xf32>
    %335 = arith.addf %332, %334 : vector<8x128xf32>
    %c0_173 = arith.constant 0 : index
    %c0_174 = arith.constant 0 : index
    %336 = vector.load %arg21[%c0_173, %c0_174] : memref<8x128xf32, #tpu.memory_space<vmem>>, vector<8x128xf32>
    tpu.vector_store %arg21[%c0_173, %c0_174], %335 {strides = array<i32>} : memref<8x128xf32, #tpu.memory_space<vmem>>, vector<8x128xf32>,
    return
  }
  func.func @transform_0(%arg0: i32, %arg1: memref<2x8xi32, #tpu.memory_space<smem>>) -> (i32, i32, i32) {
    %c0_i32 = arith.constant 0 : i32
    %c0_i32_0 = arith.constant 0 : i32
    %c0_i32_1 = arith.constant 0 : i32
    %c0_i32_2 = arith.constant 0 : i32
    return %c0_i32, %c0_i32_0, %c0_i32_1 : i32, i32, i32
  }
  func.func @transform_1(%arg0: i32, %arg1: memref<2x8xi32, #tpu.memory_space<smem>>) -> (i32, i32) {
    %c0_i32 = arith.constant 0 : i32
    %c0_i32_0 = arith.constant 0 : i32
    %c0_i32_1 = arith.constant 0 : i32
    return %c0_i32, %c0_i32_0 : i32, i32
  }
  func.func @transform_2(%arg0: i32, %arg1: memref<2x8xi32, #tpu.memory_space<smem>>) -> (i32, i32) {
    %c0_i32 = arith.constant 0 : i32
    %c0_i32_0 = arith.constant 0 : i32
    %c0_i32_1 = arith.constant 0 : i32
    return %c0_i32, %c0_i32_0 : i32, i32
  }
  func.func @transform_3(%arg0: i32, %arg1: memref<2x8xi32, #tpu.memory_space<smem>>) -> (i32, i32) {
    %c0_i32 = arith.constant 0 : i32
    %c0_i32_0 = arith.constant 0 : i32
    %c0_i32_1 = arith.constant 0 : i32
    return %c0_i32, %c0_i32_0 : i32, i32
  }
  func.func @transform_4(%arg0: i32, %arg1: memref<2x8xi32, #tpu.memory_space<smem>>) -> (i32, i32, i32) {
    %c0_i32 = arith.constant 0 : i32
    %c0_i32_0 = arith.constant 0 : i32
    %c0_i32_1 = arith.constant 0 : i32
    %c0_i32_2 = arith.constant 0 : i32
    return %c0_i32, %c0_i32_0, %c0_i32_1 : i32, i32, i32
  }
  func.func @transform_5(%arg0: i32, %arg1: memref<2x8xi32, #tpu.memory_space<smem>>) -> (i32, i32, i32) {
    %c0_i32 = arith.constant 0 : i32
    %c0_i32_0 = arith.constant 0 : i32
    %c0_i32_1 = arith.constant 0 : i32
    %c0_i32_2 = arith.constant 0 : i32
    return %c0_i32, %c0_i32_0, %c0_i32_1 : i32, i32, i32
  }
  func.func @transform_6(%arg0: i32, %arg1: memref<2x8xi32, #tpu.memory_space<smem>>) -> (i32, i32, i32) {
    %c0_i32 = arith.constant 0 : i32
    %c0_i32_0 = arith.constant 0 : i32
    %c0_i32_1 = arith.constant 0 : i32
    %c0_i32_2 = arith.constant 0 : i32
    return %c0_i32, %c0_i32_0, %c0_i32_1 : i32, i32, i32
  }
  func.func @transform_7(%arg0: i32, %arg1: memref<2x8xi32, #tpu.memory_space<smem>>) -> (i32, i32, i32) {
    %c0_i32 = arith.constant 0 : i32
    %c0_i32_0 = arith.constant 0 : i32
    %c0_i32_1 = arith.constant 0 : i32
    %c0_i32_2 = arith.constant 0 : i32
    return %c0_i32, %c0_i32_0, %c0_i32_1 : i32, i32, i32
  }
  func.func @transform_8(%arg0: i32, %arg1: memref<2x8xi32, #tpu.memory_space<smem>>) -> (i32, i32) {
    %c0_i32 = arith.constant 0 : i32
    %c0_i32_0 = arith.constant 0 : i32
    %c0_i32_1 = arith.constant 0 : i32
    return %c0_i32, %c0_i32_0 : i32, i32
  }
  func.func @transform_9(%arg0: i32, %arg1: memref<2x8xi32, #tpu.memory_space<smem>>) -> (i32, i32) {
    %c0_i32 = arith.constant 0 : i32
    %c0_i32_0 = arith.constant 0 : i32
    %c0_i32_1 = arith.constant 0 : i32
    return %c0_i32, %c0_i32_0 : i32, i32
  }
  func.func @transform_10(%arg0: i32, %arg1: memref<2x8xi32, #tpu.memory_space<smem>>) -> (i32, i32) {
    %c0_i32 = arith.constant 0 : i32
    %c0_i32_0 = arith.constant 0 : i32
    %c0_i32_1 = arith.constant 0 : i32
    return %c0_i32, %c0_i32_0 : i32, i32
  }
  func.func @transform_11(%arg0: i32, %arg1: memref<2x8xi32, #tpu.memory_space<smem>>) -> (i32, i32, i32) {
    %c0_i32 = arith.constant 0 : i32
    %c0_i32_0 = arith.constant 0 : i32
    %c0_i32_1 = arith.constant 0 : i32
    %c0_i32_2 = arith.constant 0 : i32
    return %c0_i32, %c0_i32_0, %c0_i32_1 : i32, i32, i32
  }
  func.func @transform_12(%arg0: i32, %arg1: memref<2x8xi32, #tpu.memory_space<smem>>) -> (i32, i32) {
    %c0_i32 = arith.constant 0 : i32
    %c0_i32_0 = arith.constant 0 : i32
    %c0_i32_1 = arith.constant 0 : i32
    return %c0_i32, %c0_i32_0 : i32, i32
  }
  func.func @transform_13(%arg0: i32, %arg1: memref<2x8xi32, #tpu.memory_space<smem>>) -> (i32, i32, i32) {
    %c0_i32 = arith.constant 0 : i32
    %c0_i32_0 = arith.constant 0 : i32
    %c0_i32_1 = arith.constant 0 : i32
    %c0_i32_2 = arith.constant 0 : i32
    return %c0_i32, %c0_i32_0, %c0_i32_1 : i32, i32, i32
  }
  func.func @transform_14(%arg0: i32, %arg1: memref<2x8xi32, #tpu.memory_space<smem>>) -> (i32, i32) {
    %c0_i32 = arith.constant 0 : i32
    %c0_i32_0 = arith.constant 0 : i32
    %c0_i32_1 = arith.constant 0 : i32
    return %c0_i32, %c0_i32_0 : i32, i32
  }
  func.func @transform_15(%arg0: i32, %arg1: memref<2x8xi32, #tpu.memory_space<smem>>) -> (i32, i32) {
    %c0_i32 = arith.constant 0 : i32
    %c0_i32_0 = arith.constant 0 : i32
    %c0_i32_1 = arith.constant 0 : i32
    return %c0_i32, %c0_i32_0 : i32, i32
  }
  func.func @transform_16(%arg0: i32, %arg1: memref<2x8xi32, #tpu.memory_space<smem>>) -> (i32, i32) {
    %c0_i32 = arith.constant 0 : i32
    %c0_i32_0 = arith.constant 0 : i32
    %c0_i32_1 = arith.constant 0 : i32
    return %c0_i32, %c0_i32_0 : i32, i32
  }
  func.func @transform_17(%arg0: i32, %arg1: memref<2x8xi32, #tpu.memory_space<smem>>) -> (i32, i32) {
    %c0_i32 = arith.constant 0 : i32
    %c0_i32_0 = arith.constant 0 : i32
    %c0_i32_1 = arith.constant 0 : i32
    return %c0_i32, %c0_i32_0 : i32, i32
  }
  func.func @transform_18(%arg0: i32, %arg1: memref<2x8xi32, #tpu.memory_space<smem>>) -> (i32, i32) {
    %c0_i32 = arith.constant 0 : i32
    %c0_i32_0 = arith.constant 0 : i32
    %c0_i32_1 = arith.constant 0 : i32
    return %c0_i32, %c0_i32_0 : i32, i32
  }
  func.func @transform_19(%arg0: i32, %arg1: memref<2x8xi32, #tpu.memory_space<smem>>) -> (i32, i32) {
    %c0_i32 = arith.constant 0 : i32
    %c0_i32_0 = arith.constant 0 : i32
    return %arg0, %c0_i32 : i32, i32
  }
}

</mosaic_0001>

<llo_original>
// kernel: tpu_custom_call.1
$region0: #{tpu_custom_call.1}
  #allocation0 [shape = 'u32[]', space=smem, size = 0x4, offset = 0x4, fixed_abs, tag = 'smem constant byte address 0x4 - core index']
  #allocation1 [shape = 'u32[144,128]{1,0:T(1,128)}', space=vmem, size = 0x12000, scoped, tag = 'internal scratch']
  #allocation2 [shape = 'f32[8,32]{1,0:T(8,128)}', space=vmem, size = 0x1000, scoped, tag = 'scratch operand']
  #allocation3 [shape = 's32[1]{0}', space=sflag, size = 0x4, scoped, tag = 'scoped memory for tpu_custom_call.1']
  #allocation4 [shape = 'u8[1024]{0}', space=smem, size = 0x400, scoped, tag = 'prefetched SMEM operand 0']
  %s0 = inlined_call_operand.hbm [shape: s32[2,8], index: 0, kind: input, shape index: {}]
  %s1 = inlined_call_operand.hbm [shape: f32[16,1,32], index: 1, kind: input, shape index: {}]
  %s2 = inlined_call_operand.hbm [shape: f32[8,32], index: 2, kind: input, shape index: {}]
  %s3 = inlined_call_operand.vmem [shape: f32[2,32], index: 3, kind: input, shape index: {}]
  %s4 = inlined_call_operand.vmem [shape: f32[2,32], index: 4, kind: input, shape index: {}]
  %s5 = inlined_call_operand.vmem [shape: f32[2,32,32], index: 5, kind: input, shape index: {}]
  %s6 = inlined_call_operand.vmem [shape: f32[2,32,32], index: 6, kind: input, shape index: {}]
  %s7 = inlined_call_operand.vmem [shape: f32[2,32,32], index: 7, kind: input, shape index: {}]
  %s8 = inlined_call_operand.vmem [shape: f32[2,32,32], index: 8, kind: input, shape index: {}]
  %s9 = inlined_call_operand.hbm [shape: f32[2,32], index: 9, kind: input, shape index: {}]
  %s10 = inlined_call_operand.hbm [shape: f32[2,32], index: 10, kind: input, shape index: {}]
  %s11 = inlined_call_operand.vmem [shape: f32[2,32], index: 11, kind: input, shape index: {}]
  %s12 = inlined_call_operand.vmem [shape: f32[2,32,128], index: 12, kind: input, shape index: {}]
  %s13 = inlined_call_operand.vmem [shape: f32[2,128], index: 13, kind: input, shape index: {}]
  %s14 = inlined_call_operand.vmem [shape: f32[2,128,32], index: 14, kind: input, shape index: {}]
  %s15 = inlined_call_operand.vmem [shape: f32[2,32], index: 15, kind: input, shape index: {}]
  %s16 = inlined_call_operand.vmem [shape: f32[1,32], index: 16, kind: input, shape index: {}]
  %s17 = inlined_call_operand.vmem [shape: f32[1,32], index: 17, kind: input, shape index: {}]
  %s18 = inlined_call_operand.vmem [shape: f32[32,128], index: 18, kind: input, shape index: {}]
  %s19 = inlined_call_operand.vmem [shape: f32[1,128], index: 19, kind: input, shape index: {}]
  %s20 = inlined_call_operand.hbm [shape: f32[16,128], index: 20, kind: output, shape index: {}]
  %s21 = sld [smem:[#allocation0]]
  $region125: #{tpu_custom_call.1} parent=0
    _
  %s23 = ssub.s32 1, %s21
  %s24 = scalar_select 0, %s23, %s21
  %26 = dma.hbm_to_smem %s0, 32, [#allocation4], [#allocation3]
  %27 = dma.done [#allocation3], 32
  %28 = sfence
  $region1: #{tpu_custom_call.1} parent=0
    #allocation5 [shape = 'u8[8192]{0}', space=vmem, size = 0x2000, scoped, tag = 'input window, operand 1, single buffered']
    #allocation6 [shape = 's32[2]{0}', space=sflag, size = 0x8, scoped, tag = 'scoped memory for tpu_custom_call.1']
    #allocation7 [shape = 's32[2]{0}', space=sflag, size = 0x8, scoped, tag = 'scoped memory for tpu_custom_call.1']
    #allocation8 [shape = 'u8[4096]{0}', space=vmem, size = 0x1000, scoped, tag = 'input window, operand 2, single buffered']
    #allocation9 [shape = 's32[1]{0}', space=sflag, size = 0x4, scoped, tag = 'scoped memory for tpu_custom_call.1']
    #allocation10 [shape = 'u8[1024]{0}', space=vmem, size = 0x400, scoped, tag = 'input window, operand 9, single buffered']
    #allocation11 [shape = 'u8[1024]{0}', space=vmem, size = 0x400, scoped, tag = 'input window, operand 10, single buffered']
    #allocation12 [shape = 's32[1]{0}', space=sflag, size = 0x4, scoped, tag = 'scoped memory for tpu_custom_call.1']
    #allocation13 [shape = 'u8[8192]{0}', space=vmem, size = 0x2000, scoped, tag = 'output window, operand 0']
    %29 = vsyncpa [#allocation6], 0
    %30 = vsyncpa [#allocation9], 0
    %31 = vsyncpa [#allocation12], 0
    %32 = vsyncpa [#allocation7], 0
    %s33 = scalar_lea.sflag [#allocation7], 1
    %34 = vsyncpa %s33, 0
    loop: start=0, step=1, limit=4
    $region2: #{tpu_custom_call.1} parent=1 // loop_pre_header
      _
    $region3: #{tpu_custom_call.1} parent=1 // loop_header
      %s36 = sphi 0, %s40
      %p37 = scmp.ge.s32.totalorder %s36, 4
      %s44 = sphi 0, %s44
      %s46 = sphi 0, %s44
      %s47 = sphi 0, %s46
      %s61 = sphi 0, %s47
      %s65 = sphi 0, %s65
      %s67 = sphi 0, %s65
      %s68 = sphi 0, %s67
      %s82 = sphi 0, %s68
      %s86 = sphi 0, %s86
      %s88 = sphi 0, %s86
      %s89 = sphi 0, %s88
      %s103 = sphi 0, %s89
      %s107 = sphi 0, %s107
      %s109 = sphi 0, %s107
      %s110 = sphi 0, %s109
      %s124 = sphi 0, %s110
      %s128 = sphi 0, %s128
      %s130 = sphi 0, %s128
      %s131 = sphi 0, %s130
      %s145 = sphi 0, %s131
      %s149 = sphi 0, %s149
      %s151 = sphi 0, %s149
      %s152 = sphi 0, %s151
      %s166 = sphi 0, %s152
      %s170 = sphi 0, %s170
      %s172 = sphi 0, %s170
      %s173 = sphi 0, %s172
      %s187 = sphi 0, %s173
      %s191 = sphi 0, %s191
      %s193 = sphi 0, %s191
      %s194 = sphi 0, %s193
      %s208 = sphi 0, %s194
      %s212 = sphi 0, %s212
      %s214 = sphi 0, %s212
      %s215 = sphi 0, %s214
      %s229 = sphi 0, %s215
      %s233 = sphi 0, %s233
      %s235 = sphi 0, %s233
      %s236 = sphi 0, %s235
      %s250 = sphi 0, %s236
      %s254 = sphi 0, %s254
      %s256 = sphi 0, %s254
      %s257 = sphi 0, %s256
      %s271 = sphi 0, %s257
      %s275 = sphi 0, %s275
      %s277 = sphi 0, %s275
      %s278 = sphi 0, %s277
      %s292 = sphi 0, %s278
      %s296 = sphi 0, %s296
      %s298 = sphi 0, %s296
      %s299 = sphi 0, %s298
      %s313 = sphi 0, %s299
      %s317 = sphi 0, %s317
      %s319 = sphi 0, %s317
      %s320 = sphi 0, %s319
      %s334 = sphi 0, %s320
      %s338 = sphi 0, %s338
      %s340 = sphi 0, %s338
      %s341 = sphi 0, %s340
      %s355 = sphi 0, %s341
      %s359 = sphi 0, %s359
      %s361 = sphi 0, %s359
      %s362 = sphi 0, %s361
      %s376 = sphi 0, %s362
      %s380 = sphi 0, %s380
      %s382 = sphi 0, %s380
      %s383 = sphi 0, %s382
      %s397 = sphi 0, %s383
      %s401 = sphi 0, %s401
      %s403 = sphi 0, %s401
      %s404 = sphi 0, %s403
      %s418 = sphi 0, %s404
      %s422 = sphi 0, %s422
      %s424 = sphi 0, %s422
      %s425 = sphi 0, %s424
      %s439 = sphi 0, %s425
      %s445 = sphi 0, %s447
      %s448 = sphi 0, %s445
      %s449 = sphi 0, %s448
      %s465 = sphi 0, %s449
    $region4: #{tpu_custom_call.1} parent=1 // loop_header_branch
      %39 = sbr.rel (%p37) target = $region8
    $region5: #{tpu_custom_call.1} parent=1 // loop_body
      %s41 = ssub.s32 %s36, 1
      %s42 = ssub.s32 %s36, 2
      %s43 = sadd.s32 %s36, 1
      %s45 = sadd.s32 %s44, 1
      %p48 = scmp.eq.s32.totalorder %s36, 1
      %p49 = scmp.ne.s32.totalorder %s44, %s46
      %p50 = scmp.eq.s32.totalorder %s36, 0
      %p51 = por %p49, %p50
      %p52 = scmp.ne.s32.totalorder %s44, %s46
      %p53 = scmp.eq.s32.totalorder %s41, 1
      %p54 = por %p52, %p53
      %p55 = scmp.ne.s32.totalorder %s46, %s47
      %p56 = scmp.eq.s32.totalorder %s41, 0
      %p57 = por %p55, %p56
      %p58 = scmp.ne.s32.totalorder %s46, %s47
      %p59 = scmp.eq.s32.totalorder %s42, 1
      %p60 = por %p58, %p59
      %p62 = scmp.ne.s32.totalorder %s47, %s61
      %p63 = scmp.eq.s32.totalorder %s42, 0
      %p64 = por %p62, %p63
      %s66 = sadd.s32 %s65, 1
      %p69 = scmp.eq.s32.totalorder %s36, 1
      %p70 = scmp.ne.s32.totalorder %s65, %s67
      %p71 = scmp.eq.s32.totalorder %s36, 0
      %p72 = por %p70, %p71
      %p73 = scmp.ne.s32.totalorder %s65, %s67
      %p74 = scmp.eq.s32.totalorder %s41, 1
      %p75 = por %p73, %p74
      %p76 = scmp.ne.s32.totalorder %s67, %s68
      %p77 = scmp.eq.s32.totalorder %s41, 0
      %p78 = por %p76, %p77
      %p79 = scmp.ne.s32.totalorder %s67, %s68
      %p80 = scmp.eq.s32.totalorder %s42, 1
      %p81 = por %p79, %p80
      %p83 = scmp.ne.s32.totalorder %s68, %s82
      %p84 = scmp.eq.s32.totalorder %s42, 0
      %p85 = por %p83, %p84
      %s87 = sadd.s32 %s86, 1
      %p90 = scmp.eq.s32.totalorder %s36, 1
      %p91 = scmp.ne.s32.totalorder %s86, %s88
      %p92 = scmp.eq.s32.totalorder %s36, 0
      %p93 = por %p91, %p92
      %p94 = scmp.ne.s32.totalorder %s86, %s88
      %p95 = scmp.eq.s32.totalorder %s41, 1
      %p96 = por %p94, %p95
      %p97 = scmp.ne.s32.totalorder %s88, %s89
      %p98 = scmp.eq.s32.totalorder %s41, 0
      %p99 = por %p97, %p98
      %p100 = scmp.ne.s32.totalorder %s88, %s89
      %p101 = scmp.eq.s32.totalorder %s42, 1
      %p102 = por %p100, %p101
      %p104 = scmp.ne.s32.totalorder %s89, %s103
      %p105 = scmp.eq.s32.totalorder %s42, 0
      %p106 = por %p104, %p105
      %s108 = sadd.s32 %s107, 1
      %p111 = scmp.eq.s32.totalorder %s36, 1
      %p112 = scmp.ne.s32.totalorder %s107, %s109
      %p113 = scmp.eq.s32.totalorder %s36, 0
      %p114 = por %p112, %p113
      %p115 = scmp.ne.s32.totalorder %s107, %s109
      %p116 = scmp.eq.s32.totalorder %s41, 1
      %p117 = por %p115, %p116
      %p118 = scmp.ne.s32.totalorder %s109, %s110
      %p119 = scmp.eq.s32.totalorder %s41, 0
      %p120 = por %p118, %p119
      %p121 = scmp.ne.s32.totalorder %s109, %s110
      %p122 = scmp.eq.s32.totalorder %s42, 1
      %p123 = por %p121, %p122
      %p125 = scmp.ne.s32.totalorder %s110, %s124
      %p126 = scmp.eq.s32.totalorder %s42, 0
      %p127 = por %p125, %p126
      %s129 = sadd.s32 %s128, 1
      %p132 = scmp.eq.s32.totalorder %s36, 1
      %p133 = scmp.ne.s32.totalorder %s128, %s130
      %p134 = scmp.eq.s32.totalorder %s36, 0
      %p135 = por %p133, %p134
      %p136 = scmp.ne.s32.totalorder %s128, %s130
      %p137 = scmp.eq.s32.totalorder %s41, 1
      %p138 = por %p136, %p137
      %p139 = scmp.ne.s32.totalorder %s130, %s131
      %p140 = scmp.eq.s32.totalorder %s41, 0
      %p141 = por %p139, %p140
      %p142 = scmp.ne.s32.totalorder %s130, %s131
      %p143 = scmp.eq.s32.totalorder %s42, 1
      %p144 = por %p142, %p143
      %p146 = scmp.ne.s32.totalorder %s131, %s145
      %p147 = scmp.eq.s32.totalorder %s42, 0
      %p148 = por %p146, %p147
      %s150 = sadd.s32 %s149, 1
      %p153 = scmp.eq.s32.totalorder %s36, 1
      %p154 = scmp.ne.s32.totalorder %s149, %s151
      %p155 = scmp.eq.s32.totalorder %s36, 0
      %p156 = por %p154, %p155
      %p157 = scmp.ne.s32.totalorder %s149, %s151
      %p158 = scmp.eq.s32.totalorder %s41, 1
      %p159 = por %p157, %p158
      %p160 = scmp.ne.s32.totalorder %s151, %s152
      %p161 = scmp.eq.s32.totalorder %s41, 0
      %p162 = por %p160, %p161
      %p163 = scmp.ne.s32.totalorder %s151, %s152
      %p164 = scmp.eq.s32.totalorder %s42, 1
      %p165 = por %p163, %p164
      %p167 = scmp.ne.s32.totalorder %s152, %s166
      %p168 = scmp.eq.s32.totalorder %s42, 0
      %p169 = por %p167, %p168
      %s171 = sadd.s32 %s170, 1
      %p174 = scmp.eq.s32.totalorder %s36, 1
      %p175 = scmp.ne.s32.totalorder %s170, %s172
      %p176 = scmp.eq.s32.totalorder %s36, 0
      %p177 = por %p175, %p176
      %p178 = scmp.ne.s32.totalorder %s170, %s172
      %p179 = scmp.eq.s32.totalorder %s41, 1
      %p180 = por %p178, %p179
      %p181 = scmp.ne.s32.totalorder %s172, %s173
      %p182 = scmp.eq.s32.totalorder %s41, 0
      %p183 = por %p181, %p182
      %p184 = scmp.ne.s32.totalorder %s172, %s173
      %p185 = scmp.eq.s32.totalorder %s42, 1
      %p186 = por %p184, %p185
      %p188 = scmp.ne.s32.totalorder %s173, %s187
      %p189 = scmp.eq.s32.totalorder %s42, 0
      %p190 = por %p188, %p189
      %s192 = sadd.s32 %s191, 1
      %p195 = scmp.eq.s32.totalorder %s36, 1
      %p196 = scmp.ne.s32.totalorder %s191, %s193
      %p197 = scmp.eq.s32.totalorder %s36, 0
      %p198 = por %p196, %p197
      %p199 = scmp.ne.s32.totalorder %s191, %s193
      %p200 = scmp.eq.s32.totalorder %s41, 1
      %p201 = por %p199, %p200
      %p202 = scmp.ne.s32.totalorder %s193, %s194
      %p203 = scmp.eq.s32.totalorder %s41, 0
      %p204 = por %p202, %p203
      %p205 = scmp.ne.s32.totalorder %s193, %s194
      %p206 = scmp.eq.s32.totalorder %s42, 1
      %p207 = por %p205, %p206
      %p209 = scmp.ne.s32.totalorder %s194, %s208
      %p210 = scmp.eq.s32.totalorder %s42, 0
      %p211 = por %p209, %p210
      %s213 = sadd.s32 %s212, 1
      %p216 = scmp.eq.s32.totalorder %s36, 1
      %p217 = scmp.ne.s32.totalorder %s212, %s214
      %p218 = scmp.eq.s32.totalorder %s36, 0
      %p219 = por %p217, %p218
      %p220 = scmp.ne.s32.totalorder %s212, %s214
      %p221 = scmp.eq.s32.totalorder %s41, 1
      %p222 = por %p220, %p221
      %p223 = scmp.ne.s32.totalorder %s214, %s215
      %p224 = scmp.eq.s32.totalorder %s41, 0
      %p225 = por %p223, %p224
      %p226 = scmp.ne.s32.totalorder %s214, %s215
      %p227 = scmp.eq.s32.totalorder %s42, 1
      %p228 = por %p226, %p227
      %p230 = scmp.ne.s32.totalorder %s215, %s229
      %p231 = scmp.eq.s32.totalorder %s42, 0
      %p232 = por %p230, %p231
      %s234 = sadd.s32 %s233, 1
      %p237 = scmp.eq.s32.totalorder %s36, 1
      %p238 = scmp.ne.s32.totalorder %s233, %s235
      %p239 = scmp.eq.s32.totalorder %s36, 0
      %p240 = por %p238, %p239
      %p241 = scmp.ne.s32.totalorder %s233, %s235
      %p242 = scmp.eq.s32.totalorder %s41, 1
      %p243 = por %p241, %p242
      %p244 = scmp.ne.s32.totalorder %s235, %s236
      %p245 = scmp.eq.s32.totalorder %s41, 0
      %p246 = por %p244, %p245
      %p247 = scmp.ne.s32.totalorder %s235, %s236
      %p248 = scmp.eq.s32.totalorder %s42, 1
      %p249 = por %p247, %p248
      %p251 = scmp.ne.s32.totalorder %s236, %s250
      %p252 = scmp.eq.s32.totalorder %s42, 0
      %p253 = por %p251, %p252
      %s255 = sadd.s32 %s254, 1
      %p258 = scmp.eq.s32.totalorder %s36, 1
      %p259 = scmp.ne.s32.totalorder %s254, %s256
      %p260 = scmp.eq.s32.totalorder %s36, 0
      %p261 = por %p259, %p260
      %p262 = scmp.ne.s32.totalorder %s254, %s256
      %p263 = scmp.eq.s32.totalorder %s41, 1
      %p264 = por %p262, %p263
      %p265 = scmp.ne.s32.totalorder %s256, %s257
      %p266 = scmp.eq.s32.totalorder %s41, 0
      %p267 = por %p265, %p266
      %p268 = scmp.ne.s32.totalorder %s256, %s257
      %p269 = scmp.eq.s32.totalorder %s42, 1
      %p270 = por %p268, %p269
      %p272 = scmp.ne.s32.totalorder %s257, %s271
      %p273 = scmp.eq.s32.totalorder %s42, 0
      %p274 = por %p272, %p273
      %s276 = sadd.s32 %s275, 1
      %p279 = scmp.eq.s32.totalorder %s36, 1
      %p280 = scmp.ne.s32.totalorder %s275, %s277
      %p281 = scmp.eq.s32.totalorder %s36, 0
      %p282 = por %p280, %p281
      %p283 = scmp.ne.s32.totalorder %s275, %s277
      %p284 = scmp.eq.s32.totalorder %s41, 1
      %p285 = por %p283, %p284
      %p286 = scmp.ne.s32.totalorder %s277, %s278
      %p287 = scmp.eq.s32.totalorder %s41, 0
      %p288 = por %p286, %p287
      %p289 = scmp.ne.s32.totalorder %s277, %s278
      %p290 = scmp.eq.s32.totalorder %s42, 1
      %p291 = por %p289, %p290
      %p293 = scmp.ne.s32.totalorder %s278, %s292
      %p294 = scmp.eq.s32.totalorder %s42, 0
      %p295 = por %p293, %p294
      %s297 = sadd.s32 %s296, 1
      %p300 = scmp.eq.s32.totalorder %s36, 1
      %p301 = scmp.ne.s32.totalorder %s296, %s298
      %p302 = scmp.eq.s32.totalorder %s36, 0
      %p303 = por %p301, %p302
      %p304 = scmp.ne.s32.totalorder %s296, %s298
      %p305 = scmp.eq.s32.totalorder %s41, 1
      %p306 = por %p304, %p305
      %p307 = scmp.ne.s32.totalorder %s298, %s299
      %p308 = scmp.eq.s32.totalorder %s41, 0
      %p309 = por %p307, %p308
      %p310 = scmp.ne.s32.totalorder %s298, %s299
      %p311 = scmp.eq.s32.totalorder %s42, 1
      %p312 = por %p310, %p311
      %p314 = scmp.ne.s32.totalorder %s299, %s313
      %p315 = scmp.eq.s32.totalorder %s42, 0
      %p316 = por %p314, %p315
      %s318 = sadd.s32 %s317, 1
      %p321 = scmp.eq.s32.totalorder %s36, 1
      %p322 = scmp.ne.s32.totalorder %s317, %s319
      %p323 = scmp.eq.s32.totalorder %s36, 0
      %p324 = por %p322, %p323
      %p325 = scmp.ne.s32.totalorder %s317, %s319
      %p326 = scmp.eq.s32.totalorder %s41, 1
      %p327 = por %p325, %p326
      %p328 = scmp.ne.s32.totalorder %s319, %s320
      %p329 = scmp.eq.s32.totalorder %s41, 0
      %p330 = por %p328, %p329
      %p331 = scmp.ne.s32.totalorder %s319, %s320
      %p332 = scmp.eq.s32.totalorder %s42, 1
      %p333 = por %p331, %p332
      %p335 = scmp.ne.s32.totalorder %s320, %s334
      %p336 = scmp.eq.s32.totalorder %s42, 0
      %p337 = por %p335, %p336
      %s339 = sadd.s32 %s338, 1
      %p342 = scmp.eq.s32.totalorder %s36, 1
      %p343 = scmp.ne.s32.totalorder %s338, %s340
      %p344 = scmp.eq.s32.totalorder %s36, 0
      %p345 = por %p343, %p344
      %p346 = scmp.ne.s32.totalorder %s338, %s340
      %p347 = scmp.eq.s32.totalorder %s41, 1
      %p348 = por %p346, %p347
      %p349 = scmp.ne.s32.totalorder %s340, %s341
      %p350 = scmp.eq.s32.totalorder %s41, 0
      %p351 = por %p349, %p350
      %p352 = scmp.ne.s32.totalorder %s340, %s341
      %p353 = scmp.eq.s32.totalorder %s42, 1
      %p354 = por %p352, %p353
      %p356 = scmp.ne.s32.totalorder %s341, %s355
      %p357 = scmp.eq.s32.totalorder %s42, 0
      %p358 = por %p356, %p357
      %s360 = sadd.s32 %s359, 1
      %p363 = scmp.eq.s32.totalorder %s36, 1
      %p364 = scmp.ne.s32.totalorder %s359, %s361
      %p365 = scmp.eq.s32.totalorder %s36, 0
      %p366 = por %p364, %p365
      %p367 = scmp.ne.s32.totalorder %s359, %s361
      %p368 = scmp.eq.s32.totalorder %s41, 1
      %p369 = por %p367, %p368
      %p370 = scmp.ne.s32.totalorder %s361, %s362
      %p371 = scmp.eq.s32.totalorder %s41, 0
      %p372 = por %p370, %p371
      %p373 = scmp.ne.s32.totalorder %s361, %s362
      %p374 = scmp.eq.s32.totalorder %s42, 1
      %p375 = por %p373, %p374
      %p377 = scmp.ne.s32.totalorder %s362, %s376
      %p378 = scmp.eq.s32.totalorder %s42, 0
      %p379 = por %p377, %p378
      %s381 = sadd.s32 %s380, 1
      %p384 = scmp.eq.s32.totalorder %s36, 1
      %p385 = scmp.ne.s32.totalorder %s380, %s382
      %p386 = scmp.eq.s32.totalorder %s36, 0
      %p387 = por %p385, %p386
      %p388 = scmp.ne.s32.totalorder %s380, %s382
      %p389 = scmp.eq.s32.totalorder %s41, 1
      %p390 = por %p388, %p389
      %p391 = scmp.ne.s32.totalorder %s382, %s383
      %p392 = scmp.eq.s32.totalorder %s41, 0
      %p393 = por %p391, %p392
      %p394 = scmp.ne.s32.totalorder %s382, %s383
      %p395 = scmp.eq.s32.totalorder %s42, 1
      %p396 = por %p394, %p395
      %p398 = scmp.ne.s32.totalorder %s383, %s397
      %p399 = scmp.eq.s32.totalorder %s42, 0
      %p400 = por %p398, %p399
      %s402 = sadd.s32 %s401, 1
      %p405 = scmp.eq.s32.totalorder %s36, 1
      %p406 = scmp.ne.s32.totalorder %s401, %s403
      %p407 = scmp.eq.s32.totalorder %s36, 0
      %p408 = por %p406, %p407
      %p409 = scmp.ne.s32.totalorder %s401, %s403
      %p410 = scmp.eq.s32.totalorder %s41, 1
      %p411 = por %p409, %p410
      %p412 = scmp.ne.s32.totalorder %s403, %s404
      %p413 = scmp.eq.s32.totalorder %s41, 0
      %p414 = por %p412, %p413
      %p415 = scmp.ne.s32.totalorder %s403, %s404
      %p416 = scmp.eq.s32.totalorder %s42, 1
      %p417 = por %p415, %p416
      %p419 = scmp.ne.s32.totalorder %s404, %s418
      %p420 = scmp.eq.s32.totalorder %s42, 0
      %p421 = por %p419, %p420
      %s423 = sadd.s32 %s422, 1
      %p426 = scmp.eq.s32.totalorder %s36, 1
      %p427 = scmp.ne.s32.totalorder %s422, %s424
      %p428 = scmp.eq.s32.totalorder %s36, 0
      %p429 = por %p427, %p428
      %p430 = scmp.ne.s32.totalorder %s422, %s424
      %p431 = scmp.eq.s32.totalorder %s41, 1
      %p432 = por %p430, %p431
      %p433 = scmp.ne.s32.totalorder %s424, %s425
      %p434 = scmp.eq.s32.totalorder %s41, 0
      %p435 = por %p433, %p434
      %p436 = scmp.ne.s32.totalorder %s424, %s425
      %p437 = scmp.eq.s32.totalorder %s42, 1
      %p438 = por %p436, %p437
      %p440 = scmp.ne.s32.totalorder %s425, %s439
      %p441 = scmp.eq.s32.totalorder %s42, 0
      %p442 = por %p440, %p441
      %s443 = ssub.s32 %s36, %s43
      %p444 = scmp.eq.s32.totalorder %s443, 0
      %s446 = sadd.s32 %s445, 1
      %s447 = scalar_select %p444, %s445, %s446
      %p450 = pneg %p444
      %p451 = scmp.eq.s32.totalorder %s36, 1
      %p452 = por %p450, %p451
      %p453 = scmp.ne.s32.totalorder %s445, %s448
      %p454 = scmp.eq.s32.totalorder %s36, 0
      %p455 = por %p453, %p454
      %p456 = scmp.ne.s32.totalorder %s445, %s448
      %p457 = scmp.eq.s32.totalorder %s41, 1
      %p458 = por %p456, %p457
      %p459 = scmp.ne.s32.totalorder %s448, %s449
      %p460 = scmp.eq.s32.totalorder %s41, 0
      %p461 = por %p459, %p460
      %p462 = scmp.ne.s32.totalorder %s448, %s449
      %p463 = scmp.eq.s32.totalorder %s42, 1
      %p464 = por %p462, %p463
      %p466 = scmp.ne.s32.totalorder %s449, %s465
      %p467 = scmp.eq.s32.totalorder %s42, 0
      %p468 = por %p466, %p467
      %p469 = scmp.le.s32.totalorder 1, %s36
      %p470 = scmp.lt.s32.totalorder %s36, 3
      %p471 = pnand %p469, %p470
      %p472 = pneg %p471
      // Predicated region
      $region9: #{tpu_custom_call.1} parent=5 // pred_check
        _
      $region10: #{tpu_custom_call.1} parent=5 // pred_check_branch
        %474 = sbr.rel (%p471) target = $region12
      $region11: #{tpu_custom_call.1} parent=5 // pred_region
        %s475 = ssub.s32 %s36, 1
        // Predicated region
        $region13: #{tpu_custom_call.1} parent=11 // pred_check
          %p476 = pneg %p57
        $region14: #{tpu_custom_call.1} parent=11 // pred_check_branch
          %478 = sbr.rel (%p476) target = $region16
        $region15: #{tpu_custom_call.1} parent=11 // pred_region
          %s480 = ssub.s32 256, 256
          %481 = vsyncadd [#allocation6], %s480
          %s482 = sshll.u32 [#allocation5], 4
          %s483 = int_to_ptr.vmem [resolvable:$true] %s482
          %488 = dma.hbm_to_vmem [thread:$0]  %s1, 256, %s483, [#allocation6], 16, 16, 1
        $region16: #{tpu_custom_call.1} parent=11 // pred_fallthru
          _
        // Predicated region
        $region17: #{tpu_custom_call.1} parent=11 // pred_check
          %p489 = pneg %p78
        $region18: #{tpu_custom_call.1} parent=11 // pred_check_branch
          %491 = sbr.rel (%p489) target = $region20
        $region19: #{tpu_custom_call.1} parent=11 // pred_region
          %s493 = ssub.s32 128, 128
          %494 = vsyncadd [#allocation9], %s493
          %s496 = sshll.u32 [#allocation8], 4
          %s497 = int_to_ptr.vmem [resolvable:$true] %s496
          %499 = dma.hbm_to_vmem [thread:$0]  %s2, 128, %s497, [#allocation9]
        $region20: #{tpu_custom_call.1} parent=11 // pred_fallthru
          _
        // Predicated region
        $region21: #{tpu_custom_call.1} parent=11 // pred_check
          %p500 = pneg %p99
        $region22: #{tpu_custom_call.1} parent=11 // pred_check_branch
          %502 = sbr.rel (%p500) target = $region24
        $region23: #{tpu_custom_call.1} parent=11 // pred_region
          _
        $region24: #{tpu_custom_call.1} parent=11 // pred_fallthru
          _
        // Predicated region
        $region25: #{tpu_custom_call.1} parent=11 // pred_check
          %p503 = pneg %p120
        $region26: #{tpu_custom_call.1} parent=11 // pred_check_branch
          %505 = sbr.rel (%p503) target = $region28
        $region27: #{tpu_custom_call.1} parent=11 // pred_region
          _
        $region28: #{tpu_custom_call.1} parent=11 // pred_fallthru
          _
        // Predicated region
        $region29: #{tpu_custom_call.1} parent=11 // pred_check
          %p506 = pneg %p141
        $region30: #{tpu_custom_call.1} parent=11 // pred_check_branch
          %508 = sbr.rel (%p506) target = $region32
        $region31: #{tpu_custom_call.1} parent=11 // pred_region
          _
        $region32: #{tpu_custom_call.1} parent=11 // pred_fallthru
          _
        // Predicated region
        $region33: #{tpu_custom_call.1} parent=11 // pred_check
          %p509 = pneg %p162
        $region34: #{tpu_custom_call.1} parent=11 // pred_check_branch
          %511 = sbr.rel (%p509) target = $region36
        $region35: #{tpu_custom_call.1} parent=11 // pred_region
          _
        $region36: #{tpu_custom_call.1} parent=11 // pred_fallthru
          _
        // Predicated region
        $region37: #{tpu_custom_call.1} parent=11 // pred_check
          %p512 = pneg %p183
        $region38: #{tpu_custom_call.1} parent=11 // pred_check_branch
          %514 = sbr.rel (%p512) target = $region40
        $region39: #{tpu_custom_call.1} parent=11 // pred_region
          _
        $region40: #{tpu_custom_call.1} parent=11 // pred_fallthru
          _
        // Predicated region
        $region41: #{tpu_custom_call.1} parent=11 // pred_check
          %p515 = pneg %p204
        $region42: #{tpu_custom_call.1} parent=11 // pred_check_branch
          %517 = sbr.rel (%p515) target = $region44
        $region43: #{tpu_custom_call.1} parent=11 // pred_region
          _
        $region44: #{tpu_custom_call.1} parent=11 // pred_fallthru
          _
        // Predicated region
        $region45: #{tpu_custom_call.1} parent=11 // pred_check
          %p518 = pneg %p225
        $region46: #{tpu_custom_call.1} parent=11 // pred_check_branch
          %520 = sbr.rel (%p518) target = $region48
        $region47: #{tpu_custom_call.1} parent=11 // pred_region
          %s522 = ssub.s32 32, 32
          %523 = vsyncadd [#allocation9], %s522
          %s525 = sshll.u32 [#allocation10], 4
          %s526 = int_to_ptr.vmem [resolvable:$true] %s525
          %528 = dma.hbm_to_vmem [thread:$0]  %s9, 32, %s526, [#allocation9]
        $region48: #{tpu_custom_call.1} parent=11 // pred_fallthru
          _
        // Predicated region
        $region49: #{tpu_custom_call.1} parent=11 // pred_check
          %p529 = pneg %p246
        $region50: #{tpu_custom_call.1} parent=11 // pred_check_branch
          %531 = sbr.rel (%p529) target = $region52
        $region51: #{tpu_custom_call.1} parent=11 // pred_region
          %s533 = ssub.s32 32, 32
          %534 = vsyncadd [#allocation12], %s533
          %s536 = sshll.u32 [#allocation11], 4
          %s537 = int_to_ptr.vmem [resolvable:$true] %s536
          %539 = dma.hbm_to_vmem [thread:$0]  %s10, 32, %s537, [#allocation12]
        $region52: #{tpu_custom_call.1} parent=11 // pred_fallthru
          _
        // Predicated region
        $region53: #{tpu_custom_call.1} parent=11 // pred_check
          %p540 = pneg %p267
        $region54: #{tpu_custom_call.1} parent=11 // pred_check_branch
          %542 = sbr.rel (%p540) target = $region56
        $region55: #{tpu_custom_call.1} parent=11 // pred_region
          _
        $region56: #{tpu_custom_call.1} parent=11 // pred_fallthru
          _
        // Predicated region
        $region57: #{tpu_custom_call.1} parent=11 // pred_check
          %p543 = pneg %p288
        $region58: #{tpu_custom_call.1} parent=11 // pred_check_branch
          %545 = sbr.rel (%p543) target = $region60
        $region59: #{tpu_custom_call.1} parent=11 // pred_region
          _
        $region60: #{tpu_custom_call.1} parent=11 // pred_fallthru
          _
        // Predicated region
        $region61: #{tpu_custom_call.1} parent=11 // pred_check
          %p546 = pneg %p309
        $region62: #{tpu_custom_call.1} parent=11 // pred_check_branch
          %548 = sbr.rel (%p546) target = $region64
        $region63: #{tpu_custom_call.1} parent=11 // pred_region
          _
        $region64: #{tpu_custom_call.1} parent=11 // pred_fallthru
          _
        // Predicated region
        $region65: #{tpu_custom_call.1} parent=11 // pred_check
          %p549 = pneg %p330
        $region66: #{tpu_custom_call.1} parent=11 // pred_check_branch
          %551 = sbr.rel (%p549) target = $region68
        $region67: #{tpu_custom_call.1} parent=11 // pred_region
          _
        $region68: #{tpu_custom_call.1} parent=11 // pred_fallthru
          _
        // Predicated region
        $region69: #{tpu_custom_call.1} parent=11 // pred_check
          %p552 = pneg %p351
        $region70: #{tpu_custom_call.1} parent=11 // pred_check_branch
          %554 = sbr.rel (%p552) target = $region72
        $region71: #{tpu_custom_call.1} parent=11 // pred_region
          _
        $region72: #{tpu_custom_call.1} parent=11 // pred_fallthru
          _
        // Predicated region
        $region73: #{tpu_custom_call.1} parent=11 // pred_check
          %p555 = pneg %p372
        $region74: #{tpu_custom_call.1} parent=11 // pred_check_branch
          %557 = sbr.rel (%p555) target = $region76
        $region75: #{tpu_custom_call.1} parent=11 // pred_region
          _
        $region76: #{tpu_custom_call.1} parent=11 // pred_fallthru
          _
        // Predicated region
        $region77: #{tpu_custom_call.1} parent=11 // pred_check
          %p558 = pneg %p393
        $region78: #{tpu_custom_call.1} parent=11 // pred_check_branch
          %560 = sbr.rel (%p558) target = $region80
        $region79: #{tpu_custom_call.1} parent=11 // pred_region
          _
        $region80: #{tpu_custom_call.1} parent=11 // pred_fallthru
          _
        // Predicated region
        $region81: #{tpu_custom_call.1} parent=11 // pred_check
          %p561 = pneg %p414
        $region82: #{tpu_custom_call.1} parent=11 // pred_check_branch
          %563 = sbr.rel (%p561) target = $region84
        $region83: #{tpu_custom_call.1} parent=11 // pred_region
          _
        $region84: #{tpu_custom_call.1} parent=11 // pred_fallthru
          _
        // Predicated region
        $region85: #{tpu_custom_call.1} parent=11 // pred_check
          %p564 = pneg %p435
        $region86: #{tpu_custom_call.1} parent=11 // pred_check_branch
          %566 = sbr.rel (%p564) target = $region88
        $region87: #{tpu_custom_call.1} parent=11 // pred_region
          _
        $region88: #{tpu_custom_call.1} parent=11 // pred_fallthru
          _
      $region12: #{tpu_custom_call.1} parent=5 // pred_fallthru
        _
      %p567 = scmp.lt.s32.totalorder %s36, 2
      // Predicated region
      $region89: #{tpu_custom_call.1} parent=5 // pred_check
        %p568 = pneg %p567
      $region90: #{tpu_custom_call.1} parent=5 // pred_check_branch
        %570 = sbr.rel (%p568) target = $region92
      $region91: #{tpu_custom_call.1} parent=5 // pred_region
        _
      $region92: #{tpu_custom_call.1} parent=5 // pred_fallthru
        _
      %p571 = scmp.le.s32.totalorder 1, %s36
      %p572 = scmp.lt.s32.totalorder %s36, 3
      %p573 = pnand %p571, %p572
      %p574 = pneg %p573
      // Predicated region
      $region93: #{tpu_custom_call.1} parent=5 // pred_check
        _
      $region94: #{tpu_custom_call.1} parent=5 // pred_check_branch
        %576 = sbr.rel (%p573) target = $region96
      $region95: #{tpu_custom_call.1} parent=5 // pred_region
        %s577 = ssub.s32 %s36, 1
        // Predicated region
        $region97: #{tpu_custom_call.1} parent=95 // pred_check
          %p578 = pneg %p57
        $region98: #{tpu_custom_call.1} parent=95 // pred_check_branch
          %580 = sbr.rel (%p578) target = $region100
        $region99: #{tpu_custom_call.1} parent=95 // pred_region
          %581 = dma.done [#allocation6], 256
        $region100: #{tpu_custom_call.1} parent=95 // pred_fallthru
          _
        // Predicated region
        $region101: #{tpu_custom_call.1} parent=95 // pred_check
          %p582 = pneg %p78
        $region102: #{tpu_custom_call.1} parent=95 // pred_check_branch
          %584 = sbr.rel (%p582) target = $region104
        $region103: #{tpu_custom_call.1} parent=95 // pred_region
          %585 = dma.done [#allocation9], 128
        $region104: #{tpu_custom_call.1} parent=95 // pred_fallthru
          _
        // Predicated region
        $region105: #{tpu_custom_call.1} parent=95 // pred_check
          %p586 = pneg %p225
        $region106: #{tpu_custom_call.1} parent=95 // pred_check_branch
          %588 = sbr.rel (%p586) target = $region108
        $region107: #{tpu_custom_call.1} parent=95 // pred_region
          %589 = dma.done [#allocation9], 32
        $region108: #{tpu_custom_call.1} parent=95 // pred_fallthru
          _
        // Predicated region
        $region109: #{tpu_custom_call.1} parent=95 // pred_check
          %p590 = pneg %p246
        $region110: #{tpu_custom_call.1} parent=95 // pred_check_branch
          %592 = sbr.rel (%p590) target = $region112
        $region111: #{tpu_custom_call.1} parent=95 // pred_region
          %593 = dma.done [#allocation12], 32
        $region112: #{tpu_custom_call.1} parent=95 // pred_fallthru
          _
        %p594 = pneg %p57
        %p595 = pneg %p54
        %p596 = pneg %p78
        %p597 = pneg %p75
        %p598 = pneg %p99
        %p599 = pneg %p96
        %p600 = pneg %p120
        %p601 = pneg %p117
        %p602 = pneg %p141
        %p603 = pneg %p138
        %p604 = pneg %p162
        %p605 = pneg %p159
        %p606 = pneg %p183
        %p607 = pneg %p180
        %p608 = pneg %p204
        %p609 = pneg %p201
        %p610 = pneg %p225
        %p611 = pneg %p222
        %p612 = pneg %p246
        %p613 = pneg %p243
        %p614 = pneg %p267
        %p615 = pneg %p264
        %p616 = pneg %p288
        %p617 = pneg %p285
        %p618 = pneg %p309
        %p619 = pneg %p306
        %p620 = pneg %p330
        %p621 = pneg %p327
        %p622 = pneg %p351
        %p623 = pneg %p348
        %p624 = pneg %p372
        %p625 = pneg %p369
        %p626 = pneg %p393
        %p627 = pneg %p390
        %p628 = pneg %p414
        %p629 = pneg %p411
        %p630 = pneg %p435
        %p631 = pneg %p432
        %p632 = pneg %p461
        %p633 = pneg %p458
        %s634 = sand.u32 %s448, 1
        %s635 = scalar_lea.sflag [#allocation7], %s634
        %s636 = sand.u32 %s448, 1
        %s637 = smul.addr %s636, 8
        %s638 = scalar_lea.vmem [#allocation13], %s637
        %s639 = smul.u32 %s41, 128
        %s640 = sld [smem:[#allocation4 + %s639]]
        %s641 = scalar_lea.vmem [#allocation5], %s640
        %v642 = vld [vmem:[%s641] sm:$0x1]
        %v643 = vld [vmem:[#allocation8] sm:$0x1]
        %v644 = vadd.f32 %v642, %v643
        %vm645 = vcmask 253952
        %646 = vst.msk [vmem:[#allocation2] sm:$0x1] %vm645, %v644
        %s647 = sadd.s32 %s639, 1
        %s648 = sld [smem:[#allocation4 + %s647]]
        %s649 = scalar_lea.vmem [#allocation5], %s648
        %v650 = vld [vmem:[%s649] sm:$0x1]
        %v651 = vld [vmem:[#allocation8 + $0x1] sm:$0x1]
        %v652 = vadd.f32 %v650, %v651
        %653 = vst.msk [vmem:[#allocation2 + $0x1] sm:$0x1] %vm645, %v652
        %s654 = sadd.s32 %s639, 2
        %s655 = sld [smem:[#allocation4 + %s654]]
        %s656 = scalar_lea.vmem [#allocation5], %s655
        %v657 = vld [vmem:[%s656] sm:$0x1]
        %v658 = vld [vmem:[#allocation8 + $0x2] sm:$0x1]
        %v659 = vadd.f32 %v657, %v658
        %660 = vst.msk [vmem:[#allocation2 + $0x2] sm:$0x1] %vm645, %v659
        %s661 = sadd.s32 %s639, 3
        %s662 = sld [smem:[#allocation4 + %s661]]
        %s663 = scalar_lea.vmem [#allocation5], %s662
        %v664 = vld [vmem:[%s663] sm:$0x1]
        %v665 = vld [vmem:[#allocation8 + $0x3] sm:$0x1]
        %v666 = vadd.f32 %v664, %v665
        %667 = vst.msk [vmem:[#allocation2 + $0x3] sm:$0x1] %vm645, %v666
        %s668 = sadd.s32 %s639, 4
        %s669 = sld [smem:[#allocation4 + %s668]]
        %s670 = scalar_lea.vmem [#allocation5], %s669
        %v671 = vld [vmem:[%s670] sm:$0x1]
        %v672 = vld [vmem:[#allocation8 + $0x4] sm:$0x1]
        %v673 = vadd.f32 %v671, %v672
        %674 = vst.msk [vmem:[#allocation2 + $0x4] sm:$0x1] %vm645, %v673
        %s675 = sadd.s32 %s639, 5
        %s676 = sld [smem:[#allocation4 + %s675]]
        %s677 = scalar_lea.vmem [#allocation5], %s676
        %v678 = vld [vmem:[%s677] sm:$0x1]
        %v679 = vld [vmem:[#allocation8 + $0x5] sm:$0x1]
        %v680 = vadd.f32 %v678, %v679
        %681 = vst.msk [vmem:[#allocation2 + $0x5] sm:$0x1] %vm645, %v680
        %s682 = sadd.s32 %s639, 6
        %s683 = sld [smem:[#allocation4 + %s682]]
        %s684 = scalar_lea.vmem [#allocation5], %s683
        %v685 = vld [vmem:[%s684] sm:$0x1]
        %v686 = vld [vmem:[#allocation8 + $0x6] sm:$0x1]
        %v687 = vadd.f32 %v685, %v686
        %688 = vst.msk [vmem:[#allocation2 + $0x6] sm:$0x1] %vm645, %v687
        %s689 = sadd.s32 %s639, 7
        %s690 = sld [smem:[#allocation4 + %s689]]
        %s691 = scalar_lea.vmem [#allocation5], %s690
        %v692 = vld [vmem:[%s691] sm:$0x1]
        %v693 = vld [vmem:[#allocation8 + $0x7] sm:$0x1]
        %v694 = vadd.f32 %v692, %v693
        %695 = vst.msk [vmem:[#allocation2 + $0x7] sm:$0x1] %vm645, %v694
        %v696 = vld [vmem:[#allocation2] sm:$0xff]
        %v697 = vlaneseq
        %v698 = vshrl.u32 %v697, 7
        %v699 = vlaneseq
        %v700 = vand.u32 %v699, 127
        %vm701 = vcmp.ge.s32.totalorder %v698, %v700
        %v702 = vsel %vm701, 0.0, -1e+09
        %v703 = vld [vmem:[%s3] sm:$0x1]
        %v704 = vld [vmem:[%s4] sm:$0x1]
        %vm705 = vcmask 261120
        %v706 = vsel %vm705, %v696, 0.0
        %707 = vadd.xlane.f32.xlu0 %v706
        %v708 = vpop.xlane.xlu0 %707
        %v709 = vrcp.pop 32.0
        %v710 = vmul.f32 %v708, %v709
        %v711 = vsub.f32 %v696, %v710
        %v712 = vmul.f32 %v711, %v711
        %v713 = vsel %vm705, %v712, 0.0
        %714 = vadd.xlane.f32.xlu0 %v713
        %v715 = vpop.xlane.xlu0 %714
        %v716 = vmul.f32 %v715, %v709
        %v717 = vadd.f32 %v716, 1e-05
        %v718 = vrsqrt.pop %v717
        %v719 = vmul.f32 %v711, %v718
        %v720 = vlaneseq
        %v721 = vshrl.u32 %v720, 7
        %v722 = vsub.s32 0, %v721
        %v723 = vrot.slane %v703, %v722
        %v724 = vmul.f32 %v719, %v723
        %v725 = vlaneseq
        %v726 = vshrl.u32 %v725, 7
        %v727 = vsub.s32 0, %v726
        %v728 = vrot.slane %v704, %v727
        %v729 = vadd.f32 %v724, %v728
        %v730 = vld [vmem:[%s5] sm:$0xff]
        %v731 = vld [vmem:[%s5 + $0x8] sm:$0xff]
        %v732 = vld [vmem:[%s5 + $0x10] sm:$0xff]
        %v733 = vld [vmem:[%s5 + $0x18] sm:$0xff]
        %v735 = vsel %vm705, %v729, 0
        %737 = vmatprep.subr.mxu0 0.0
        %738 = vmatpush1.msra.mxu0 %v730
        %739 = vmatprep.subr.mxu0 0.0
        %740 = vmatpush1.msra.mxu0 %v731
        %741 = vmatprep.subr.mxu0 0.0
        %742 = vmatpush1.msra.mxu0 %v732
        %743 = vmatprep.subr.mxu0 0.0
        %744 = vmatpush1.msra.mxu0 %v733
        %745 = vmatprep.subr.mxu0 0.0
        %746 = vmatpush1.msra.mxu0 0.0
        %747 = vmatprep.subr.mxu0 0.0
        %748 = vmatpush1.msra.mxu0 0.0
        %749 = vmatprep.subr.mxu0 0.0
        %750 = vmatpush1.msra.mxu0 0.0
        %751 = vmatprep.subr.mxu0 0.0
        %752 = vmatpush1.msra.mxu0 0.0
        %753 = vmatprep.subr.mxu0 0.0
        %754 = vmatpush1.msra.mxu0 0.0
        %755 = vmatprep.subr.mxu0 0.0
        %756 = vmatpush1.msra.mxu0 0.0
        %757 = vmatprep.subr.mxu0 0.0
        %758 = vmatpush1.msra.mxu0 0.0
        %759 = vmatprep.subr.mxu0 0.0
        %760 = vmatpush1.msra.mxu0 0.0
        %761 = vmatprep.subr.mxu0 0.0
        %762 = vmatpush1.msra.mxu0 0.0
        %763 = vmatprep.subr.mxu0 0.0
        %764 = vmatpush1.msra.mxu0 0.0
        %765 = vmatprep.subr.mxu0 0.0
        %766 = vmatpush1.msra.mxu0 0.0
        %767 = vmatprep.subr.mxu0 0.0
        %768 = vmatpush1.msra.mxu0 0.0
        %769 = vmatprep.subr.mxu0 0.0
        %770 = vmatpush1.msra.mxu0 0.0
        %771 = vmatprep.subr.mxu0 0.0
        %772 = vmatpush1.msra.mxu0 0.0
        %773 = vmatprep.subr.mxu0 0.0
        %774 = vmatpush1.msra.mxu0 0.0
        %775 = vmatprep.subr.mxu0 0.0
        %776 = vmatpush1.msra.mxu0 0.0
        %777 = vmatprep.subr.mxu0 0.0
        %778 = vmatpush1.msra.mxu0 0.0
        %779 = vmatprep.subr.mxu0 0.0
        %780 = vmatpush1.msra.mxu0 0.0
        %781 = vmatprep.subr.mxu0 0.0
        %782 = vmatpush1.msra.mxu0 0.0
        %783 = vmatprep.subr.mxu0 0.0
        %784 = vmatpush1.msra.mxu0 0.0
        %785 = vmatprep.subr.mxu0 0.0
        %786 = vmatpush1.msra.mxu0 0.0
        %787 = vmatprep.subr.mxu0 0.0
        %788 = vmatpush1.msra.mxu0 0.0
        %789 = vmatprep.subr.mxu0 0.0
        %790 = vmatpush1.msra.mxu0 0.0
        %791 = vmatprep.subr.mxu0 0.0
        %792 = vmatpush1.msra.mxu0 0.0
        %793 = vmatprep.subr.mxu0 0.0
        %794 = vmatpush1.msra.mxu0 0.0
        %795 = vmatprep.subr.mxu0 0.0
        %796 = vmatpush1.msra.mxu0 0.0
        %797 = vmatprep.subr.mxu0 0.0
        %798 = vmatpush1.msra.mxu0 0.0
        %799 = vmatprep.subr.mxu0 0.0
        %800 = vmatpush1.msra.mxu0 0.0
        %801 = vmatprep.mubr.f32.mxu0 0.0
        %802 = vmatmul.mubr.f32.gmra.mrb[0].mxu0 %v735
        %v803 = vpop.f32.mrb[0].mxu0
        %v804 = vadd.f32 0.0, %v803
        %v805 = vpop.f32.mrb[0].mxu0
        %806 = vdwg.mxu0
        %v807 = vld [vmem:[%s6] sm:$0xff]
        %v808 = vld [vmem:[%s6 + $0x8] sm:$0xff]
        %v809 = vld [vmem:[%s6 + $0x10] sm:$0xff]
        %v810 = vld [vmem:[%s6 + $0x18] sm:$0xff]
        %811 = vmatprep.subr.mxu0 0.0
        %812 = vmatpush1.msra.mxu0 %v807
        %813 = vmatprep.subr.mxu0 0.0
        %814 = vmatpush1.msra.mxu0 %v808
        %815 = vmatprep.subr.mxu0 0.0
        %816 = vmatpush1.msra.mxu0 %v809
        %817 = vmatprep.subr.mxu0 0.0
        %818 = vmatpush1.msra.mxu0 %v810
        %819 = vmatprep.subr.mxu0 0.0
        %820 = vmatpush1.msra.mxu0 0.0
        %821 = vmatprep.subr.mxu0 0.0
        %822 = vmatpush1.msra.mxu0 0.0
        %823 = vmatprep.subr.mxu0 0.0
        %824 = vmatpush1.msra.mxu0 0.0
        %825 = vmatprep.subr.mxu0 0.0
        %826 = vmatpush1.msra.mxu0 0.0
        %827 = vmatprep.subr.mxu0 0.0
        %828 = vmatpush1.msra.mxu0 0.0
        %829 = vmatprep.subr.mxu0 0.0
        %830 = vmatpush1.msra.mxu0 0.0
        %831 = vmatprep.subr.mxu0 0.0
        %832 = vmatpush1.msra.mxu0 0.0
        %833 = vmatprep.subr.mxu0 0.0
        %834 = vmatpush1.msra.mxu0 0.0
        %835 = vmatprep.subr.mxu0 0.0
        %836 = vmatpush1.msra.mxu0 0.0
        %837 = vmatprep.subr.mxu0 0.0
        %838 = vmatpush1.msra.mxu0 0.0
        %839 = vmatprep.subr.mxu0 0.0
        %840 = vmatpush1.msra.mxu0 0.0
        %841 = vmatprep.subr.mxu0 0.0
        %842 = vmatpush1.msra.mxu0 0.0
        %843 = vmatprep.subr.mxu0 0.0
        %844 = vmatpush1.msra.mxu0 0.0
        %845 = vmatprep.subr.mxu0 0.0
        %846 = vmatpush1.msra.mxu0 0.0
        %847 = vmatprep.subr.mxu0 0.0
        %848 = vmatpush1.msra.mxu0 0.0
        %849 = vmatprep.subr.mxu0 0.0
        %850 = vmatpush1.msra.mxu0 0.0
        %851 = vmatprep.subr.mxu0 0.0
        %852 = vmatpush1.msra.mxu0 0.0
        %853 = vmatprep.subr.mxu0 0.0
        %854 = vmatpush1.msra.mxu0 0.0
        %855 = vmatprep.subr.mxu0 0.0
        %856 = vmatpush1.msra.mxu0 0.0
        %857 = vmatprep.subr.mxu0 0.0
        %858 = vmatpush1.msra.mxu0 0.0
        %859 = vmatprep.subr.mxu0 0.0
        %860 = vmatpush1.msra.mxu0 0.0
        %861 = vmatprep.subr.mxu0 0.0
        %862 = vmatpush1.msra.mxu0 0.0
        %863 = vmatprep.subr.mxu0 0.0
        %864 = vmatpush1.msra.mxu0 0.0
        %865 = vmatprep.subr.mxu0 0.0
        %866 = vmatpush1.msra.mxu0 0.0
        %867 = vmatprep.subr.mxu0 0.0
        %868 = vmatpush1.msra.mxu0 0.0
        %869 = vmatprep.subr.mxu0 0.0
        %870 = vmatpush1.msra.mxu0 0.0
        %871 = vmatprep.subr.mxu0 0.0
        %872 = vmatpush1.msra.mxu0 0.0
        %873 = vmatprep.subr.mxu0 0.0
        %874 = vmatpush1.msra.mxu0 0.0
        %875 = vmatprep.mubr.f32.mxu0 0.0
        %876 = vmatmul.mubr.f32.gmra.mrb[0].mxu0 %v735
        %v877 = vpop.f32.mrb[0].mxu0
        %v878 = vadd.f32 0.0, %v877
        %v879 = vpop.f32.mrb[0].mxu0
        %880 = vdwg.mxu0
        %v881 = vld [vmem:[%s7] sm:$0xff]
        %v882 = vld [vmem:[%s7 + $0x8] sm:$0xff]
        %v883 = vld [vmem:[%s7 + $0x10] sm:$0xff]
        %v884 = vld [vmem:[%s7 + $0x18] sm:$0xff]
        %885 = vmatprep.subr.mxu0 0.0
        %886 = vmatpush1.msra.mxu0 %v881
        %887 = vmatprep.subr.mxu0 0.0
        %888 = vmatpush1.msra.mxu0 %v882
        %889 = vmatprep.subr.mxu0 0.0
        %890 = vmatpush1.msra.mxu0 %v883
        %891 = vmatprep.subr.mxu0 0.0
        %892 = vmatpush1.msra.mxu0 %v884
        %893 = vmatprep.subr.mxu0 0.0
        %894 = vmatpush1.msra.mxu0 0.0
        %895 = vmatprep.subr.mxu0 0.0
        %896 = vmatpush1.msra.mxu0 0.0
        %897 = vmatprep.subr.mxu0 0.0
        %898 = vmatpush1.msra.mxu0 0.0
        %899 = vmatprep.subr.mxu0 0.0
        %900 = vmatpush1.msra.mxu0 0.0
        %901 = vmatprep.subr.mxu0 0.0
        %902 = vmatpush1.msra.mxu0 0.0
        %903 = vmatprep.subr.mxu0 0.0
        %904 = vmatpush1.msra.mxu0 0.0
        %905 = vmatprep.subr.mxu0 0.0
        %906 = vmatpush1.msra.mxu0 0.0
        %907 = vmatprep.subr.mxu0 0.0
        %908 = vmatpush1.msra.mxu0 0.0
        %909 = vmatprep.subr.mxu0 0.0
        %910 = vmatpush1.msra.mxu0 0.0
        %911 = vmatprep.subr.mxu0 0.0
        %912 = vmatpush1.msra.mxu0 0.0
        %913 = vmatprep.subr.mxu0 0.0
        %914 = vmatpush1.msra.mxu0 0.0
        %915 = vmatprep.subr.mxu0 0.0
        %916 = vmatpush1.msra.mxu0 0.0
        %917 = vmatprep.subr.mxu0 0.0
        %918 = vmatpush1.msra.mxu0 0.0
        %919 = vmatprep.subr.mxu0 0.0
        %920 = vmatpush1.msra.mxu0 0.0
        %921 = vmatprep.subr.mxu0 0.0
        %922 = vmatpush1.msra.mxu0 0.0
        %923 = vmatprep.subr.mxu0 0.0
        %924 = vmatpush1.msra.mxu0 0.0
        %925 = vmatprep.subr.mxu0 0.0
        %926 = vmatpush1.msra.mxu0 0.0
        %927 = vmatprep.subr.mxu0 0.0
        %928 = vmatpush1.msra.mxu0 0.0
        %929 = vmatprep.subr.mxu0 0.0
        %930 = vmatpush1.msra.mxu0 0.0
        %931 = vmatprep.subr.mxu0 0.0
        %932 = vmatpush1.msra.mxu0 0.0
        %933 = vmatprep.subr.mxu0 0.0
        %934 = vmatpush1.msra.mxu0 0.0
        %935 = vmatprep.subr.mxu0 0.0
        %936 = vmatpush1.msra.mxu0 0.0
        %937 = vmatprep.subr.mxu0 0.0
        %938 = vmatpush1.msra.mxu0 0.0
        %939 = vmatprep.subr.mxu0 0.0
        %940 = vmatpush1.msra.mxu0 0.0
        %941 = vmatprep.subr.mxu0 0.0
        %942 = vmatpush1.msra.mxu0 0.0
        %943 = vmatprep.subr.mxu0 0.0
        %944 = vmatpush1.msra.mxu0 0.0
        %945 = vmatprep.subr.mxu0 0.0
        %946 = vmatpush1.msra.mxu0 0.0
        %947 = vmatprep.subr.mxu0 0.0
        %948 = vmatpush1.msra.mxu0 0.0
        %949 = vmatprep.mubr.f32.mxu0 0.0
        %950 = vmatmul.mubr.f32.gmra.mrb[0].mxu0 %v735
        %v951 = vpop.f32.mrb[0].mxu0
        %v952 = vadd.f32 0.0, %v951
        %v953 = vpop.f32.mrb[0].mxu0
        %954 = vdwg.mxu0
        %955 = vxpose.xlu0.b32.start [1/16] %v804, 128
        %956 = vxpose.xlu0.b32.cont [2/16] 0.0, 128
        %957 = vxpose.xlu0.b32.cont [3/16] 0.0, 128
        %958 = vxpose.xlu0.b32.cont [4/16] 0.0, 128
        %959 = vxpose.xlu0.b32.cont [5/16] 0.0, 128
        %960 = vxpose.xlu0.b32.cont [6/16] 0.0, 128
        %961 = vxpose.xlu0.b32.cont [7/16] 0.0, 128
        %962 = vxpose.xlu0.b32.cont [8/16] 0.0, 128
        %963 = vxpose.xlu0.b32.cont [9/16] 0.0, 128
        %964 = vxpose.xlu0.b32.cont [10/16] 0.0, 128
        %965 = vxpose.xlu0.b32.cont [11/16] 0.0, 128
        %966 = vxpose.xlu0.b32.cont [12/16] 0.0, 128
        %967 = vxpose.xlu0.b32.cont [13/16] 0.0, 128
        %968 = vxpose.xlu0.b32.cont [14/16] 0.0, 128
        %969 = vxpose.xlu0.b32.cont [15/16] 0.0, 128
        %970 = vxpose.xlu0.b32.end [16/16] 0.0, 128
        %v971 = vpop.trf.xlu0
        %v972 = vpop.trf.xlu0
        %v973 = vpop.trf.xlu0
        %v974 = vpop.trf.xlu0
        %v975 = vpop.trf.xlu0
        %v976 = vpop.trf.xlu0
        %v977 = vpop.trf.xlu0
        %v978 = vpop.trf.xlu0
        %v979 = vpop.trf.xlu0
        %v980 = vpop.trf.xlu0
        %v981 = vpop.trf.xlu0
        %v982 = vpop.trf.xlu0
        %v983 = vpop.trf.xlu0
        %v984 = vpop.trf.xlu0
        %v985 = vpop.trf.xlu0
        %v986 = vpop.trf.xlu0
        %987 = vxpose.xlu0.b32.start [1/16] %v971, 128
        %988 = vxpose.xlu0.b32.cont [2/16] 0.0, 128
        %989 = vxpose.xlu0.b32.cont [3/16] 0.0, 128
        %990 = vxpose.xlu0.b32.cont [4/16] 0.0, 128
        %991 = vxpose.xlu0.b32.cont [5/16] 0.0, 128
        %992 = vxpose.xlu0.b32.cont [6/16] 0.0, 128
        %993 = vxpose.xlu0.b32.cont [7/16] 0.0, 128
        %994 = vxpose.xlu0.b32.cont [8/16] 0.0, 128
        %995 = vxpose.xlu0.b32.cont [9/16] 0.0, 128
        %996 = vxpose.xlu0.b32.cont [10/16] 0.0, 128
        %997 = vxpose.xlu0.b32.cont [11/16] 0.0, 128
        %998 = vxpose.xlu0.b32.cont [12/16] 0.0, 128
        %999 = vxpose.xlu0.b32.cont [13/16] 0.0, 128
        %1000 = vxpose.xlu0.b32.cont [14/16] 0.0, 128
        %1001 = vxpose.xlu0.b32.cont [15/16] 0.0, 128
        %1002 = vxpose.xlu0.b32.end [16/16] 0.0, 128
        %v1003 = vpop.trf.xlu0
        %v1004 = vpop.trf.xlu0
        %v1005 = vpop.trf.xlu0
        %v1006 = vpop.trf.xlu0
        %v1007 = vpop.trf.xlu0
        %v1008 = vpop.trf.xlu0
        %v1009 = vpop.trf.xlu0
        %v1010 = vpop.trf.xlu0
        %v1011 = vpop.trf.xlu0
        %v1012 = vpop.trf.xlu0
        %v1013 = vpop.trf.xlu0
        %v1014 = vpop.trf.xlu0
        %v1015 = vpop.trf.xlu0
        %v1016 = vpop.trf.xlu0
        %v1017 = vpop.trf.xlu0
        %v1018 = vpop.trf.xlu0
        %1019 = vxpose.xlu0.b32.start [1/16] %v972, 128
        %1020 = vxpose.xlu0.b32.cont [2/16] 0.0, 128
        %1021 = vxpose.xlu0.b32.cont [3/16] 0.0, 128
        %1022 = vxpose.xlu0.b32.cont [4/16] 0.0, 128
        %1023 = vxpose.xlu0.b32.cont [5/16] 0.0, 128
        %1024 = vxpose.xlu0.b32.cont [6/16] 0.0, 128
        %1025 = vxpose.xlu0.b32.cont [7/16] 0.0, 128
        %1026 = vxpose.xlu0.b32.cont [8/16] 0.0, 128
        %1027 = vxpose.xlu0.b32.cont [9/16] 0.0, 128
        %1028 = vxpose.xlu0.b32.cont [10/16] 0.0, 128
        %1029 = vxpose.xlu0.b32.cont [11/16] 0.0, 128
        %1030 = vxpose.xlu0.b32.cont [12/16] 0.0, 128
        %1031 = vxpose.xlu0.b32.cont [13/16] 0.0, 128
        %1032 = vxpose.xlu0.b32.cont [14/16] 0.0, 128
        %1033 = vxpose.xlu0.b32.cont [15/16] 0.0, 128
        %1034 = vxpose.xlu0.b32.end [16/16] 0.0, 128
        %v1035 = vpop.trf.xlu0
        %v1036 = vpop.trf.xlu0
        %v1037 = vpop.trf.xlu0
        %v1038 = vpop.trf.xlu0
        %v1039 = vpop.trf.xlu0
        %v1040 = vpop.trf.xlu0
        %v1041 = vpop.trf.xlu0
        %v1042 = vpop.trf.xlu0
        %v1043 = vpop.trf.xlu0
        %v1044 = vpop.trf.xlu0
        %v1045 = vpop.trf.xlu0
        %v1046 = vpop.trf.xlu0
        %v1047 = vpop.trf.xlu0
        %v1048 = vpop.trf.xlu0
        %v1049 = vpop.trf.xlu0
        %v1050 = vpop.trf.xlu0
        %1051 = vxpose.xlu0.b32.start [1/16] %v973, 128
        %1052 = vxpose.xlu0.b32.cont [2/16] 0.0, 128
        %1053 = vxpose.xlu0.b32.cont [3/16] 0.0, 128
        %1054 = vxpose.xlu0.b32.cont [4/16] 0.0, 128
        %1055 = vxpose.xlu0.b32.cont [5/16] 0.0, 128
        %1056 = vxpose.xlu0.b32.cont [6/16] 0.0, 128
        %1057 = vxpose.xlu0.b32.cont [7/16] 0.0, 128
        %1058 = vxpose.xlu0.b32.cont [8/16] 0.0, 128
        %1059 = vxpose.xlu0.b32.cont [9/16] 0.0, 128
        %1060 = vxpose.xlu0.b32.cont [10/16] 0.0, 128
        %1061 = vxpose.xlu0.b32.cont [11/16] 0.0, 128
        %1062 = vxpose.xlu0.b32.cont [12/16] 0.0, 128
        %1063 = vxpose.xlu0.b32.cont [13/16] 0.0, 128
        %1064 = vxpose.xlu0.b32.cont [14/16] 0.0, 128
        %1065 = vxpose.xlu0.b32.cont [15/16] 0.0, 128
        %1066 = vxpose.xlu0.b32.end [16/16] 0.0, 128
        %v1067 = vpop.trf.xlu0
        %v1068 = vpop.trf.xlu0
        %v1069 = vpop.trf.xlu0
        %v1070 = vpop.trf.xlu0
        %v1071 = vpop.trf.xlu0
        %v1072 = vpop.trf.xlu0
        %v1073 = vpop.trf.xlu0
        %v1074 = vpop.trf.xlu0
        %v1075 = vpop.trf.xlu0
        %v1076 = vpop.trf.xlu0
        %v1077 = vpop.trf.xlu0
        %v1078 = vpop.trf.xlu0
        %v1079 = vpop.trf.xlu0
        %v1080 = vpop.trf.xlu0
        %v1081 = vpop.trf.xlu0
        %v1082 = vpop.trf.xlu0
        %1083 = vxpose.xlu0.b32.start [1/16] %v974, 128
        %1084 = vxpose.xlu0.b32.cont [2/16] 0.0, 128
        %1085 = vxpose.xlu0.b32.cont [3/16] 0.0, 128
        %1086 = vxpose.xlu0.b32.cont [4/16] 0.0, 128
        %1087 = vxpose.xlu0.b32.cont [5/16] 0.0, 128
        %1088 = vxpose.xlu0.b32.cont [6/16] 0.0, 128
        %1089 = vxpose.xlu0.b32.cont [7/16] 0.0, 128
        %1090 = vxpose.xlu0.b32.cont [8/16] 0.0, 128
        %1091 = vxpose.xlu0.b32.cont [9/16] 0.0, 128
        %1092 = vxpose.xlu0.b32.cont [10/16] 0.0, 128
        %1093 = vxpose.xlu0.b32.cont [11/16] 0.0, 128
        %1094 = vxpose.xlu0.b32.cont [12/16] 0.0, 128
        %1095 = vxpose.xlu0.b32.cont [13/16] 0.0, 128
        %1096 = vxpose.xlu0.b32.cont [14/16] 0.0, 128
        %1097 = vxpose.xlu0.b32.cont [15/16] 0.0, 128
        %1098 = vxpose.xlu0.b32.end [16/16] 0.0, 128
        %v1099 = vpop.trf.xlu0
        %v1100 = vpop.trf.xlu0
        %v1101 = vpop.trf.xlu0
        %v1102 = vpop.trf.xlu0
        %v1103 = vpop.trf.xlu0
        %v1104 = vpop.trf.xlu0
        %v1105 = vpop.trf.xlu0
        %v1106 = vpop.trf.xlu0
        %v1107 = vpop.trf.xlu0
        %v1108 = vpop.trf.xlu0
        %v1109 = vpop.trf.xlu0
        %v1110 = vpop.trf.xlu0
        %v1111 = vpop.trf.xlu0
        %v1112 = vpop.trf.xlu0
        %v1113 = vpop.trf.xlu0
        %v1114 = vpop.trf.xlu0
        %1115 = vxpose.xlu0.b32.start [1/16] %v878, 128
        %1116 = vxpose.xlu0.b32.cont [2/16] 0.0, 128
        %1117 = vxpose.xlu0.b32.cont [3/16] 0.0, 128
        %1118 = vxpose.xlu0.b32.cont [4/16] 0.0, 128
        %1119 = vxpose.xlu0.b32.cont [5/16] 0.0, 128
        %1120 = vxpose.xlu0.b32.cont [6/16] 0.0, 128
        %1121 = vxpose.xlu0.b32.cont [7/16] 0.0, 128
        %1122 = vxpose.xlu0.b32.cont [8/16] 0.0, 128
        %1123 = vxpose.xlu0.b32.cont [9/16] 0.0, 128
        %1124 = vxpose.xlu0.b32.cont [10/16] 0.0, 128
        %1125 = vxpose.xlu0.b32.cont [11/16] 0.0, 128
        %1126 = vxpose.xlu0.b32.cont [12/16] 0.0, 128
        %1127 = vxpose.xlu0.b32.cont [13/16] 0.0, 128
        %1128 = vxpose.xlu0.b32.cont [14/16] 0.0, 128
        %1129 = vxpose.xlu0.b32.cont [15/16] 0.0, 128
        %1130 = vxpose.xlu0.b32.end [16/16] 0.0, 128
        %v1131 = vpop.trf.xlu0
        %v1132 = vpop.trf.xlu0
        %v1133 = vpop.trf.xlu0
        %v1134 = vpop.trf.xlu0
        %v1135 = vpop.trf.xlu0
        %v1136 = vpop.trf.xlu0
        %v1137 = vpop.trf.xlu0
        %v1138 = vpop.trf.xlu0
        %v1139 = vpop.trf.xlu0
        %v1140 = vpop.trf.xlu0
        %v1141 = vpop.trf.xlu0
        %v1142 = vpop.trf.xlu0
        %v1143 = vpop.trf.xlu0
        %v1144 = vpop.trf.xlu0
        %v1145 = vpop.trf.xlu0
        %v1146 = vpop.trf.xlu0
        %1147 = vxpose.xlu0.b32.start [1/16] %v952, 128
        %1148 = vxpose.xlu0.b32.cont [2/16] 0.0, 128
        %1149 = vxpose.xlu0.b32.cont [3/16] 0.0, 128
        %1150 = vxpose.xlu0.b32.cont [4/16] 0.0, 128
        %1151 = vxpose.xlu0.b32.cont [5/16] 0.0, 128
        %1152 = vxpose.xlu0.b32.cont [6/16] 0.0, 128
        %1153 = vxpose.xlu0.b32.cont [7/16] 0.0, 128
        %1154 = vxpose.xlu0.b32.cont [8/16] 0.0, 128
        %1155 = vxpose.xlu0.b32.cont [9/16] 0.0, 128
        %1156 = vxpose.xlu0.b32.cont [10/16] 0.0, 128
        %1157 = vxpose.xlu0.b32.cont [11/16] 0.0, 128
        %1158 = vxpose.xlu0.b32.cont [12/16] 0.0, 128
        %1159 = vxpose.xlu0.b32.cont [13/16] 0.0, 128
        %1160 = vxpose.xlu0.b32.cont [14/16] 0.0, 128
        %1161 = vxpose.xlu0.b32.cont [15/16] 0.0, 128
        %1162 = vxpose.xlu0.b32.end [16/16] 0.0, 128
        %v1163 = vpop.trf.xlu0
        %v1164 = vpop.trf.xlu0
        %v1165 = vpop.trf.xlu0
        %v1166 = vpop.trf.xlu0
        %v1167 = vpop.trf.xlu0
        %v1168 = vpop.trf.xlu0
        %v1169 = vpop.trf.xlu0
        %v1170 = vpop.trf.xlu0
        %v1171 = vpop.trf.xlu0
        %v1172 = vpop.trf.xlu0
        %v1173 = vpop.trf.xlu0
        %v1174 = vpop.trf.xlu0
        %v1175 = vpop.trf.xlu0
        %v1176 = vpop.trf.xlu0
        %v1177 = vpop.trf.xlu0
        %v1178 = vpop.trf.xlu0
        %vm1179 = vcmask 64512
        %v1181 = vsel %vm1179, %v1003, 0
        %1183 = vmatprep.subr.mxu0 0.0
        %1184 = vmatpush1.msra.mxu0 %v1131
        %1185 = vmatprep.subr.mxu0 0.0
        %1186 = vmatpush1.msra.mxu0 0.0
        %1187 = vmatprep.subr.mxu0 0.0
        %1188 = vmatpush1.msra.mxu0 0.0
        %1189 = vmatprep.subr.mxu0 0.0
        %1190 = vmatpush1.msra.mxu0 0.0
        %1191 = vmatprep.subr.mxu0 0.0
        %1192 = vmatpush1.msra.mxu0 0.0
        %1193 = vmatprep.subr.mxu0 0.0
        %1194 = vmatpush1.msra.mxu0 0.0
        %1195 = vmatprep.subr.mxu0 0.0
        %1196 = vmatpush1.msra.mxu0 0.0
        %1197 = vmatprep.subr.mxu0 0.0
        %1198 = vmatpush1.msra.mxu0 0.0
        %1199 = vmatprep.subr.mxu0 0.0
        %1200 = vmatpush1.msra.mxu0 0.0
        %1201 = vmatprep.subr.mxu0 0.0
        %1202 = vmatpush1.msra.mxu0 0.0
        %1203 = vmatprep.subr.mxu0 0.0
        %1204 = vmatpush1.msra.mxu0 0.0
        %1205 = vmatprep.subr.mxu0 0.0
        %1206 = vmatpush1.msra.mxu0 0.0
        %1207 = vmatprep.subr.mxu0 0.0
        %1208 = vmatpush1.msra.mxu0 0.0
        %1209 = vmatprep.subr.mxu0 0.0
        %1210 = vmatpush1.msra.mxu0 0.0
        %1211 = vmatprep.subr.mxu0 0.0
        %1212 = vmatpush1.msra.mxu0 0.0
        %1213 = vmatprep.subr.mxu0 0.0
        %1214 = vmatpush1.msra.mxu0 0.0
        %1215 = vmatprep.subr.mxu0 0.0
        %1216 = vmatpush1.msra.mxu0 0.0
        %1217 = vmatprep.subr.mxu0 0.0
        %1218 = vmatpush1.msra.mxu0 0.0
        %1219 = vmatprep.subr.mxu0 0.0
        %1220 = vmatpush1.msra.mxu0 0.0
        %1221 = vmatprep.subr.mxu0 0.0
        %1222 = vmatpush1.msra.mxu0 0.0
        %1223 = vmatprep.subr.mxu0 0.0
        %1224 = vmatpush1.msra.mxu0 0.0
        %1225 = vmatprep.subr.mxu0 0.0
        %1226 = vmatpush1.msra.mxu0 0.0
        %1227 = vmatprep.subr.mxu0 0.0
        %1228 = vmatpush1.msra.mxu0 0.0
        %1229 = vmatprep.subr.mxu0 0.0
        %1230 = vmatpush1.msra.mxu0 0.0
        %1231 = vmatprep.subr.mxu0 0.0
        %1232 = vmatpush1.msra.mxu0 0.0
        %1233 = vmatprep.subr.mxu0 0.0
        %1234 = vmatpush1.msra.mxu0 0.0
        %1235 = vmatprep.subr.mxu0 0.0
        %1236 = vmatpush1.msra.mxu0 0.0
        %1237 = vmatprep.subr.mxu0 0.0
        %1238 = vmatpush1.msra.mxu0 0.0
        %1239 = vmatprep.subr.mxu0 0.0
        %1240 = vmatpush1.msra.mxu0 0.0
        %1241 = vmatprep.subr.mxu0 0.0
        %1242 = vmatpush1.msra.mxu0 0.0
        %1243 = vmatprep.subr.mxu0 0.0
        %1244 = vmatpush1.msra.mxu0 0.0
        %1245 = vmatprep.subr.mxu0 0.0
        %1246 = vmatpush1.msra.mxu0 0.0
        %1247 = vmatprep.mubr.f32.mxu0 0.0
        %1248 = vmatmul.mubr.f32.gmra.mrb[0].mxu0 %v1181
        %v1249 = vpop.f32.mrb[0].mxu0
        %v1250 = vadd.f32 0.0, %v1249
        %v1251 = vpop.f32.mrb[0].mxu0
        %1252 = vdwg.mxu0
        %v1254 = vsel %vm1179, %v1035, 0
        %1256 = vmatprep.subr.mxu0 0.0
        %1257 = vmatpush1.msra.mxu0 %v1132
        %1258 = vmatprep.subr.mxu0 0.0
        %1259 = vmatpush1.msra.mxu0 0.0
        %1260 = vmatprep.subr.mxu0 0.0
        %1261 = vmatpush1.msra.mxu0 0.0
        %1262 = vmatprep.subr.mxu0 0.0
        %1263 = vmatpush1.msra.mxu0 0.0
        %1264 = vmatprep.subr.mxu0 0.0
        %1265 = vmatpush1.msra.mxu0 0.0
        %1266 = vmatprep.subr.mxu0 0.0
        %1267 = vmatpush1.msra.mxu0 0.0
        %1268 = vmatprep.subr.mxu0 0.0
        %1269 = vmatpush1.msra.mxu0 0.0
        %1270 = vmatprep.subr.mxu0 0.0
        %1271 = vmatpush1.msra.mxu0 0.0
        %1272 = vmatprep.subr.mxu0 0.0
        %1273 = vmatpush1.msra.mxu0 0.0
        %1274 = vmatprep.subr.mxu0 0.0
        %1275 = vmatpush1.msra.mxu0 0.0
        %1276 = vmatprep.subr.mxu0 0.0
        %1277 = vmatpush1.msra.mxu0 0.0
        %1278 = vmatprep.subr.mxu0 0.0
        %1279 = vmatpush1.msra.mxu0 0.0
        %1280 = vmatprep.subr.mxu0 0.0
        %1281 = vmatpush1.msra.mxu0 0.0
        %1282 = vmatprep.subr.mxu0 0.0
        %1283 = vmatpush1.msra.mxu0 0.0
        %1284 = vmatprep.subr.mxu0 0.0
        %1285 = vmatpush1.msra.mxu0 0.0
        %1286 = vmatprep.subr.mxu0 0.0
        %1287 = vmatpush1.msra.mxu0 0.0
        %1288 = vmatprep.subr.mxu0 0.0
        %1289 = vmatpush1.msra.mxu0 0.0
        %1290 = vmatprep.subr.mxu0 0.0
        %1291 = vmatpush1.msra.mxu0 0.0
        %1292 = vmatprep.subr.mxu0 0.0
        %1293 = vmatpush1.msra.mxu0 0.0
        %1294 = vmatprep.subr.mxu0 0.0
        %1295 = vmatpush1.msra.mxu0 0.0
        %1296 = vmatprep.subr.mxu0 0.0
        %1297 = vmatpush1.msra.mxu0 0.0
        %1298 = vmatprep.subr.mxu0 0.0
        %1299 = vmatpush1.msra.mxu0 0.0
        %1300 = vmatprep.subr.mxu0 0.0
        %1301 = vmatpush1.msra.mxu0 0.0
        %1302 = vmatprep.subr.mxu0 0.0
        %1303 = vmatpush1.msra.mxu0 0.0
        %1304 = vmatprep.subr.mxu0 0.0
        %1305 = vmatpush1.msra.mxu0 0.0
        %1306 = vmatprep.subr.mxu0 0.0
        %1307 = vmatpush1.msra.mxu0 0.0
        %1308 = vmatprep.subr.mxu0 0.0
        %1309 = vmatpush1.msra.mxu0 0.0
        %1310 = vmatprep.subr.mxu0 0.0
        %1311 = vmatpush1.msra.mxu0 0.0
        %1312 = vmatprep.subr.mxu0 0.0
        %1313 = vmatpush1.msra.mxu0 0.0
        %1314 = vmatprep.subr.mxu0 0.0
        %1315 = vmatpush1.msra.mxu0 0.0
        %1316 = vmatprep.subr.mxu0 0.0
        %1317 = vmatpush1.msra.mxu0 0.0
        %1318 = vmatprep.subr.mxu0 0.0
        %1319 = vmatpush1.msra.mxu0 0.0
        %1320 = vmatprep.mubr.f32.mxu0 0.0
        %1321 = vmatmul.mubr.f32.gmra.mrb[0].mxu0 %v1254
        %v1322 = vpop.f32.mrb[0].mxu0
        %v1323 = vadd.f32 0.0, %v1322
        %v1324 = vpop.f32.mrb[0].mxu0
        %1325 = vdwg.mxu0
        %v1327 = vsel %vm1179, %v1067, 0
        %1329 = vmatprep.subr.mxu0 0.0
        %1330 = vmatpush1.msra.mxu0 %v1133
        %1331 = vmatprep.subr.mxu0 0.0
        %1332 = vmatpush1.msra.mxu0 0.0
        %1333 = vmatprep.subr.mxu0 0.0
        %1334 = vmatpush1.msra.mxu0 0.0
        %1335 = vmatprep.subr.mxu0 0.0
        %1336 = vmatpush1.msra.mxu0 0.0
        %1337 = vmatprep.subr.mxu0 0.0
        %1338 = vmatpush1.msra.mxu0 0.0
        %1339 = vmatprep.subr.mxu0 0.0
        %1340 = vmatpush1.msra.mxu0 0.0
        %1341 = vmatprep.subr.mxu0 0.0
        %1342 = vmatpush1.msra.mxu0 0.0
        %1343 = vmatprep.subr.mxu0 0.0
        %1344 = vmatpush1.msra.mxu0 0.0
        %1345 = vmatprep.subr.mxu0 0.0
        %1346 = vmatpush1.msra.mxu0 0.0
        %1347 = vmatprep.subr.mxu0 0.0
        %1348 = vmatpush1.msra.mxu0 0.0
        %1349 = vmatprep.subr.mxu0 0.0
        %1350 = vmatpush1.msra.mxu0 0.0
        %1351 = vmatprep.subr.mxu0 0.0
        %1352 = vmatpush1.msra.mxu0 0.0
        %1353 = vmatprep.subr.mxu0 0.0
        %1354 = vmatpush1.msra.mxu0 0.0
        %1355 = vmatprep.subr.mxu0 0.0
        %1356 = vmatpush1.msra.mxu0 0.0
        %1357 = vmatprep.subr.mxu0 0.0
        %1358 = vmatpush1.msra.mxu0 0.0
        %1359 = vmatprep.subr.mxu0 0.0
        %1360 = vmatpush1.msra.mxu0 0.0
        %1361 = vmatprep.subr.mxu0 0.0
        %1362 = vmatpush1.msra.mxu0 0.0
        %1363 = vmatprep.subr.mxu0 0.0
        %1364 = vmatpush1.msra.mxu0 0.0
        %1365 = vmatprep.subr.mxu0 0.0
        %1366 = vmatpush1.msra.mxu0 0.0
        %1367 = vmatprep.subr.mxu0 0.0
        %1368 = vmatpush1.msra.mxu0 0.0
        %1369 = vmatprep.subr.mxu0 0.0
        %1370 = vmatpush1.msra.mxu0 0.0
        %1371 = vmatprep.subr.mxu0 0.0
        %1372 = vmatpush1.msra.mxu0 0.0
        %1373 = vmatprep.subr.mxu0 0.0
        %1374 = vmatpush1.msra.mxu0 0.0
        %1375 = vmatprep.subr.mxu0 0.0
        %1376 = vmatpush1.msra.mxu0 0.0
        %1377 = vmatprep.subr.mxu0 0.0
        %1378 = vmatpush1.msra.mxu0 0.0
        %1379 = vmatprep.subr.mxu0 0.0
        %1380 = vmatpush1.msra.mxu0 0.0
        %1381 = vmatprep.subr.mxu0 0.0
        %1382 = vmatpush1.msra.mxu0 0.0
        %1383 = vmatprep.subr.mxu0 0.0
        %1384 = vmatpush1.msra.mxu0 0.0
        %1385 = vmatprep.subr.mxu0 0.0
        %1386 = vmatpush1.msra.mxu0 0.0
        %1387 = vmatprep.subr.mxu0 0.0
        %1388 = vmatpush1.msra.mxu0 0.0
        %1389 = vmatprep.subr.mxu0 0.0
        %1390 = vmatpush1.msra.mxu0 0.0
        %1391 = vmatprep.subr.mxu0 0.0
        %1392 = vmatpush1.msra.mxu0 0.0
        %1393 = vmatprep.mubr.f32.mxu0 0.0
        %1394 = vmatmul.mubr.f32.gmra.mrb[0].mxu0 %v1327
        %v1395 = vpop.f32.mrb[0].mxu0
        %v1396 = vadd.f32 0.0, %v1395
        %v1397 = vpop.f32.mrb[0].mxu0
        %1398 = vdwg.mxu0
        %v1400 = vsel %vm1179, %v1099, 0
        %1402 = vmatprep.subr.mxu0 0.0
        %1403 = vmatpush1.msra.mxu0 %v1134
        %1404 = vmatprep.subr.mxu0 0.0
        %1405 = vmatpush1.msra.mxu0 0.0
        %1406 = vmatprep.subr.mxu0 0.0
        %1407 = vmatpush1.msra.mxu0 0.0
        %1408 = vmatprep.subr.mxu0 0.0
        %1409 = vmatpush1.msra.mxu0 0.0
        %1410 = vmatprep.subr.mxu0 0.0
        %1411 = vmatpush1.msra.mxu0 0.0
        %1412 = vmatprep.subr.mxu0 0.0
        %1413 = vmatpush1.msra.mxu0 0.0
        %1414 = vmatprep.subr.mxu0 0.0
        %1415 = vmatpush1.msra.mxu0 0.0
        %1416 = vmatprep.subr.mxu0 0.0
        %1417 = vmatpush1.msra.mxu0 0.0
        %1418 = vmatprep.subr.mxu0 0.0
        %1419 = vmatpush1.msra.mxu0 0.0
        %1420 = vmatprep.subr.mxu0 0.0
        %1421 = vmatpush1.msra.mxu0 0.0
        %1422 = vmatprep.subr.mxu0 0.0
        %1423 = vmatpush1.msra.mxu0 0.0
        %1424 = vmatprep.subr.mxu0 0.0
        %1425 = vmatpush1.msra.mxu0 0.0
        %1426 = vmatprep.subr.mxu0 0.0
        %1427 = vmatpush1.msra.mxu0 0.0
        %1428 = vmatprep.subr.mxu0 0.0
        %1429 = vmatpush1.msra.mxu0 0.0
        %1430 = vmatprep.subr.mxu0 0.0
        %1431 = vmatpush1.msra.mxu0 0.0
        %1432 = vmatprep.subr.mxu0 0.0
        %1433 = vmatpush1.msra.mxu0 0.0
        %1434 = vmatprep.subr.mxu0 0.0
        %1435 = vmatpush1.msra.mxu0 0.0
        %1436 = vmatprep.subr.mxu0 0.0
        %1437 = vmatpush1.msra.mxu0 0.0
        %1438 = vmatprep.subr.mxu0 0.0
        %1439 = vmatpush1.msra.mxu0 0.0
        %1440 = vmatprep.subr.mxu0 0.0
        %1441 = vmatpush1.msra.mxu0 0.0
        %1442 = vmatprep.subr.mxu0 0.0
        %1443 = vmatpush1.msra.mxu0 0.0
        %1444 = vmatprep.subr.mxu0 0.0
        %1445 = vmatpush1.msra.mxu0 0.0
        %1446 = vmatprep.subr.mxu0 0.0
        %1447 = vmatpush1.msra.mxu0 0.0
        %1448 = vmatprep.subr.mxu0 0.0
        %1449 = vmatpush1.msra.mxu0 0.0
        %1450 = vmatprep.subr.mxu0 0.0
        %1451 = vmatpush1.msra.mxu0 0.0
        %1452 = vmatprep.subr.mxu0 0.0
        %1453 = vmatpush1.msra.mxu0 0.0
        %1454 = vmatprep.subr.mxu0 0.0
        %1455 = vmatpush1.msra.mxu0 0.0
        %1456 = vmatprep.subr.mxu0 0.0
        %1457 = vmatpush1.msra.mxu0 0.0
        %1458 = vmatprep.subr.mxu0 0.0
        %1459 = vmatpush1.msra.mxu0 0.0
        %1460 = vmatprep.subr.mxu0 0.0
        %1461 = vmatpush1.msra.mxu0 0.0
        %1462 = vmatprep.subr.mxu0 0.0
        %1463 = vmatpush1.msra.mxu0 0.0
        %1464 = vmatprep.subr.mxu0 0.0
        %1465 = vmatpush1.msra.mxu0 0.0
        %1466 = vmatprep.mubr.f32.mxu0 0.0
        %1467 = vmatmul.mubr.f32.gmra.mrb[0].mxu0 %v1400
        %v1468 = vpop.f32.mrb[0].mxu0
        %v1469 = vadd.f32 0.0, %v1468
        %v1470 = vpop.f32.mrb[0].mxu0
        %1471 = vdwg.mxu0
        %v1472 = vmul.f32 %v1250, 0.35355338
        %v1473 = vmul.f32 %v1323, 0.35355338
        %v1474 = vmul.f32 %v1396, 0.35355338
        %v1475 = vmul.f32 %v1469, 0.35355338
        %v1476 = vadd.f32 %v1472, %v702
        %v1477 = vadd.f32 %v1473, %v702
        %v1478 = vadd.f32 %v1474, %v702
        %v1479 = vadd.f32 %v1475, %v702
        %v1480 = vsel %vm1179, %v1476, -inf
        %1481 = vmax.xlane.f32.xlu0 %v1480
        %v1482 = vpop.xlane.xlu0 %1481
        %v1483 = vsel %vm1179, %v1477, -inf
        %1484 = vmax.xlane.f32.xlu0 %v1483
        %v1485 = vpop.xlane.xlu0 %1484
        %v1486 = vsel %vm1179, %v1478, -inf
        %1487 = vmax.xlane.f32.xlu0 %v1486
        %v1488 = vpop.xlane.xlu0 %1487
        %v1489 = vsel %vm1179, %v1479, -inf
        %1490 = vmax.xlane.f32.xlu0 %v1489
        %v1491 = vpop.xlane.xlu0 %1490
        %v1492 = vsub.f32 %v1476, %v1482
        %v1493 = vsub.f32 %v1477, %v1485
        %v1494 = vsub.f32 %v1478, %v1488
        %v1495 = vsub.f32 %v1479, %v1491
        %v1496 = vmul.f32 %v1492, 1.442695
        %v1497 = vpow.pop %v1496
        %v1498 = vmul.f32 %v1493, 1.442695
        %v1499 = vpow.pop %v1498
        %v1500 = vmul.f32 %v1494, 1.442695
        %v1501 = vpow.pop %v1500
        %v1502 = vmul.f32 %v1495, 1.442695
        %v1503 = vpow.pop %v1502
        %v1504 = vsel %vm1179, %v1497, 0.0
        %1505 = vadd.xlane.f32.xlu0 %v1504
        %v1506 = vpop.xlane.xlu0 %1505
        %v1507 = vsel %vm1179, %v1499, 0.0
        %1508 = vadd.xlane.f32.xlu0 %v1507
        %v1509 = vpop.xlane.xlu0 %1508
        %v1510 = vsel %vm1179, %v1501, 0.0
        %1511 = vadd.xlane.f32.xlu0 %v1510
        %v1512 = vpop.xlane.xlu0 %1511
        %v1513 = vsel %vm1179, %v1503, 0.0
        %1514 = vadd.xlane.f32.xlu0 %v1513
        %v1515 = vpop.xlane.xlu0 %1514
        %v1516 = vrcp.pop %v1506
        %v1517 = vmul.f32 %v1497, %v1516
        %v1518 = vrcp.pop %v1509
        %v1519 = vmul.f32 %v1499, %v1518
        %v1520 = vrcp.pop %v1512
        %v1521 = vmul.f32 %v1501, %v1520
        %v1522 = vrcp.pop %v1515
        %v1523 = vmul.f32 %v1503, %v1522
        %v1525 = vsel %vm1179, %v1163, 0
        %v1528 = vsel %vm1179, %v1517, 0
        %1530 = vmatprep.subr.mxu0 0.0
        %1531 = vmatpush1.xpose.msra.mxu0 %v1528
        %1532 = vmatprep.subr.mxu0 0.0
        %1533 = vmatpush1.xpose.msra.mxu0 0.0
        %1534 = vmatprep.subr.mxu0 0.0
        %1535 = vmatpush1.xpose.msra.mxu0 0.0
        %1536 = vmatprep.subr.mxu0 0.0
        %1537 = vmatpush1.xpose.msra.mxu0 0.0
        %1538 = vmatprep.subr.mxu0 0.0
        %1539 = vmatpush1.xpose.msra.mxu0 0.0
        %1540 = vmatprep.subr.mxu0 0.0
        %1541 = vmatpush1.xpose.msra.mxu0 0.0
        %1542 = vmatprep.subr.mxu0 0.0
        %1543 = vmatpush1.xpose.msra.mxu0 0.0
        %1544 = vmatprep.subr.mxu0 0.0
        %1545 = vmatpush1.xpose.msra.mxu0 0.0
        %1546 = vmatprep.subr.mxu0 0.0
        %1547 = vmatpush1.xpose.msra.mxu0 0.0
        %1548 = vmatprep.subr.mxu0 0.0
        %1549 = vmatpush1.xpose.msra.mxu0 0.0
        %1550 = vmatprep.subr.mxu0 0.0
        %1551 = vmatpush1.xpose.msra.mxu0 0.0
        %1552 = vmatprep.subr.mxu0 0.0
        %1553 = vmatpush1.xpose.msra.mxu0 0.0
        %1554 = vmatprep.subr.mxu0 0.0
        %1555 = vmatpush1.xpose.msra.mxu0 0.0
        %1556 = vmatprep.subr.mxu0 0.0
        %1557 = vmatpush1.xpose.msra.mxu0 0.0
        %1558 = vmatprep.subr.mxu0 0.0
        %1559 = vmatpush1.xpose.msra.mxu0 0.0
        %1560 = vmatprep.subr.mxu0 0.0
        %1561 = vmatpush1.xpose.msra.mxu0 0.0
        %1562 = vmatprep.subr.mxu0 0.0
        %1563 = vmatpush1.xpose.msra.mxu0 0.0
        %1564 = vmatprep.subr.mxu0 0.0
        %1565 = vmatpush1.xpose.msra.mxu0 0.0
        %1566 = vmatprep.subr.mxu0 0.0
        %1567 = vmatpush1.xpose.msra.mxu0 0.0
        %1568 = vmatprep.subr.mxu0 0.0
        %1569 = vmatpush1.xpose.msra.mxu0 0.0
        %1570 = vmatprep.subr.mxu0 0.0
        %1571 = vmatpush1.xpose.msra.mxu0 0.0
        %1572 = vmatprep.subr.mxu0 0.0
        %1573 = vmatpush1.xpose.msra.mxu0 0.0
        %1574 = vmatprep.subr.mxu0 0.0
        %1575 = vmatpush1.xpose.msra.mxu0 0.0
        %1576 = vmatprep.subr.mxu0 0.0
        %1577 = vmatpush1.xpose.msra.mxu0 0.0
        %1578 = vmatprep.subr.mxu0 0.0
        %1579 = vmatpush1.xpose.msra.mxu0 0.0
        %1580 = vmatprep.subr.mxu0 0.0
        %1581 = vmatpush1.xpose.msra.mxu0 0.0
        %1582 = vmatprep.subr.mxu0 0.0
        %1583 = vmatpush1.xpose.msra.mxu0 0.0
        %1584 = vmatprep.subr.mxu0 0.0
        %1585 = vmatpush1.xpose.msra.mxu0 0.0
        %1586 = vmatprep.subr.mxu0 0.0
        %1587 = vmatpush1.xpose.msra.mxu0 0.0
        %1588 = vmatprep.subr.mxu0 0.0
        %1589 = vmatpush1.xpose.msra.mxu0 0.0
        %1590 = vmatprep.subr.mxu0 0.0
        %1591 = vmatpush1.xpose.msra.mxu0 0.0
        %1592 = vmatprep.subr.mxu0 0.0
        %1593 = vmatpush1.xpose.msra.mxu0 0.0
        %1594 = vmatprep.mubr.f32.mxu0 0.0
        %1595 = vmatmul.mubr.f32.gmra.mrb[0].mxu0 %v1525
        %v1596 = vpop.f32.mrb[0].mxu0
        %v1597 = vadd.f32 0.0, %v1596
        %v1598 = vpop.f32.mrb[0].mxu0
        %1599 = vdwg.mxu0
        %v1601 = vsel %vm1179, %v1164, 0
        %v1604 = vsel %vm1179, %v1519, 0
        %1606 = vmatprep.subr.mxu0 0.0
        %1607 = vmatpush1.xpose.msra.mxu0 %v1604
        %1608 = vmatprep.subr.mxu0 0.0
        %1609 = vmatpush1.xpose.msra.mxu0 0.0
        %1610 = vmatprep.subr.mxu0 0.0
        %1611 = vmatpush1.xpose.msra.mxu0 0.0
        %1612 = vmatprep.subr.mxu0 0.0
        %1613 = vmatpush1.xpose.msra.mxu0 0.0
        %1614 = vmatprep.subr.mxu0 0.0
        %1615 = vmatpush1.xpose.msra.mxu0 0.0
        %1616 = vmatprep.subr.mxu0 0.0
        %1617 = vmatpush1.xpose.msra.mxu0 0.0
        %1618 = vmatprep.subr.mxu0 0.0
        %1619 = vmatpush1.xpose.msra.mxu0 0.0
        %1620 = vmatprep.subr.mxu0 0.0
        %1621 = vmatpush1.xpose.msra.mxu0 0.0
        %1622 = vmatprep.subr.mxu0 0.0
        %1623 = vmatpush1.xpose.msra.mxu0 0.0
        %1624 = vmatprep.subr.mxu0 0.0
        %1625 = vmatpush1.xpose.msra.mxu0 0.0
        %1626 = vmatprep.subr.mxu0 0.0
        %1627 = vmatpush1.xpose.msra.mxu0 0.0
        %1628 = vmatprep.subr.mxu0 0.0
        %1629 = vmatpush1.xpose.msra.mxu0 0.0
        %1630 = vmatprep.subr.mxu0 0.0
        %1631 = vmatpush1.xpose.msra.mxu0 0.0
        %1632 = vmatprep.subr.mxu0 0.0
        %1633 = vmatpush1.xpose.msra.mxu0 0.0
        %1634 = vmatprep.subr.mxu0 0.0
        %1635 = vmatpush1.xpose.msra.mxu0 0.0
        %1636 = vmatprep.subr.mxu0 0.0
        %1637 = vmatpush1.xpose.msra.mxu0 0.0
        %1638 = vmatprep.subr.mxu0 0.0
        %1639 = vmatpush1.xpose.msra.mxu0 0.0
        %1640 = vmatprep.subr.mxu0 0.0
        %1641 = vmatpush1.xpose.msra.mxu0 0.0
        %1642 = vmatprep.subr.mxu0 0.0
        %1643 = vmatpush1.xpose.msra.mxu0 0.0
        %1644 = vmatprep.subr.mxu0 0.0
        %1645 = vmatpush1.xpose.msra.mxu0 0.0
        %1646 = vmatprep.subr.mxu0 0.0
        %1647 = vmatpush1.xpose.msra.mxu0 0.0
        %1648 = vmatprep.subr.mxu0 0.0
        %1649 = vmatpush1.xpose.msra.mxu0 0.0
        %1650 = vmatprep.subr.mxu0 0.0
        %1651 = vmatpush1.xpose.msra.mxu0 0.0
        %1652 = vmatprep.subr.mxu0 0.0
        %1653 = vmatpush1.xpose.msra.mxu0 0.0
        %1654 = vmatprep.subr.mxu0 0.0
        %1655 = vmatpush1.xpose.msra.mxu0 0.0
        %1656 = vmatprep.subr.mxu0 0.0
        %1657 = vmatpush1.xpose.msra.mxu0 0.0
        %1658 = vmatprep.subr.mxu0 0.0
        %1659 = vmatpush1.xpose.msra.mxu0 0.0
        %1660 = vmatprep.subr.mxu0 0.0
        %1661 = vmatpush1.xpose.msra.mxu0 0.0
        %1662 = vmatprep.subr.mxu0 0.0
        %1663 = vmatpush1.xpose.msra.mxu0 0.0
        %1664 = vmatprep.subr.mxu0 0.0
        %1665 = vmatpush1.xpose.msra.mxu0 0.0
        %1666 = vmatprep.subr.mxu0 0.0
        %1667 = vmatpush1.xpose.msra.mxu0 0.0
        %1668 = vmatprep.subr.mxu0 0.0
        %1669 = vmatpush1.xpose.msra.mxu0 0.0
        %1670 = vmatprep.mubr.f32.mxu0 0.0
        %1671 = vmatmul.mubr.f32.gmra.mrb[0].mxu0 %v1601
        %v1672 = vpop.f32.mrb[0].mxu0
        %v1673 = vadd.f32 0.0, %v1672
        %v1674 = vpop.f32.mrb[0].mxu0
        %1675 = vdwg.mxu0
        %v1677 = vsel %vm1179, %v1165, 0
        %v1680 = vsel %vm1179, %v1521, 0
        %1682 = vmatprep.subr.mxu0 0.0
        %1683 = vmatpush1.xpose.msra.mxu0 %v1680
        %1684 = vmatprep.subr.mxu0 0.0
        %1685 = vmatpush1.xpose.msra.mxu0 0.0
        %1686 = vmatprep.subr.mxu0 0.0
        %1687 = vmatpush1.xpose.msra.mxu0 0.0
        %1688 = vmatprep.subr.mxu0 0.0
        %1689 = vmatpush1.xpose.msra.mxu0 0.0
        %1690 = vmatprep.subr.mxu0 0.0
        %1691 = vmatpush1.xpose.msra.mxu0 0.0
        %1692 = vmatprep.subr.mxu0 0.0
        %1693 = vmatpush1.xpose.msra.mxu0 0.0
        %1694 = vmatprep.subr.mxu0 0.0
        %1695 = vmatpush1.xpose.msra.mxu0 0.0
        %1696 = vmatprep.subr.mxu0 0.0
        %1697 = vmatpush1.xpose.msra.mxu0 0.0
        %1698 = vmatprep.subr.mxu0 0.0
        %1699 = vmatpush1.xpose.msra.mxu0 0.0
        %1700 = vmatprep.subr.mxu0 0.0
        %1701 = vmatpush1.xpose.msra.mxu0 0.0
        %1702 = vmatprep.subr.mxu0 0.0
        %1703 = vmatpush1.xpose.msra.mxu0 0.0
        %1704 = vmatprep.subr.mxu0 0.0
        %1705 = vmatpush1.xpose.msra.mxu0 0.0
        %1706 = vmatprep.subr.mxu0 0.0
        %1707 = vmatpush1.xpose.msra.mxu0 0.0
        %1708 = vmatprep.subr.mxu0 0.0
        %1709 = vmatpush1.xpose.msra.mxu0 0.0
        %1710 = vmatprep.subr.mxu0 0.0
        %1711 = vmatpush1.xpose.msra.mxu0 0.0
        %1712 = vmatprep.subr.mxu0 0.0
        %1713 = vmatpush1.xpose.msra.mxu0 0.0
        %1714 = vmatprep.subr.mxu0 0.0
        %1715 = vmatpush1.xpose.msra.mxu0 0.0
        %1716 = vmatprep.subr.mxu0 0.0
        %1717 = vmatpush1.xpose.msra.mxu0 0.0
        %1718 = vmatprep.subr.mxu0 0.0
        %1719 = vmatpush1.xpose.msra.mxu0 0.0
        %1720 = vmatprep.subr.mxu0 0.0
        %1721 = vmatpush1.xpose.msra.mxu0 0.0
        %1722 = vmatprep.subr.mxu0 0.0
        %1723 = vmatpush1.xpose.msra.mxu0 0.0
        %1724 = vmatprep.subr.mxu0 0.0
        %1725 = vmatpush1.xpose.msra.mxu0 0.0
        %1726 = vmatprep.subr.mxu0 0.0
        %1727 = vmatpush1.xpose.msra.mxu0 0.0
        %1728 = vmatprep.subr.mxu0 0.0
        %1729 = vmatpush1.xpose.msra.mxu0 0.0
        %1730 = vmatprep.subr.mxu0 0.0
        %1731 = vmatpush1.xpose.msra.mxu0 0.0
        %1732 = vmatprep.subr.mxu0 0.0
        %1733 = vmatpush1.xpose.msra.mxu0 0.0
        %1734 = vmatprep.subr.mxu0 0.0
        %1735 = vmatpush1.xpose.msra.mxu0 0.0
        %1736 = vmatprep.subr.mxu0 0.0
        %1737 = vmatpush1.xpose.msra.mxu0 0.0
        %1738 = vmatprep.subr.mxu0 0.0
        %1739 = vmatpush1.xpose.msra.mxu0 0.0
        %1740 = vmatprep.subr.mxu0 0.0
        %1741 = vmatpush1.xpose.msra.mxu0 0.0
        %1742 = vmatprep.subr.mxu0 0.0
        %1743 = vmatpush1.xpose.msra.mxu0 0.0
        %1744 = vmatprep.subr.mxu0 0.0
        %1745 = vmatpush1.xpose.msra.mxu0 0.0
        %1746 = vmatprep.mubr.f32.mxu0 0.0
        %1747 = vmatmul.mubr.f32.gmra.mrb[0].mxu0 %v1677
        %v1748 = vpop.f32.mrb[0].mxu0
        %v1749 = vadd.f32 0.0, %v1748
        %v1750 = vpop.f32.mrb[0].mxu0
        %1751 = vdwg.mxu0
        %v1753 = vsel %vm1179, %v1166, 0
        %v1756 = vsel %vm1179, %v1523, 0
        %1758 = vmatprep.subr.mxu0 0.0
        %1759 = vmatpush1.xpose.msra.mxu0 %v1756
        %1760 = vmatprep.subr.mxu0 0.0
        %1761 = vmatpush1.xpose.msra.mxu0 0.0
        %1762 = vmatprep.subr.mxu0 0.0
        %1763 = vmatpush1.xpose.msra.mxu0 0.0
        %1764 = vmatprep.subr.mxu0 0.0
        %1765 = vmatpush1.xpose.msra.mxu0 0.0
        %1766 = vmatprep.subr.mxu0 0.0
        %1767 = vmatpush1.xpose.msra.mxu0 0.0
        %1768 = vmatprep.subr.mxu0 0.0
        %1769 = vmatpush1.xpose.msra.mxu0 0.0
        %1770 = vmatprep.subr.mxu0 0.0
        %1771 = vmatpush1.xpose.msra.mxu0 0.0
        %1772 = vmatprep.subr.mxu0 0.0
        %1773 = vmatpush1.xpose.msra.mxu0 0.0
        %1774 = vmatprep.subr.mxu0 0.0
        %1775 = vmatpush1.xpose.msra.mxu0 0.0
        %1776 = vmatprep.subr.mxu0 0.0
        %1777 = vmatpush1.xpose.msra.mxu0 0.0
        %1778 = vmatprep.subr.mxu0 0.0
        %1779 = vmatpush1.xpose.msra.mxu0 0.0
        %1780 = vmatprep.subr.mxu0 0.0
        %1781 = vmatpush1.xpose.msra.mxu0 0.0
        %1782 = vmatprep.subr.mxu0 0.0
        %1783 = vmatpush1.xpose.msra.mxu0 0.0
        %1784 = vmatprep.subr.mxu0 0.0
        %1785 = vmatpush1.xpose.msra.mxu0 0.0
        %1786 = vmatprep.subr.mxu0 0.0
        %1787 = vmatpush1.xpose.msra.mxu0 0.0
        %1788 = vmatprep.subr.mxu0 0.0
        %1789 = vmatpush1.xpose.msra.mxu0 0.0
        %1790 = vmatprep.subr.mxu0 0.0
        %1791 = vmatpush1.xpose.msra.mxu0 0.0
        %1792 = vmatprep.subr.mxu0 0.0
        %1793 = vmatpush1.xpose.msra.mxu0 0.0
        %1794 = vmatprep.subr.mxu0 0.0
        %1795 = vmatpush1.xpose.msra.mxu0 0.0
        %1796 = vmatprep.subr.mxu0 0.0
        %1797 = vmatpush1.xpose.msra.mxu0 0.0
        %1798 = vmatprep.subr.mxu0 0.0
        %1799 = vmatpush1.xpose.msra.mxu0 0.0
        %1800 = vmatprep.subr.mxu0 0.0
        %1801 = vmatpush1.xpose.msra.mxu0 0.0
        %1802 = vmatprep.subr.mxu0 0.0
        %1803 = vmatpush1.xpose.msra.mxu0 0.0
        %1804 = vmatprep.subr.mxu0 0.0
        %1805 = vmatpush1.xpose.msra.mxu0 0.0
        %1806 = vmatprep.subr.mxu0 0.0
        %1807 = vmatpush1.xpose.msra.mxu0 0.0
        %1808 = vmatprep.subr.mxu0 0.0
        %1809 = vmatpush1.xpose.msra.mxu0 0.0
        %1810 = vmatprep.subr.mxu0 0.0
        %1811 = vmatpush1.xpose.msra.mxu0 0.0
        %1812 = vmatprep.subr.mxu0 0.0
        %1813 = vmatpush1.xpose.msra.mxu0 0.0
        %1814 = vmatprep.subr.mxu0 0.0
        %1815 = vmatpush1.xpose.msra.mxu0 0.0
        %1816 = vmatprep.subr.mxu0 0.0
        %1817 = vmatpush1.xpose.msra.mxu0 0.0
        %1818 = vmatprep.subr.mxu0 0.0
        %1819 = vmatpush1.xpose.msra.mxu0 0.0
        %1820 = vmatprep.subr.mxu0 0.0
        %1821 = vmatpush1.xpose.msra.mxu0 0.0
        %1822 = vmatprep.mubr.f32.mxu0 0.0
        %1823 = vmatmul.mubr.f32.gmra.mrb[0].mxu0 %v1753
        %v1824 = vpop.f32.mrb[0].mxu0
        %v1825 = vadd.f32 0.0, %v1824
        %v1826 = vpop.f32.mrb[0].mxu0
        %1827 = vdwg.mxu0
        %1828 = vxpose.xlu0.b32.start [1/16] %v1597, 128
        %1829 = vxpose.xlu0.b32.cont [2/16] %v1673, 128
        %1830 = vxpose.xlu0.b32.cont [3/16] %v1749, 128
        %1831 = vxpose.xlu0.b32.cont [4/16] %v1825, 128
        %1832 = vxpose.xlu0.b32.cont [5/16] 0.0, 128
        %1833 = vxpose.xlu0.b32.cont [6/16] 0.0, 128
        %1834 = vxpose.xlu0.b32.cont [7/16] 0.0, 128
        %1835 = vxpose.xlu0.b32.cont [8/16] 0.0, 128
        %1836 = vxpose.xlu0.b32.cont [9/16] 0.0, 128
        %1837 = vxpose.xlu0.b32.cont [10/16] 0.0, 128
        %1838 = vxpose.xlu0.b32.cont [11/16] 0.0, 128
        %1839 = vxpose.xlu0.b32.cont [12/16] 0.0, 128
        %1840 = vxpose.xlu0.b32.cont [13/16] 0.0, 128
        %1841 = vxpose.xlu0.b32.cont [14/16] 0.0, 128
        %1842 = vxpose.xlu0.b32.cont [15/16] 0.0, 128
        %1843 = vxpose.xlu0.b32.end [16/16] 0.0, 128
        %v1844 = vpop.trf.xlu0
        %v1845 = vpop.trf.xlu0
        %v1846 = vpop.trf.xlu0
        %v1847 = vpop.trf.xlu0
        %v1848 = vpop.trf.xlu0
        %v1849 = vpop.trf.xlu0
        %v1850 = vpop.trf.xlu0
        %v1851 = vpop.trf.xlu0
        %v1852 = vpop.trf.xlu0
        %v1853 = vpop.trf.xlu0
        %v1854 = vpop.trf.xlu0
        %v1855 = vpop.trf.xlu0
        %v1856 = vpop.trf.xlu0
        %v1857 = vpop.trf.xlu0
        %v1858 = vpop.trf.xlu0
        %v1859 = vpop.trf.xlu0
        %v1860 = vld [vmem:[%s8] sm:$0xff]
        %v1861 = vld [vmem:[%s8 + $0x8] sm:$0xff]
        %v1862 = vld [vmem:[%s8 + $0x10] sm:$0xff]
        %v1863 = vld [vmem:[%s8 + $0x18] sm:$0xff]
        %v1864 = vld [vmem:[#allocation10] sm:$0x1]
        %v1865 = vlaneseq
        %v1866 = vshrl.u32 %v1865, 7
        %v1867 = vsub.s32 0, %v1866
        %v1868 = vrot.slane %v1864, %v1867
        %v1870 = vsel %vm705, %v1844, 0
        %1872 = vmatprep.subr.mxu0 0.0
        %1873 = vmatpush1.msra.mxu0 %v1860
        %1874 = vmatprep.subr.mxu0 0.0
        %1875 = vmatpush1.msra.mxu0 %v1861
        %1876 = vmatprep.subr.mxu0 0.0
        %1877 = vmatpush1.msra.mxu0 %v1862
        %1878 = vmatprep.subr.mxu0 0.0
        %1879 = vmatpush1.msra.mxu0 %v1863
        %1880 = vmatprep.subr.mxu0 0.0
        %1881 = vmatpush1.msra.mxu0 0.0
        %1882 = vmatprep.subr.mxu0 0.0
        %1883 = vmatpush1.msra.mxu0 0.0
        %1884 = vmatprep.subr.mxu0 0.0
        %1885 = vmatpush1.msra.mxu0 0.0
        %1886 = vmatprep.subr.mxu0 0.0
        %1887 = vmatpush1.msra.mxu0 0.0
        %1888 = vmatprep.subr.mxu0 0.0
        %1889 = vmatpush1.msra.mxu0 0.0
        %1890 = vmatprep.subr.mxu0 0.0
        %1891 = vmatpush1.msra.mxu0 0.0
        %1892 = vmatprep.subr.mxu0 0.0
        %1893 = vmatpush1.msra.mxu0 0.0
        %1894 = vmatprep.subr.mxu0 0.0
        %1895 = vmatpush1.msra.mxu0 0.0
        %1896 = vmatprep.subr.mxu0 0.0
        %1897 = vmatpush1.msra.mxu0 0.0
        %1898 = vmatprep.subr.mxu0 0.0
        %1899 = vmatpush1.msra.mxu0 0.0
        %1900 = vmatprep.subr.mxu0 0.0
        %1901 = vmatpush1.msra.mxu0 0.0
        %1902 = vmatprep.subr.mxu0 0.0
        %1903 = vmatpush1.msra.mxu0 0.0
        %1904 = vmatprep.subr.mxu0 0.0
        %1905 = vmatpush1.msra.mxu0 0.0
        %1906 = vmatprep.subr.mxu0 0.0
        %1907 = vmatpush1.msra.mxu0 0.0
        %1908 = vmatprep.subr.mxu0 0.0
        %1909 = vmatpush1.msra.mxu0 0.0
        %1910 = vmatprep.subr.mxu0 0.0
        %1911 = vmatpush1.msra.mxu0 0.0
        %1912 = vmatprep.subr.mxu0 0.0
        %1913 = vmatpush1.msra.mxu0 0.0
        %1914 = vmatprep.subr.mxu0 0.0
        %1915 = vmatpush1.msra.mxu0 0.0
        %1916 = vmatprep.subr.mxu0 0.0
        %1917 = vmatpush1.msra.mxu0 0.0
        %1918 = vmatprep.subr.mxu0 0.0
        %1919 = vmatpush1.msra.mxu0 0.0
        %1920 = vmatprep.subr.mxu0 0.0
        %1921 = vmatpush1.msra.mxu0 0.0
        %1922 = vmatprep.subr.mxu0 0.0
        %1923 = vmatpush1.msra.mxu0 0.0
        %1924 = vmatprep.subr.mxu0 0.0
        %1925 = vmatpush1.msra.mxu0 0.0
        %1926 = vmatprep.subr.mxu0 0.0
        %1927 = vmatpush1.msra.mxu0 0.0
        %1928 = vmatprep.subr.mxu0 0.0
        %1929 = vmatpush1.msra.mxu0 0.0
        %1930 = vmatprep.subr.mxu0 0.0
        %1931 = vmatpush1.msra.mxu0 0.0
        %1932 = vmatprep.subr.mxu0 0.0
        %1933 = vmatpush1.msra.mxu0 0.0
        %1934 = vmatprep.subr.mxu0 0.0
        %1935 = vmatpush1.msra.mxu0 0.0
        %1936 = vmatprep.mubr.f32.mxu0 0.0
        %1937 = vmatmul.mubr.f32.gmra.mrb[0].mxu0 %v1870
        %v1938 = vpop.f32.mrb[0].mxu0
        %v1939 = vadd.f32 %v1868, %v1938
        %v1940 = vpop.f32.mrb[0].mxu0
        %1941 = vdwg.mxu0
        %v1942 = vadd.f32 %v696, %v1939
        %v1943 = vld [vmem:[#allocation11] sm:$0x1]
        %v1944 = vld [vmem:[%s11] sm:$0x1]
        %v1945 = vsel %vm705, %v1942, 0.0
        %1946 = vadd.xlane.f32.xlu0 %v1945
        %v1947 = vpop.xlane.xlu0 %1946
        %v1948 = vmul.f32 %v1947, %v709
        %v1949 = vsub.f32 %v1942, %v1948
        %v1950 = vmul.f32 %v1949, %v1949
        %v1951 = vsel %vm705, %v1950, 0.0
        %1952 = vadd.xlane.f32.xlu0 %v1951
        %v1953 = vpop.xlane.xlu0 %1952
        %v1954 = vmul.f32 %v1953, %v709
        %v1955 = vadd.f32 %v1954, 1e-05
        %v1956 = vrsqrt.pop %v1955
        %v1957 = vmul.f32 %v1949, %v1956
        %v1958 = vlaneseq
        %v1959 = vshrl.u32 %v1958, 7
        %v1960 = vsub.s32 0, %v1959
        %v1961 = vrot.slane %v1943, %v1960
        %v1962 = vmul.f32 %v1957, %v1961
        %v1963 = vlaneseq
        %v1964 = vshrl.u32 %v1963, 7
        %v1965 = vsub.s32 0, %v1964
        %v1966 = vrot.slane %v1944, %v1965
        %v1967 = vadd.f32 %v1962, %v1966
        %v1968 = vld [vmem:[%s12] sm:$0xff]
        %v1969 = vld [vmem:[%s12 + $0x8] sm:$0xff]
        %v1970 = vld [vmem:[%s12 + $0x10] sm:$0xff]
        %v1971 = vld [vmem:[%s12 + $0x18] sm:$0xff]
        %v1972 = vld [vmem:[%s13] sm:$0x1]
        %v1973 = vlaneseq
        %v1974 = vshrl.u32 %v1973, 7
        %v1975 = vsub.s32 0, %v1974
        %v1976 = vrot.slane %v1972, %v1975
        %v1978 = vsel %vm705, %v1967, 0
        %1980 = vmatprep.subr.mxu0 0.0
        %1981 = vmatpush1.msra.mxu0 %v1968
        %1982 = vmatprep.subr.mxu0 0.0
        %1983 = vmatpush1.msra.mxu0 %v1969
        %1984 = vmatprep.subr.mxu0 0.0
        %1985 = vmatpush1.msra.mxu0 %v1970
        %1986 = vmatprep.subr.mxu0 0.0
        %1987 = vmatpush1.msra.mxu0 %v1971
        %1988 = vmatprep.subr.mxu0 0.0
        %1989 = vmatpush1.msra.mxu0 0.0
        %1990 = vmatprep.subr.mxu0 0.0
        %1991 = vmatpush1.msra.mxu0 0.0
        %1992 = vmatprep.subr.mxu0 0.0
        %1993 = vmatpush1.msra.mxu0 0.0
        %1994 = vmatprep.subr.mxu0 0.0
        %1995 = vmatpush1.msra.mxu0 0.0
        %1996 = vmatprep.subr.mxu0 0.0
        %1997 = vmatpush1.msra.mxu0 0.0
        %1998 = vmatprep.subr.mxu0 0.0
        %1999 = vmatpush1.msra.mxu0 0.0
        %2000 = vmatprep.subr.mxu0 0.0
        %2001 = vmatpush1.msra.mxu0 0.0
        %2002 = vmatprep.subr.mxu0 0.0
        %2003 = vmatpush1.msra.mxu0 0.0
        %2004 = vmatprep.subr.mxu0 0.0
        %2005 = vmatpush1.msra.mxu0 0.0
        %2006 = vmatprep.subr.mxu0 0.0
        %2007 = vmatpush1.msra.mxu0 0.0
        %2008 = vmatprep.subr.mxu0 0.0
        %2009 = vmatpush1.msra.mxu0 0.0
        %2010 = vmatprep.subr.mxu0 0.0
        %2011 = vmatpush1.msra.mxu0 0.0
        %2012 = vmatprep.subr.mxu0 0.0
        %2013 = vmatpush1.msra.mxu0 0.0
        %2014 = vmatprep.subr.mxu0 0.0
        %2015 = vmatpush1.msra.mxu0 0.0
        %2016 = vmatprep.subr.mxu0 0.0
        %2017 = vmatpush1.msra.mxu0 0.0
        %2018 = vmatprep.subr.mxu0 0.0
        %2019 = vmatpush1.msra.mxu0 0.0
        %2020 = vmatprep.subr.mxu0 0.0
        %2021 = vmatpush1.msra.mxu0 0.0
        %2022 = vmatprep.subr.mxu0 0.0
        %2023 = vmatpush1.msra.mxu0 0.0
        %2024 = vmatprep.subr.mxu0 0.0
        %2025 = vmatpush1.msra.mxu0 0.0
        %2026 = vmatprep.subr.mxu0 0.0
        %2027 = vmatpush1.msra.mxu0 0.0
        %2028 = vmatprep.subr.mxu0 0.0
        %2029 = vmatpush1.msra.mxu0 0.0
        %2030 = vmatprep.subr.mxu0 0.0
        %2031 = vmatpush1.msra.mxu0 0.0
        %2032 = vmatprep.subr.mxu0 0.0
        %2033 = vmatpush1.msra.mxu0 0.0
        %2034 = vmatprep.subr.mxu0 0.0
        %2035 = vmatpush1.msra.mxu0 0.0
        %2036 = vmatprep.subr.mxu0 0.0
        %2037 = vmatpush1.msra.mxu0 0.0
        %2038 = vmatprep.subr.mxu0 0.0
        %2039 = vmatpush1.msra.mxu0 0.0
        %2040 = vmatprep.subr.mxu0 0.0
        %2041 = vmatpush1.msra.mxu0 0.0
        %2042 = vmatprep.subr.mxu0 0.0
        %2043 = vmatpush1.msra.mxu0 0.0
        %2044 = vmatprep.mubr.f32.mxu0 0.0
        %2045 = vmatmul.mubr.f32.gmra.mrb[0].mxu0 %v1978
        %v2046 = vpop.f32.mrb[0].mxu0
        %v2047 = vadd.f32 %v1976, %v2046
        %v2048 = vpop.f32.mrb[0].mxu0
        %2049 = vdwg.mxu0
        %v2050 = vmax.f32 %v2047, 0.0
        %v2051 = vld [vmem:[%s14] sm:$0xff]
        %v2052 = vld [vmem:[%s14 + $0x8] sm:$0xff]
        %v2053 = vld [vmem:[%s14 + $0x10] sm:$0xff]
        %v2054 = vld [vmem:[%s14 + $0x18] sm:$0xff]
        %v2055 = vld [vmem:[%s14 + $0x20] sm:$0xff]
        %v2056 = vld [vmem:[%s14 + $0x28] sm:$0xff]
        %v2057 = vld [vmem:[%s14 + $0x30] sm:$0xff]
        %v2058 = vld [vmem:[%s14 + $0x38] sm:$0xff]
        %v2059 = vld [vmem:[%s14 + $0x40] sm:$0xff]
        %v2060 = vld [vmem:[%s14 + $0x48] sm:$0xff]
        %v2061 = vld [vmem:[%s14 + $0x50] sm:$0xff]
        %v2062 = vld [vmem:[%s14 + $0x58] sm:$0xff]
        %v2063 = vld [vmem:[%s14 + $0x60] sm:$0xff]
        %v2064 = vld [vmem:[%s14 + $0x68] sm:$0xff]
        %v2065 = vld [vmem:[%s14 + $0x70] sm:$0xff]
        %v2066 = vld [vmem:[%s14 + $0x78] sm:$0xff]
        %v2067 = vld [vmem:[%s15] sm:$0x1]
        %v2068 = vlaneseq
        %v2069 = vshrl.u32 %v2068, 7
        %v2070 = vsub.s32 0, %v2069
        %v2071 = vrot.slane %v2067, %v2070
        %2072 = vmatprep.subr.mxu0 0.0
        %2073 = vmatpush1.msra.mxu0 %v2051
        %2074 = vmatprep.subr.mxu0 0.0
        %2075 = vmatpush1.msra.mxu0 %v2052
        %2076 = vmatprep.subr.mxu0 0.0
        %2077 = vmatpush1.msra.mxu0 %v2053
        %2078 = vmatprep.subr.mxu0 0.0
        %2079 = vmatpush1.msra.mxu0 %v2054
        %2080 = vmatprep.subr.mxu0 0.0
        %2081 = vmatpush1.msra.mxu0 %v2055
        %2082 = vmatprep.subr.mxu0 0.0
        %2083 = vmatpush1.msra.mxu0 %v2056
        %2084 = vmatprep.subr.mxu0 0.0
        %2085 = vmatpush1.msra.mxu0 %v2057
        %2086 = vmatprep.subr.mxu0 0.0
        %2087 = vmatpush1.msra.mxu0 %v2058
        %2088 = vmatprep.subr.mxu0 0.0
        %2089 = vmatpush1.msra.mxu0 %v2059
        %2090 = vmatprep.subr.mxu0 0.0
        %2091 = vmatpush1.msra.mxu0 %v2060
        %2092 = vmatprep.subr.mxu0 0.0
        %2093 = vmatpush1.msra.mxu0 %v2061
        %2094 = vmatprep.subr.mxu0 0.0
        %2095 = vmatpush1.msra.mxu0 %v2062
        %2096 = vmatprep.subr.mxu0 0.0
        %2097 = vmatpush1.msra.mxu0 %v2063
        %2098 = vmatprep.subr.mxu0 0.0
        %2099 = vmatpush1.msra.mxu0 %v2064
        %2100 = vmatprep.subr.mxu0 0.0
        %2101 = vmatpush1.msra.mxu0 %v2065
        %2102 = vmatprep.subr.mxu0 0.0
        %2103 = vmatpush1.msra.mxu0 %v2066
        %2104 = vmatprep.subr.mxu0 0.0
        %2105 = vmatpush1.msra.mxu0 0.0
        %2106 = vmatprep.subr.mxu0 0.0
        %2107 = vmatpush1.msra.mxu0 0.0
        %2108 = vmatprep.subr.mxu0 0.0
        %2109 = vmatpush1.msra.mxu0 0.0
        %2110 = vmatprep.subr.mxu0 0.0
        %2111 = vmatpush1.msra.mxu0 0.0
        %2112 = vmatprep.subr.mxu0 0.0
        %2113 = vmatpush1.msra.mxu0 0.0
        %2114 = vmatprep.subr.mxu0 0.0
        %2115 = vmatpush1.msra.mxu0 0.0
        %2116 = vmatprep.subr.mxu0 0.0
        %2117 = vmatpush1.msra.mxu0 0.0
        %2118 = vmatprep.subr.mxu0 0.0
        %2119 = vmatpush1.msra.mxu0 0.0
        %2120 = vmatprep.subr.mxu0 0.0
        %2121 = vmatpush1.msra.mxu0 0.0
        %2122 = vmatprep.subr.mxu0 0.0
        %2123 = vmatpush1.msra.mxu0 0.0
        %2124 = vmatprep.subr.mxu0 0.0
        %2125 = vmatpush1.msra.mxu0 0.0
        %2126 = vmatprep.subr.mxu0 0.0
        %2127 = vmatpush1.msra.mxu0 0.0
        %2128 = vmatprep.subr.mxu0 0.0
        %2129 = vmatpush1.msra.mxu0 0.0
        %2130 = vmatprep.subr.mxu0 0.0
        %2131 = vmatpush1.msra.mxu0 0.0
        %2132 = vmatprep.subr.mxu0 0.0
        %2133 = vmatpush1.msra.mxu0 0.0
        %2134 = vmatprep.subr.mxu0 0.0
        %2135 = vmatpush1.msra.mxu0 0.0
        %2136 = vmatprep.mubr.f32.mxu0 0.0
        %2137 = vmatmul.mubr.f32.gmra.mrb[0].mxu0 %v2050
        %v2138 = vpop.f32.mrb[0].mxu0
        %v2139 = vadd.f32 %v2071, %v2138
        %v2140 = vpop.f32.mrb[0].mxu0
        %2141 = vdwg.mxu0
        %v2142 = vadd.f32 %v1942, %v2139
        %v2143 = vld [vmem:[%s3 + $0x1] sm:$0x1]
        %v2144 = vld [vmem:[%s4 + $0x1] sm:$0x1]
        %v2145 = vsel %vm705, %v2142, 0.0
        %2146 = vadd.xlane.f32.xlu0 %v2145
        %v2147 = vpop.xlane.xlu0 %2146
        %v2148 = vmul.f32 %v2147, %v709
        %v2149 = vsub.f32 %v2142, %v2148
        %v2150 = vmul.f32 %v2149, %v2149
        %v2151 = vsel %vm705, %v2150, 0.0
        %2152 = vadd.xlane.f32.xlu0 %v2151
        %v2153 = vpop.xlane.xlu0 %2152
        %v2154 = vmul.f32 %v2153, %v709
        %v2155 = vadd.f32 %v2154, 1e-05
        %v2156 = vrsqrt.pop %v2155
        %v2157 = vmul.f32 %v2149, %v2156
        %v2158 = vlaneseq
        %v2159 = vshrl.u32 %v2158, 7
        %v2160 = vsub.s32 0, %v2159
        %v2161 = vrot.slane %v2143, %v2160
        %v2162 = vmul.f32 %v2157, %v2161
        %v2163 = vlaneseq
        %v2164 = vshrl.u32 %v2163, 7
        %v2165 = vsub.s32 0, %v2164
        %v2166 = vrot.slane %v2144, %v2165
        %v2167 = vadd.f32 %v2162, %v2166
        %s2168 = scalar_lea.vmem %s5, 32
        %v2169 = vld [vmem:[%s2168] sm:$0xff]
        %v2170 = vld [vmem:[%s2168 + $0x8] sm:$0xff]
        %v2171 = vld [vmem:[%s2168 + $0x10] sm:$0xff]
        %v2172 = vld [vmem:[%s2168 + $0x18] sm:$0xff]
        %v2174 = vsel %vm705, %v2167, 0
        %2176 = vmatprep.subr.mxu0 0.0
        %2177 = vmatpush1.msra.mxu0 %v2169
        %2178 = vmatprep.subr.mxu0 0.0
        %2179 = vmatpush1.msra.mxu0 %v2170
        %2180 = vmatprep.subr.mxu0 0.0
        %2181 = vmatpush1.msra.mxu0 %v2171
        %2182 = vmatprep.subr.mxu0 0.0
        %2183 = vmatpush1.msra.mxu0 %v2172
        %2184 = vmatprep.subr.mxu0 0.0
        %2185 = vmatpush1.msra.mxu0 0.0
        %2186 = vmatprep.subr.mxu0 0.0
        %2187 = vmatpush1.msra.mxu0 0.0
        %2188 = vmatprep.subr.mxu0 0.0
        %2189 = vmatpush1.msra.mxu0 0.0
        %2190 = vmatprep.subr.mxu0 0.0
        %2191 = vmatpush1.msra.mxu0 0.0
        %2192 = vmatprep.subr.mxu0 0.0
        %2193 = vmatpush1.msra.mxu0 0.0
        %2194 = vmatprep.subr.mxu0 0.0
        %2195 = vmatpush1.msra.mxu0 0.0
        %2196 = vmatprep.subr.mxu0 0.0
        %2197 = vmatpush1.msra.mxu0 0.0
        %2198 = vmatprep.subr.mxu0 0.0
        %2199 = vmatpush1.msra.mxu0 0.0
        %2200 = vmatprep.subr.mxu0 0.0
        %2201 = vmatpush1.msra.mxu0 0.0
        %2202 = vmatprep.subr.mxu0 0.0
        %2203 = vmatpush1.msra.mxu0 0.0
        %2204 = vmatprep.subr.mxu0 0.0
        %2205 = vmatpush1.msra.mxu0 0.0
        %2206 = vmatprep.subr.mxu0 0.0
        %2207 = vmatpush1.msra.mxu0 0.0
        %2208 = vmatprep.subr.mxu0 0.0
        %2209 = vmatpush1.msra.mxu0 0.0
        %2210 = vmatprep.subr.mxu0 0.0
        %2211 = vmatpush1.msra.mxu0 0.0
        %2212 = vmatprep.subr.mxu0 0.0
        %2213 = vmatpush1.msra.mxu0 0.0
        %2214 = vmatprep.subr.mxu0 0.0
        %2215 = vmatpush1.msra.mxu0 0.0
        %2216 = vmatprep.subr.mxu0 0.0
        %2217 = vmatpush1.msra.mxu0 0.0
        %2218 = vmatprep.subr.mxu0 0.0
        %2219 = vmatpush1.msra.mxu0 0.0
        %2220 = vmatprep.subr.mxu0 0.0
        %2221 = vmatpush1.msra.mxu0 0.0
        %2222 = vmatprep.subr.mxu0 0.0
        %2223 = vmatpush1.msra.mxu0 0.0
        %2224 = vmatprep.subr.mxu0 0.0
        %2225 = vmatpush1.msra.mxu0 0.0
        %2226 = vmatprep.subr.mxu0 0.0
        %2227 = vmatpush1.msra.mxu0 0.0
        %2228 = vmatprep.subr.mxu0 0.0
        %2229 = vmatpush1.msra.mxu0 0.0
        %2230 = vmatprep.subr.mxu0 0.0
        %2231 = vmatpush1.msra.mxu0 0.0
        %2232 = vmatprep.subr.mxu0 0.0
        %2233 = vmatpush1.msra.mxu0 0.0
        %2234 = vmatprep.subr.mxu0 0.0
        %2235 = vmatpush1.msra.mxu0 0.0
        %2236 = vmatprep.subr.mxu0 0.0
        %2237 = vmatpush1.msra.mxu0 0.0
        %2238 = vmatprep.subr.mxu0 0.0
        %2239 = vmatpush1.msra.mxu0 0.0
        %2240 = vmatprep.mubr.f32.mxu0 0.0
        %2241 = vmatmul.mubr.f32.gmra.mrb[0].mxu0 %v2174
        %v2242 = vpop.f32.mrb[0].mxu0
        %v2243 = vadd.f32 0.0, %v2242
        %v2244 = vpop.f32.mrb[0].mxu0
        %2245 = vdwg.mxu0
        %s2246 = scalar_lea.vmem %s6, 32
        %v2247 = vld [vmem:[%s2246] sm:$0xff]
        %v2248 = vld [vmem:[%s2246 + $0x8] sm:$0xff]
        %v2249 = vld [vmem:[%s2246 + $0x10] sm:$0xff]
        %v2250 = vld [vmem:[%s2246 + $0x18] sm:$0xff]
        %2251 = vmatprep.subr.mxu0 0.0
        %2252 = vmatpush1.msra.mxu0 %v2247
        %2253 = vmatprep.subr.mxu0 0.0
        %2254 = vmatpush1.msra.mxu0 %v2248
        %2255 = vmatprep.subr.mxu0 0.0
        %2256 = vmatpush1.msra.mxu0 %v2249
        %2257 = vmatprep.subr.mxu0 0.0
        %2258 = vmatpush1.msra.mxu0 %v2250
        %2259 = vmatprep.subr.mxu0 0.0
        %2260 = vmatpush1.msra.mxu0 0.0
        %2261 = vmatprep.subr.mxu0 0.0
        %2262 = vmatpush1.msra.mxu0 0.0
        %2263 = vmatprep.subr.mxu0 0.0
        %2264 = vmatpush1.msra.mxu0 0.0
        %2265 = vmatprep.subr.mxu0 0.0
        %2266 = vmatpush1.msra.mxu0 0.0
        %2267 = vmatprep.subr.mxu0 0.0
        %2268 = vmatpush1.msra.mxu0 0.0
        %2269 = vmatprep.subr.mxu0 0.0
        %2270 = vmatpush1.msra.mxu0 0.0
        %2271 = vmatprep.subr.mxu0 0.0
        %2272 = vmatpush1.msra.mxu0 0.0
        %2273 = vmatprep.subr.mxu0 0.0
        %2274 = vmatpush1.msra.mxu0 0.0
        %2275 = vmatprep.subr.mxu0 0.0
        %2276 = vmatpush1.msra.mxu0 0.0
        %2277 = vmatprep.subr.mxu0 0.0
        %2278 = vmatpush1.msra.mxu0 0.0
        %2279 = vmatprep.subr.mxu0 0.0
        %2280 = vmatpush1.msra.mxu0 0.0
        %2281 = vmatprep.subr.mxu0 0.0
        %2282 = vmatpush1.msra.mxu0 0.0
        %2283 = vmatprep.subr.mxu0 0.0
        %2284 = vmatpush1.msra.mxu0 0.0
        %2285 = vmatprep.subr.mxu0 0.0
        %2286 = vmatpush1.msra.mxu0 0.0
        %2287 = vmatprep.subr.mxu0 0.0
        %2288 = vmatpush1.msra.mxu0 0.0
        %2289 = vmatprep.subr.mxu0 0.0
        %2290 = vmatpush1.msra.mxu0 0.0
        %2291 = vmatprep.subr.mxu0 0.0
        %2292 = vmatpush1.msra.mxu0 0.0
        %2293 = vmatprep.subr.mxu0 0.0
        %2294 = vmatpush1.msra.mxu0 0.0
        %2295 = vmatprep.subr.mxu0 0.0
        %2296 = vmatpush1.msra.mxu0 0.0
        %2297 = vmatprep.subr.mxu0 0.0
        %2298 = vmatpush1.msra.mxu0 0.0
        %2299 = vmatprep.subr.mxu0 0.0
        %2300 = vmatpush1.msra.mxu0 0.0
        %2301 = vmatprep.subr.mxu0 0.0
        %2302 = vmatpush1.msra.mxu0 0.0
        %2303 = vmatprep.subr.mxu0 0.0
        %2304 = vmatpush1.msra.mxu0 0.0
        %2305 = vmatprep.subr.mxu0 0.0
        %2306 = vmatpush1.msra.mxu0 0.0
        %2307 = vmatprep.subr.mxu0 0.0
        %2308 = vmatpush1.msra.mxu0 0.0
        %2309 = vmatprep.subr.mxu0 0.0
        %2310 = vmatpush1.msra.mxu0 0.0
        %2311 = vmatprep.subr.mxu0 0.0
        %2312 = vmatpush1.msra.mxu0 0.0
        %2313 = vmatprep.subr.mxu0 0.0
        %2314 = vmatpush1.msra.mxu0 0.0
        %2315 = vmatprep.mubr.f32.mxu0 0.0
        %2316 = vmatmul.mubr.f32.gmra.mrb[0].mxu0 %v2174
        %v2317 = vpop.f32.mrb[0].mxu0
        %v2318 = vadd.f32 0.0, %v2317
        %v2319 = vpop.f32.mrb[0].mxu0
        %2320 = vdwg.mxu0
        %s2321 = scalar_lea.vmem %s7, 32
        %v2322 = vld [vmem:[%s2321] sm:$0xff]
        %v2323 = vld [vmem:[%s2321 + $0x8] sm:$0xff]
        %v2324 = vld [vmem:[%s2321 + $0x10] sm:$0xff]
        %v2325 = vld [vmem:[%s2321 + $0x18] sm:$0xff]
        %2326 = vmatprep.subr.mxu0 0.0
        %2327 = vmatpush1.msra.mxu0 %v2322
        %2328 = vmatprep.subr.mxu0 0.0
        %2329 = vmatpush1.msra.mxu0 %v2323
        %2330 = vmatprep.subr.mxu0 0.0
        %2331 = vmatpush1.msra.mxu0 %v2324
        %2332 = vmatprep.subr.mxu0 0.0
        %2333 = vmatpush1.msra.mxu0 %v2325
        %2334 = vmatprep.subr.mxu0 0.0
        %2335 = vmatpush1.msra.mxu0 0.0
        %2336 = vmatprep.subr.mxu0 0.0
        %2337 = vmatpush1.msra.mxu0 0.0
        %2338 = vmatprep.subr.mxu0 0.0
        %2339 = vmatpush1.msra.mxu0 0.0
        %2340 = vmatprep.subr.mxu0 0.0
        %2341 = vmatpush1.msra.mxu0 0.0
        %2342 = vmatprep.subr.mxu0 0.0
        %2343 = vmatpush1.msra.mxu0 0.0
        %2344 = vmatprep.subr.mxu0 0.0
        %2345 = vmatpush1.msra.mxu0 0.0
        %2346 = vmatprep.subr.mxu0 0.0
        %2347 = vmatpush1.msra.mxu0 0.0
        %2348 = vmatprep.subr.mxu0 0.0
        %2349 = vmatpush1.msra.mxu0 0.0
        %2350 = vmatprep.subr.mxu0 0.0
        %2351 = vmatpush1.msra.mxu0 0.0
        %2352 = vmatprep.subr.mxu0 0.0
        %2353 = vmatpush1.msra.mxu0 0.0
        %2354 = vmatprep.subr.mxu0 0.0
        %2355 = vmatpush1.msra.mxu0 0.0
        %2356 = vmatprep.subr.mxu0 0.0
        %2357 = vmatpush1.msra.mxu0 0.0
        %2358 = vmatprep.subr.mxu0 0.0
        %2359 = vmatpush1.msra.mxu0 0.0
        %2360 = vmatprep.subr.mxu0 0.0
        %2361 = vmatpush1.msra.mxu0 0.0
        %2362 = vmatprep.subr.mxu0 0.0
        %2363 = vmatpush1.msra.mxu0 0.0
        %2364 = vmatprep.subr.mxu0 0.0
        %2365 = vmatpush1.msra.mxu0 0.0
        %2366 = vmatprep.subr.mxu0 0.0
        %2367 = vmatpush1.msra.mxu0 0.0
        %2368 = vmatprep.subr.mxu0 0.0
        %2369 = vmatpush1.msra.mxu0 0.0
        %2370 = vmatprep.subr.mxu0 0.0
        %2371 = vmatpush1.msra.mxu0 0.0
        %2372 = vmatprep.subr.mxu0 0.0
        %2373 = vmatpush1.msra.mxu0 0.0
        %2374 = vmatprep.subr.mxu0 0.0
        %2375 = vmatpush1.msra.mxu0 0.0
        %2376 = vmatprep.subr.mxu0 0.0
        %2377 = vmatpush1.msra.mxu0 0.0
        %2378 = vmatprep.subr.mxu0 0.0
        %2379 = vmatpush1.msra.mxu0 0.0
        %2380 = vmatprep.subr.mxu0 0.0
        %2381 = vmatpush1.msra.mxu0 0.0
        %2382 = vmatprep.subr.mxu0 0.0
        %2383 = vmatpush1.msra.mxu0 0.0
        %2384 = vmatprep.subr.mxu0 0.0
        %2385 = vmatpush1.msra.mxu0 0.0
        %2386 = vmatprep.subr.mxu0 0.0
        %2387 = vmatpush1.msra.mxu0 0.0
        %2388 = vmatprep.subr.mxu0 0.0
        %2389 = vmatpush1.msra.mxu0 0.0
        %2390 = vmatprep.mubr.f32.mxu0 0.0
        %2391 = vmatmul.mubr.f32.gmra.mrb[0].mxu0 %v2174
        %v2392 = vpop.f32.mrb[0].mxu0
        %v2393 = vadd.f32 0.0, %v2392
        %v2394 = vpop.f32.mrb[0].mxu0
        %2395 = vdwg.mxu0
        %2396 = vxpose.xlu0.b32.start [1/16] %v2243, 128
        %2397 = vxpose.xlu0.b32.cont [2/16] 0.0, 128
        %2398 = vxpose.xlu0.b32.cont [3/16] 0.0, 128
        %2399 = vxpose.xlu0.b32.cont [4/16] 0.0, 128
        %2400 = vxpose.xlu0.b32.cont [5/16] 0.0, 128
        %2401 = vxpose.xlu0.b32.cont [6/16] 0.0, 128
        %2402 = vxpose.xlu0.b32.cont [7/16] 0.0, 128
        %2403 = vxpose.xlu0.b32.cont [8/16] 0.0, 128
        %2404 = vxpose.xlu0.b32.cont [9/16] 0.0, 128
        %2405 = vxpose.xlu0.b32.cont [10/16] 0.0, 128
        %2406 = vxpose.xlu0.b32.cont [11/16] 0.0, 128
        %2407 = vxpose.xlu0.b32.cont [12/16] 0.0, 128
        %2408 = vxpose.xlu0.b32.cont [13/16] 0.0, 128
        %2409 = vxpose.xlu0.b32.cont [14/16] 0.0, 128
        %2410 = vxpose.xlu0.b32.cont [15/16] 0.0, 128
        %2411 = vxpose.xlu0.b32.end [16/16] 0.0, 128
        %v2412 = vpop.trf.xlu0
        %v2413 = vpop.trf.xlu0
        %v2414 = vpop.trf.xlu0
        %v2415 = vpop.trf.xlu0
        %v2416 = vpop.trf.xlu0
        %v2417 = vpop.trf.xlu0
        %v2418 = vpop.trf.xlu0
        %v2419 = vpop.trf.xlu0
        %v2420 = vpop.trf.xlu0
        %v2421 = vpop.trf.xlu0
        %v2422 = vpop.trf.xlu0
        %v2423 = vpop.trf.xlu0
        %v2424 = vpop.trf.xlu0
        %v2425 = vpop.trf.xlu0
        %v2426 = vpop.trf.xlu0
        %v2427 = vpop.trf.xlu0
        %2428 = vxpose.xlu0.b32.start [1/16] %v2412, 128
        %2429 = vxpose.xlu0.b32.cont [2/16] 0.0, 128
        %2430 = vxpose.xlu0.b32.cont [3/16] 0.0, 128
        %2431 = vxpose.xlu0.b32.cont [4/16] 0.0, 128
        %2432 = vxpose.xlu0.b32.cont [5/16] 0.0, 128
        %2433 = vxpose.xlu0.b32.cont [6/16] 0.0, 128
        %2434 = vxpose.xlu0.b32.cont [7/16] 0.0, 128
        %2435 = vxpose.xlu0.b32.cont [8/16] 0.0, 128
        %2436 = vxpose.xlu0.b32.cont [9/16] 0.0, 128
        %2437 = vxpose.xlu0.b32.cont [10/16] 0.0, 128
        %2438 = vxpose.xlu0.b32.cont [11/16] 0.0, 128
        %2439 = vxpose.xlu0.b32.cont [12/16] 0.0, 128
        %2440 = vxpose.xlu0.b32.cont [13/16] 0.0, 128
        %2441 = vxpose.xlu0.b32.cont [14/16] 0.0, 128
        %2442 = vxpose.xlu0.b32.cont [15/16] 0.0, 128
        %2443 = vxpose.xlu0.b32.end [16/16] 0.0, 128
        %v2444 = vpop.trf.xlu0
        %v2445 = vpop.trf.xlu0
        %v2446 = vpop.trf.xlu0
        %v2447 = vpop.trf.xlu0
        %v2448 = vpop.trf.xlu0
        %v2449 = vpop.trf.xlu0
        %v2450 = vpop.trf.xlu0
        %v2451 = vpop.trf.xlu0
        %v2452 = vpop.trf.xlu0
        %v2453 = vpop.trf.xlu0
        %v2454 = vpop.trf.xlu0
        %v2455 = vpop.trf.xlu0
        %v2456 = vpop.trf.xlu0
        %v2457 = vpop.trf.xlu0
        %v2458 = vpop.trf.xlu0
        %v2459 = vpop.trf.xlu0
        %2460 = vxpose.xlu0.b32.start [1/16] %v2413, 128
        %2461 = vxpose.xlu0.b32.cont [2/16] 0.0, 128
        %2462 = vxpose.xlu0.b32.cont [3/16] 0.0, 128
        %2463 = vxpose.xlu0.b32.cont [4/16] 0.0, 128
        %2464 = vxpose.xlu0.b32.cont [5/16] 0.0, 128
        %2465 = vxpose.xlu0.b32.cont [6/16] 0.0, 128
        %2466 = vxpose.xlu0.b32.cont [7/16] 0.0, 128
        %2467 = vxpose.xlu0.b32.cont [8/16] 0.0, 128
        %2468 = vxpose.xlu0.b32.cont [9/16] 0.0, 128
        %2469 = vxpose.xlu0.b32.cont [10/16] 0.0, 128
        %2470 = vxpose.xlu0.b32.cont [11/16] 0.0, 128
        %2471 = vxpose.xlu0.b32.cont [12/16] 0.0, 128
        %2472 = vxpose.xlu0.b32.cont [13/16] 0.0, 128
        %2473 = vxpose.xlu0.b32.cont [14/16] 0.0, 128
        %2474 = vxpose.xlu0.b32.cont [15/16] 0.0, 128
        %2475 = vxpose.xlu0.b32.end [16/16] 0.0, 128
        %v2476 = vpop.trf.xlu0
        %v2477 = vpop.trf.xlu0
        %v2478 = vpop.trf.xlu0
        %v2479 = vpop.trf.xlu0
        %v2480 = vpop.trf.xlu0
        %v2481 = vpop.trf.xlu0
        %v2482 = vpop.trf.xlu0
        %v2483 = vpop.trf.xlu0
        %v2484 = vpop.trf.xlu0
        %v2485 = vpop.trf.xlu0
        %v2486 = vpop.trf.xlu0
        %v2487 = vpop.trf.xlu0
        %v2488 = vpop.trf.xlu0
        %v2489 = vpop.trf.xlu0
        %v2490 = vpop.trf.xlu0
        %v2491 = vpop.trf.xlu0
        %2492 = vxpose.xlu0.b32.start [1/16] %v2414, 128
        %2493 = vxpose.xlu0.b32.cont [2/16] 0.0, 128
        %2494 = vxpose.xlu0.b32.cont [3/16] 0.0, 128
        %2495 = vxpose.xlu0.b32.cont [4/16] 0.0, 128
        %2496 = vxpose.xlu0.b32.cont [5/16] 0.0, 128
        %2497 = vxpose.xlu0.b32.cont [6/16] 0.0, 128
        %2498 = vxpose.xlu0.b32.cont [7/16] 0.0, 128
        %2499 = vxpose.xlu0.b32.cont [8/16] 0.0, 128
        %2500 = vxpose.xlu0.b32.cont [9/16] 0.0, 128
        %2501 = vxpose.xlu0.b32.cont [10/16] 0.0, 128
        %2502 = vxpose.xlu0.b32.cont [11/16] 0.0, 128
        %2503 = vxpose.xlu0.b32.cont [12/16] 0.0, 128
        %2504 = vxpose.xlu0.b32.cont [13/16] 0.0, 128
        %2505 = vxpose.xlu0.b32.cont [14/16] 0.0, 128
        %2506 = vxpose.xlu0.b32.cont [15/16] 0.0, 128
        %2507 = vxpose.xlu0.b32.end [16/16] 0.0, 128
        %v2508 = vpop.trf.xlu0
        %v2509 = vpop.trf.xlu0
        %v2510 = vpop.trf.xlu0
        %v2511 = vpop.trf.xlu0
        %v2512 = vpop.trf.xlu0
        %v2513 = vpop.trf.xlu0
        %v2514 = vpop.trf.xlu0
        %v2515 = vpop.trf.xlu0
        %v2516 = vpop.trf.xlu0
        %v2517 = vpop.trf.xlu0
        %v2518 = vpop.trf.xlu0
        %v2519 = vpop.trf.xlu0
        %v2520 = vpop.trf.xlu0
        %v2521 = vpop.trf.xlu0
        %v2522 = vpop.trf.xlu0
        %v2523 = vpop.trf.xlu0
        %2524 = vxpose.xlu0.b32.start [1/16] %v2415, 128
        %2525 = vxpose.xlu0.b32.cont [2/16] 0.0, 128
        %2526 = vxpose.xlu0.b32.cont [3/16] 0.0, 128
        %2527 = vxpose.xlu0.b32.cont [4/16] 0.0, 128
        %2528 = vxpose.xlu0.b32.cont [5/16] 0.0, 128
        %2529 = vxpose.xlu0.b32.cont [6/16] 0.0, 128
        %2530 = vxpose.xlu0.b32.cont [7/16] 0.0, 128
        %2531 = vxpose.xlu0.b32.cont [8/16] 0.0, 128
        %2532 = vxpose.xlu0.b32.cont [9/16] 0.0, 128
        %2533 = vxpose.xlu0.b32.cont [10/16] 0.0, 128
        %2534 = vxpose.xlu0.b32.cont [11/16] 0.0, 128
        %2535 = vxpose.xlu0.b32.cont [12/16] 0.0, 128
        %2536 = vxpose.xlu0.b32.cont [13/16] 0.0, 128
        %2537 = vxpose.xlu0.b32.cont [14/16] 0.0, 128
        %2538 = vxpose.xlu0.b32.cont [15/16] 0.0, 128
        %2539 = vxpose.xlu0.b32.end [16/16] 0.0, 128
        %v2540 = vpop.trf.xlu0
        %v2541 = vpop.trf.xlu0
        %v2542 = vpop.trf.xlu0
        %v2543 = vpop.trf.xlu0
        %v2544 = vpop.trf.xlu0
        %v2545 = vpop.trf.xlu0
        %v2546 = vpop.trf.xlu0
        %v2547 = vpop.trf.xlu0
        %v2548 = vpop.trf.xlu0
        %v2549 = vpop.trf.xlu0
        %v2550 = vpop.trf.xlu0
        %v2551 = vpop.trf.xlu0
        %v2552 = vpop.trf.xlu0
        %v2553 = vpop.trf.xlu0
        %v2554 = vpop.trf.xlu0
        %v2555 = vpop.trf.xlu0
        %2556 = vxpose.xlu0.b32.start [1/16] %v2318, 128
        %2557 = vxpose.xlu0.b32.cont [2/16] 0.0, 128
        %2558 = vxpose.xlu0.b32.cont [3/16] 0.0, 128
        %2559 = vxpose.xlu0.b32.cont [4/16] 0.0, 128
        %2560 = vxpose.xlu0.b32.cont [5/16] 0.0, 128
        %2561 = vxpose.xlu0.b32.cont [6/16] 0.0, 128
        %2562 = vxpose.xlu0.b32.cont [7/16] 0.0, 128
        %2563 = vxpose.xlu0.b32.cont [8/16] 0.0, 128
        %2564 = vxpose.xlu0.b32.cont [9/16] 0.0, 128
        %2565 = vxpose.xlu0.b32.cont [10/16] 0.0, 128
        %2566 = vxpose.xlu0.b32.cont [11/16] 0.0, 128
        %2567 = vxpose.xlu0.b32.cont [12/16] 0.0, 128
        %2568 = vxpose.xlu0.b32.cont [13/16] 0.0, 128
        %2569 = vxpose.xlu0.b32.cont [14/16] 0.0, 128
        %2570 = vxpose.xlu0.b32.cont [15/16] 0.0, 128
        %2571 = vxpose.xlu0.b32.end [16/16] 0.0, 128
        %v2572 = vpop.trf.xlu0
        %v2573 = vpop.trf.xlu0
        %v2574 = vpop.trf.xlu0
        %v2575 = vpop.trf.xlu0
        %v2576 = vpop.trf.xlu0
        %v2577 = vpop.trf.xlu0
        %v2578 = vpop.trf.xlu0
        %v2579 = vpop.trf.xlu0
        %v2580 = vpop.trf.xlu0
        %v2581 = vpop.trf.xlu0
        %v2582 = vpop.trf.xlu0
        %v2583 = vpop.trf.xlu0
        %v2584 = vpop.trf.xlu0
        %v2585 = vpop.trf.xlu0
        %v2586 = vpop.trf.xlu0
        %v2587 = vpop.trf.xlu0
        %2588 = vxpose.xlu0.b32.start [1/16] %v2393, 128
        %2589 = vxpose.xlu0.b32.cont [2/16] 0.0, 128
        %2590 = vxpose.xlu0.b32.cont [3/16] 0.0, 128
        %2591 = vxpose.xlu0.b32.cont [4/16] 0.0, 128
        %2592 = vxpose.xlu0.b32.cont [5/16] 0.0, 128
        %2593 = vxpose.xlu0.b32.cont [6/16] 0.0, 128
        %2594 = vxpose.xlu0.b32.cont [7/16] 0.0, 128
        %2595 = vxpose.xlu0.b32.cont [8/16] 0.0, 128
        %2596 = vxpose.xlu0.b32.cont [9/16] 0.0, 128
        %2597 = vxpose.xlu0.b32.cont [10/16] 0.0, 128
        %2598 = vxpose.xlu0.b32.cont [11/16] 0.0, 128
        %2599 = vxpose.xlu0.b32.cont [12/16] 0.0, 128
        %2600 = vxpose.xlu0.b32.cont [13/16] 0.0, 128
        %2601 = vxpose.xlu0.b32.cont [14/16] 0.0, 128
        %2602 = vxpose.xlu0.b32.cont [15/16] 0.0, 128
        %2603 = vxpose.xlu0.b32.end [16/16] 0.0, 128
        %v2604 = vpop.trf.xlu0
        %v2605 = vpop.trf.xlu0
        %v2606 = vpop.trf.xlu0
        %v2607 = vpop.trf.xlu0
        %v2608 = vpop.trf.xlu0
        %v2609 = vpop.trf.xlu0
        %v2610 = vpop.trf.xlu0
        %v2611 = vpop.trf.xlu0
        %v2612 = vpop.trf.xlu0
        %v2613 = vpop.trf.xlu0
        %v2614 = vpop.trf.xlu0
        %v2615 = vpop.trf.xlu0
        %v2616 = vpop.trf.xlu0
        %v2617 = vpop.trf.xlu0
        %v2618 = vpop.trf.xlu0
        %v2619 = vpop.trf.xlu0
        %v2621 = vsel %vm1179, %v2444, 0
        %2623 = vmatprep.subr.mxu0 0.0
        %2624 = vmatpush1.msra.mxu0 %v2572
        %2625 = vmatprep.subr.mxu0 0.0
        %2626 = vmatpush1.msra.mxu0 0.0
        %2627 = vmatprep.subr.mxu0 0.0
        %2628 = vmatpush1.msra.mxu0 0.0
        %2629 = vmatprep.subr.mxu0 0.0
        %2630 = vmatpush1.msra.mxu0 0.0
        %2631 = vmatprep.subr.mxu0 0.0
        %2632 = vmatpush1.msra.mxu0 0.0
        %2633 = vmatprep.subr.mxu0 0.0
        %2634 = vmatpush1.msra.mxu0 0.0
        %2635 = vmatprep.subr.mxu0 0.0
        %2636 = vmatpush1.msra.mxu0 0.0
        %2637 = vmatprep.subr.mxu0 0.0
        %2638 = vmatpush1.msra.mxu0 0.0
        %2639 = vmatprep.subr.mxu0 0.0
        %2640 = vmatpush1.msra.mxu0 0.0
        %2641 = vmatprep.subr.mxu0 0.0
        %2642 = vmatpush1.msra.mxu0 0.0
        %2643 = vmatprep.subr.mxu0 0.0
        %2644 = vmatpush1.msra.mxu0 0.0
        %2645 = vmatprep.subr.mxu0 0.0
        %2646 = vmatpush1.msra.mxu0 0.0
        %2647 = vmatprep.subr.mxu0 0.0
        %2648 = vmatpush1.msra.mxu0 0.0
        %2649 = vmatprep.subr.mxu0 0.0
        %2650 = vmatpush1.msra.mxu0 0.0
        %2651 = vmatprep.subr.mxu0 0.0
        %2652 = vmatpush1.msra.mxu0 0.0
        %2653 = vmatprep.subr.mxu0 0.0
        %2654 = vmatpush1.msra.mxu0 0.0
        %2655 = vmatprep.subr.mxu0 0.0
        %2656 = vmatpush1.msra.mxu0 0.0
        %2657 = vmatprep.subr.mxu0 0.0
        %2658 = vmatpush1.msra.mxu0 0.0
        %2659 = vmatprep.subr.mxu0 0.0
        %2660 = vmatpush1.msra.mxu0 0.0
        %2661 = vmatprep.subr.mxu0 0.0
        %2662 = vmatpush1.msra.mxu0 0.0
        %2663 = vmatprep.subr.mxu0 0.0
        %2664 = vmatpush1.msra.mxu0 0.0
        %2665 = vmatprep.subr.mxu0 0.0
        %2666 = vmatpush1.msra.mxu0 0.0
        %2667 = vmatprep.subr.mxu0 0.0
        %2668 = vmatpush1.msra.mxu0 0.0
        %2669 = vmatprep.subr.mxu0 0.0
        %2670 = vmatpush1.msra.mxu0 0.0
        %2671 = vmatprep.subr.mxu0 0.0
        %2672 = vmatpush1.msra.mxu0 0.0
        %2673 = vmatprep.subr.mxu0 0.0
        %2674 = vmatpush1.msra.mxu0 0.0
        %2675 = vmatprep.subr.mxu0 0.0
        %2676 = vmatpush1.msra.mxu0 0.0
        %2677 = vmatprep.subr.mxu0 0.0
        %2678 = vmatpush1.msra.mxu0 0.0
        %2679 = vmatprep.subr.mxu0 0.0
        %2680 = vmatpush1.msra.mxu0 0.0
        %2681 = vmatprep.subr.mxu0 0.0
        %2682 = vmatpush1.msra.mxu0 0.0
        %2683 = vmatprep.subr.mxu0 0.0
        %2684 = vmatpush1.msra.mxu0 0.0
        %2685 = vmatprep.subr.mxu0 0.0
        %2686 = vmatpush1.msra.mxu0 0.0
        %2687 = vmatprep.mubr.f32.mxu0 0.0
        %2688 = vmatmul.mubr.f32.gmra.mrb[0].mxu0 %v2621
        %v2689 = vpop.f32.mrb[0].mxu0
        %v2690 = vadd.f32 0.0, %v2689
        %v2691 = vpop.f32.mrb[0].mxu0
        %2692 = vdwg.mxu0
        %v2694 = vsel %vm1179, %v2476, 0
        %2696 = vmatprep.subr.mxu0 0.0
        %2697 = vmatpush1.msra.mxu0 %v2573
        %2698 = vmatprep.subr.mxu0 0.0
        %2699 = vmatpush1.msra.mxu0 0.0
        %2700 = vmatprep.subr.mxu0 0.0
        %2701 = vmatpush1.msra.mxu0 0.0
        %2702 = vmatprep.subr.mxu0 0.0
        %2703 = vmatpush1.msra.mxu0 0.0
        %2704 = vmatprep.subr.mxu0 0.0
        %2705 = vmatpush1.msra.mxu0 0.0
        %2706 = vmatprep.subr.mxu0 0.0
        %2707 = vmatpush1.msra.mxu0 0.0
        %2708 = vmatprep.subr.mxu0 0.0
        %2709 = vmatpush1.msra.mxu0 0.0
        %2710 = vmatprep.subr.mxu0 0.0
        %2711 = vmatpush1.msra.mxu0 0.0
        %2712 = vmatprep.subr.mxu0 0.0
        %2713 = vmatpush1.msra.mxu0 0.0
        %2714 = vmatprep.subr.mxu0 0.0
        %2715 = vmatpush1.msra.mxu0 0.0
        %2716 = vmatprep.subr.mxu0 0.0
        %2717 = vmatpush1.msra.mxu0 0.0
        %2718 = vmatprep.subr.mxu0 0.0
        %2719 = vmatpush1.msra.mxu0 0.0
        %2720 = vmatprep.subr.mxu0 0.0
        %2721 = vmatpush1.msra.mxu0 0.0
        %2722 = vmatprep.subr.mxu0 0.0
        %2723 = vmatpush1.msra.mxu0 0.0
        %2724 = vmatprep.subr.mxu0 0.0
        %2725 = vmatpush1.msra.mxu0 0.0
        %2726 = vmatprep.subr.mxu0 0.0
        %2727 = vmatpush1.msra.mxu0 0.0
        %2728 = vmatprep.subr.mxu0 0.0
        %2729 = vmatpush1.msra.mxu0 0.0
        %2730 = vmatprep.subr.mxu0 0.0
        %2731 = vmatpush1.msra.mxu0 0.0
        %2732 = vmatprep.subr.mxu0 0.0
        %2733 = vmatpush1.msra.mxu0 0.0
        %2734 = vmatprep.subr.mxu0 0.0
        %2735 = vmatpush1.msra.mxu0 0.0
        %2736 = vmatprep.subr.mxu0 0.0
        %2737 = vmatpush1.msra.mxu0 0.0
        %2738 = vmatprep.subr.mxu0 0.0
        %2739 = vmatpush1.msra.mxu0 0.0
        %2740 = vmatprep.subr.mxu0 0.0
        %2741 = vmatpush1.msra.mxu0 0.0
        %2742 = vmatprep.subr.mxu0 0.0
        %2743 = vmatpush1.msra.mxu0 0.0
        %2744 = vmatprep.subr.mxu0 0.0
        %2745 = vmatpush1.msra.mxu0 0.0
        %2746 = vmatprep.subr.mxu0 0.0
        %2747 = vmatpush1.msra.mxu0 0.0
        %2748 = vmatprep.subr.mxu0 0.0
        %2749 = vmatpush1.msra.mxu0 0.0
        %2750 = vmatprep.subr.mxu0 0.0
        %2751 = vmatpush1.msra.mxu0 0.0
        %2752 = vmatprep.subr.mxu0 0.0
        %2753 = vmatpush1.msra.mxu0 0.0
        %2754 = vmatprep.subr.mxu0 0.0
        %2755 = vmatpush1.msra.mxu0 0.0
        %2756 = vmatprep.subr.mxu0 0.0
        %2757 = vmatpush1.msra.mxu0 0.0
        %2758 = vmatprep.subr.mxu0 0.0
        %2759 = vmatpush1.msra.mxu0 0.0
        %2760 = vmatprep.mubr.f32.mxu0 0.0
        %2761 = vmatmul.mubr.f32.gmra.mrb[0].mxu0 %v2694
        %v2762 = vpop.f32.mrb[0].mxu0
        %v2763 = vadd.f32 0.0, %v2762
        %v2764 = vpop.f32.mrb[0].mxu0
        %2765 = vdwg.mxu0
        %v2767 = vsel %vm1179, %v2508, 0
        %2769 = vmatprep.subr.mxu0 0.0
        %2770 = vmatpush1.msra.mxu0 %v2574
        %2771 = vmatprep.subr.mxu0 0.0
        %2772 = vmatpush1.msra.mxu0 0.0
        %2773 = vmatprep.subr.mxu0 0.0
        %2774 = vmatpush1.msra.mxu0 0.0
        %2775 = vmatprep.subr.mxu0 0.0
        %2776 = vmatpush1.msra.mxu0 0.0
        %2777 = vmatprep.subr.mxu0 0.0
        %2778 = vmatpush1.msra.mxu0 0.0
        %2779 = vmatprep.subr.mxu0 0.0
        %2780 = vmatpush1.msra.mxu0 0.0
        %2781 = vmatprep.subr.mxu0 0.0
        %2782 = vmatpush1.msra.mxu0 0.0
        %2783 = vmatprep.subr.mxu0 0.0
        %2784 = vmatpush1.msra.mxu0 0.0
        %2785 = vmatprep.subr.mxu0 0.0
        %2786 = vmatpush1.msra.mxu0 0.0
        %2787 = vmatprep.subr.mxu0 0.0
        %2788 = vmatpush1.msra.mxu0 0.0
        %2789 = vmatprep.subr.mxu0 0.0
        %2790 = vmatpush1.msra.mxu0 0.0
        %2791 = vmatprep.subr.mxu0 0.0
        %2792 = vmatpush1.msra.mxu0 0.0
        %2793 = vmatprep.subr.mxu0 0.0
        %2794 = vmatpush1.msra.mxu0 0.0
        %2795 = vmatprep.subr.mxu0 0.0
        %2796 = vmatpush1.msra.mxu0 0.0
        %2797 = vmatprep.subr.mxu0 0.0
        %2798 = vmatpush1.msra.mxu0 0.0
        %2799 = vmatprep.subr.mxu0 0.0
        %2800 = vmatpush1.msra.mxu0 0.0
        %2801 = vmatprep.subr.mxu0 0.0
        %2802 = vmatpush1.msra.mxu0 0.0
        %2803 = vmatprep.subr.mxu0 0.0
        %2804 = vmatpush1.msra.mxu0 0.0
        %2805 = vmatprep.subr.mxu0 0.0
        %2806 = vmatpush1.msra.mxu0 0.0
        %2807 = vmatprep.subr.mxu0 0.0
        %2808 = vmatpush1.msra.mxu0 0.0
        %2809 = vmatprep.subr.mxu0 0.0
        %2810 = vmatpush1.msra.mxu0 0.0
        %2811 = vmatprep.subr.mxu0 0.0
        %2812 = vmatpush1.msra.mxu0 0.0
        %2813 = vmatprep.subr.mxu0 0.0
        %2814 = vmatpush1.msra.mxu0 0.0
        %2815 = vmatprep.subr.mxu0 0.0
        %2816 = vmatpush1.msra.mxu0 0.0
        %2817 = vmatprep.subr.mxu0 0.0
        %2818 = vmatpush1.msra.mxu0 0.0
        %2819 = vmatprep.subr.mxu0 0.0
        %2820 = vmatpush1.msra.mxu0 0.0
        %2821 = vmatprep.subr.mxu0 0.0
        %2822 = vmatpush1.msra.mxu0 0.0
        %2823 = vmatprep.subr.mxu0 0.0
        %2824 = vmatpush1.msra.mxu0 0.0
        %2825 = vmatprep.subr.mxu0 0.0
        %2826 = vmatpush1.msra.mxu0 0.0
        %2827 = vmatprep.subr.mxu0 0.0
        %2828 = vmatpush1.msra.mxu0 0.0
        %2829 = vmatprep.subr.mxu0 0.0
        %2830 = vmatpush1.msra.mxu0 0.0
        %2831 = vmatprep.subr.mxu0 0.0
        %2832 = vmatpush1.msra.mxu0 0.0
        %2833 = vmatprep.mubr.f32.mxu0 0.0
        %2834 = vmatmul.mubr.f32.gmra.mrb[0].mxu0 %v2767
        %v2835 = vpop.f32.mrb[0].mxu0
        %v2836 = vadd.f32 0.0, %v2835
        %v2837 = vpop.f32.mrb[0].mxu0
        %2838 = vdwg.mxu0
        %v2840 = vsel %vm1179, %v2540, 0
        %2842 = vmatprep.subr.mxu0 0.0
        %2843 = vmatpush1.msra.mxu0 %v2575
        %2844 = vmatprep.subr.mxu0 0.0
        %2845 = vmatpush1.msra.mxu0 0.0
        %2846 = vmatprep.subr.mxu0 0.0
        %2847 = vmatpush1.msra.mxu0 0.0
        %2848 = vmatprep.subr.mxu0 0.0
        %2849 = vmatpush1.msra.mxu0 0.0
        %2850 = vmatprep.subr.mxu0 0.0
        %2851 = vmatpush1.msra.mxu0 0.0
        %2852 = vmatprep.subr.mxu0 0.0
        %2853 = vmatpush1.msra.mxu0 0.0
        %2854 = vmatprep.subr.mxu0 0.0
        %2855 = vmatpush1.msra.mxu0 0.0
        %2856 = vmatprep.subr.mxu0 0.0
        %2857 = vmatpush1.msra.mxu0 0.0
        %2858 = vmatprep.subr.mxu0 0.0
        %2859 = vmatpush1.msra.mxu0 0.0
        %2860 = vmatprep.subr.mxu0 0.0
        %2861 = vmatpush1.msra.mxu0 0.0
        %2862 = vmatprep.subr.mxu0 0.0
        %2863 = vmatpush1.msra.mxu0 0.0
        %2864 = vmatprep.subr.mxu0 0.0
        %2865 = vmatpush1.msra.mxu0 0.0
        %2866 = vmatprep.subr.mxu0 0.0
        %2867 = vmatpush1.msra.mxu0 0.0
        %2868 = vmatprep.subr.mxu0 0.0
        %2869 = vmatpush1.msra.mxu0 0.0
        %2870 = vmatprep.subr.mxu0 0.0
        %2871 = vmatpush1.msra.mxu0 0.0
        %2872 = vmatprep.subr.mxu0 0.0
        %2873 = vmatpush1.msra.mxu0 0.0
        %2874 = vmatprep.subr.mxu0 0.0
        %2875 = vmatpush1.msra.mxu0 0.0
        %2876 = vmatprep.subr.mxu0 0.0
        %2877 = vmatpush1.msra.mxu0 0.0
        %2878 = vmatprep.subr.mxu0 0.0
        %2879 = vmatpush1.msra.mxu0 0.0
        %2880 = vmatprep.subr.mxu0 0.0
        %2881 = vmatpush1.msra.mxu0 0.0
        %2882 = vmatprep.subr.mxu0 0.0
        %2883 = vmatpush1.msra.mxu0 0.0
        %2884 = vmatprep.subr.mxu0 0.0
        %2885 = vmatpush1.msra.mxu0 0.0
        %2886 = vmatprep.subr.mxu0 0.0
        %2887 = vmatpush1.msra.mxu0 0.0
        %2888 = vmatprep.subr.mxu0 0.0
        %2889 = vmatpush1.msra.mxu0 0.0
        %2890 = vmatprep.subr.mxu0 0.0
        %2891 = vmatpush1.msra.mxu0 0.0
        %2892 = vmatprep.subr.mxu0 0.0
        %2893 = vmatpush1.msra.mxu0 0.0
        %2894 = vmatprep.subr.mxu0 0.0
        %2895 = vmatpush1.msra.mxu0 0.0
        %2896 = vmatprep.subr.mxu0 0.0
        %2897 = vmatpush1.msra.mxu0 0.0
        %2898 = vmatprep.subr.mxu0 0.0
        %2899 = vmatpush1.msra.mxu0 0.0
        %2900 = vmatprep.subr.mxu0 0.0
        %2901 = vmatpush1.msra.mxu0 0.0
        %2902 = vmatprep.subr.mxu0 0.0
        %2903 = vmatpush1.msra.mxu0 0.0
        %2904 = vmatprep.subr.mxu0 0.0
        %2905 = vmatpush1.msra.mxu0 0.0
        %2906 = vmatprep.mubr.f32.mxu0 0.0
        %2907 = vmatmul.mubr.f32.gmra.mrb[0].mxu0 %v2840
        %v2908 = vpop.f32.mrb[0].mxu0
        %v2909 = vadd.f32 0.0, %v2908
        %v2910 = vpop.f32.mrb[0].mxu0
        %2911 = vdwg.mxu0
        %v2912 = vmul.f32 %v2690, 0.35355338
        %v2913 = vmul.f32 %v2763, 0.35355338
        %v2914 = vmul.f32 %v2836, 0.35355338
        %v2915 = vmul.f32 %v2909, 0.35355338
        %v2916 = vadd.f32 %v2912, %v702
        %v2917 = vadd.f32 %v2913, %v702
        %v2918 = vadd.f32 %v2914, %v702
        %v2919 = vadd.f32 %v2915, %v702
        %v2920 = vsel %vm1179, %v2916, -inf
        %2921 = vmax.xlane.f32.xlu0 %v2920
        %v2922 = vpop.xlane.xlu0 %2921
        %v2923 = vsel %vm1179, %v2917, -inf
        %2924 = vmax.xlane.f32.xlu0 %v2923
        %v2925 = vpop.xlane.xlu0 %2924
        %v2926 = vsel %vm1179, %v2918, -inf
        %2927 = vmax.xlane.f32.xlu0 %v2926
        %v2928 = vpop.xlane.xlu0 %2927
        %v2929 = vsel %vm1179, %v2919, -inf
        %2930 = vmax.xlane.f32.xlu0 %v2929
        %v2931 = vpop.xlane.xlu0 %2930
        %v2932 = vsub.f32 %v2916, %v2922
        %v2933 = vsub.f32 %v2917, %v2925
        %v2934 = vsub.f32 %v2918, %v2928
        %v2935 = vsub.f32 %v2919, %v2931
        %v2936 = vmul.f32 %v2932, 1.442695
        %v2937 = vpow.pop %v2936
        %v2938 = vmul.f32 %v2933, 1.442695
        %v2939 = vpow.pop %v2938
        %v2940 = vmul.f32 %v2934, 1.442695
        %v2941 = vpow.pop %v2940
        %v2942 = vmul.f32 %v2935, 1.442695
        %v2943 = vpow.pop %v2942
        %v2944 = vsel %vm1179, %v2937, 0.0
        %2945 = vadd.xlane.f32.xlu0 %v2944
        %v2946 = vpop.xlane.xlu0 %2945
        %v2947 = vsel %vm1179, %v2939, 0.0
        %2948 = vadd.xlane.f32.xlu0 %v2947
        %v2949 = vpop.xlane.xlu0 %2948
        %v2950 = vsel %vm1179, %v2941, 0.0
        %2951 = vadd.xlane.f32.xlu0 %v2950
        %v2952 = vpop.xlane.xlu0 %2951
        %v2953 = vsel %vm1179, %v2943, 0.0
        %2954 = vadd.xlane.f32.xlu0 %v2953
        %v2955 = vpop.xlane.xlu0 %2954
        %v2956 = vrcp.pop %v2946
        %v2957 = vmul.f32 %v2937, %v2956
        %v2958 = vrcp.pop %v2949
        %v2959 = vmul.f32 %v2939, %v2958
        %v2960 = vrcp.pop %v2952
        %v2961 = vmul.f32 %v2941, %v2960
        %v2962 = vrcp.pop %v2955
        %v2963 = vmul.f32 %v2943, %v2962
        %v2965 = vsel %vm1179, %v2604, 0
        %v2968 = vsel %vm1179, %v2957, 0
        %2970 = vmatprep.subr.mxu0 0.0
        %2971 = vmatpush1.xpose.msra.mxu0 %v2968
        %2972 = vmatprep.subr.mxu0 0.0
        %2973 = vmatpush1.xpose.msra.mxu0 0.0
        %2974 = vmatprep.subr.mxu0 0.0
        %2975 = vmatpush1.xpose.msra.mxu0 0.0
        %2976 = vmatprep.subr.mxu0 0.0
        %2977 = vmatpush1.xpose.msra.mxu0 0.0
        %2978 = vmatprep.subr.mxu0 0.0
        %2979 = vmatpush1.xpose.msra.mxu0 0.0
        %2980 = vmatprep.subr.mxu0 0.0
        %2981 = vmatpush1.xpose.msra.mxu0 0.0
        %2982 = vmatprep.subr.mxu0 0.0
        %2983 = vmatpush1.xpose.msra.mxu0 0.0
        %2984 = vmatprep.subr.mxu0 0.0
        %2985 = vmatpush1.xpose.msra.mxu0 0.0
        %2986 = vmatprep.subr.mxu0 0.0
        %2987 = vmatpush1.xpose.msra.mxu0 0.0
        %2988 = vmatprep.subr.mxu0 0.0
        %2989 = vmatpush1.xpose.msra.mxu0 0.0
        %2990 = vmatprep.subr.mxu0 0.0
        %2991 = vmatpush1.xpose.msra.mxu0 0.0
        %2992 = vmatprep.subr.mxu0 0.0
        %2993 = vmatpush1.xpose.msra.mxu0 0.0
        %2994 = vmatprep.subr.mxu0 0.0
        %2995 = vmatpush1.xpose.msra.mxu0 0.0
        %2996 = vmatprep.subr.mxu0 0.0
        %2997 = vmatpush1.xpose.msra.mxu0 0.0
        %2998 = vmatprep.subr.mxu0 0.0
        %2999 = vmatpush1.xpose.msra.mxu0 0.0
        %3000 = vmatprep.subr.mxu0 0.0
        %3001 = vmatpush1.xpose.msra.mxu0 0.0
        %3002 = vmatprep.subr.mxu0 0.0
        %3003 = vmatpush1.xpose.msra.mxu0 0.0
        %3004 = vmatprep.subr.mxu0 0.0
        %3005 = vmatpush1.xpose.msra.mxu0 0.0
        %3006 = vmatprep.subr.mxu0 0.0
        %3007 = vmatpush1.xpose.msra.mxu0 0.0
        %3008 = vmatprep.subr.mxu0 0.0
        %3009 = vmatpush1.xpose.msra.mxu0 0.0
        %3010 = vmatprep.subr.mxu0 0.0
        %3011 = vmatpush1.xpose.msra.mxu0 0.0
        %3012 = vmatprep.subr.mxu0 0.0
        %3013 = vmatpush1.xpose.msra.mxu0 0.0
        %3014 = vmatprep.subr.mxu0 0.0
        %3015 = vmatpush1.xpose.msra.mxu0 0.0
        %3016 = vmatprep.subr.mxu0 0.0
        %3017 = vmatpush1.xpose.msra.mxu0 0.0
        %3018 = vmatprep.subr.mxu0 0.0
        %3019 = vmatpush1.xpose.msra.mxu0 0.0
        %3020 = vmatprep.subr.mxu0 0.0
        %3021 = vmatpush1.xpose.msra.mxu0 0.0
        %3022 = vmatprep.subr.mxu0 0.0
        %3023 = vmatpush1.xpose.msra.mxu0 0.0
        %3024 = vmatprep.subr.mxu0 0.0
        %3025 = vmatpush1.xpose.msra.mxu0 0.0
        %3026 = vmatprep.subr.mxu0 0.0
        %3027 = vmatpush1.xpose.msra.mxu0 0.0
        %3028 = vmatprep.subr.mxu0 0.0
        %3029 = vmatpush1.xpose.msra.mxu0 0.0
        %3030 = vmatprep.subr.mxu0 0.0
        %3031 = vmatpush1.xpose.msra.mxu0 0.0
        %3032 = vmatprep.subr.mxu0 0.0
        %3033 = vmatpush1.xpose.msra.mxu0 0.0
        %3034 = vmatprep.mubr.f32.mxu0 0.0
        %3035 = vmatmul.mubr.f32.gmra.mrb[0].mxu0 %v2965
        %v3036 = vpop.f32.mrb[0].mxu0
        %v3037 = vadd.f32 0.0, %v3036
        %v3038 = vpop.f32.mrb[0].mxu0
        %3039 = vdwg.mxu0
        %v3041 = vsel %vm1179, %v2605, 0
        %v3044 = vsel %vm1179, %v2959, 0
        %3046 = vmatprep.subr.mxu0 0.0
        %3047 = vmatpush1.xpose.msra.mxu0 %v3044
        %3048 = vmatprep.subr.mxu0 0.0
        %3049 = vmatpush1.xpose.msra.mxu0 0.0
        %3050 = vmatprep.subr.mxu0 0.0
        %3051 = vmatpush1.xpose.msra.mxu0 0.0
        %3052 = vmatprep.subr.mxu0 0.0
        %3053 = vmatpush1.xpose.msra.mxu0 0.0
        %3054 = vmatprep.subr.mxu0 0.0
        %3055 = vmatpush1.xpose.msra.mxu0 0.0
        %3056 = vmatprep.subr.mxu0 0.0
        %3057 = vmatpush1.xpose.msra.mxu0 0.0
        %3058 = vmatprep.subr.mxu0 0.0
        %3059 = vmatpush1.xpose.msra.mxu0 0.0
        %3060 = vmatprep.subr.mxu0 0.0
        %3061 = vmatpush1.xpose.msra.mxu0 0.0
        %3062 = vmatprep.subr.mxu0 0.0
        %3063 = vmatpush1.xpose.msra.mxu0 0.0
        %3064 = vmatprep.subr.mxu0 0.0
        %3065 = vmatpush1.xpose.msra.mxu0 0.0
        %3066 = vmatprep.subr.mxu0 0.0
        %3067 = vmatpush1.xpose.msra.mxu0 0.0
        %3068 = vmatprep.subr.mxu0 0.0
        %3069 = vmatpush1.xpose.msra.mxu0 0.0
        %3070 = vmatprep.subr.mxu0 0.0
        %3071 = vmatpush1.xpose.msra.mxu0 0.0
        %3072 = vmatprep.subr.mxu0 0.0
        %3073 = vmatpush1.xpose.msra.mxu0 0.0
        %3074 = vmatprep.subr.mxu0 0.0
        %3075 = vmatpush1.xpose.msra.mxu0 0.0
        %3076 = vmatprep.subr.mxu0 0.0
        %3077 = vmatpush1.xpose.msra.mxu0 0.0
        %3078 = vmatprep.subr.mxu0 0.0
        %3079 = vmatpush1.xpose.msra.mxu0 0.0
        %3080 = vmatprep.subr.mxu0 0.0
        %3081 = vmatpush1.xpose.msra.mxu0 0.0
        %3082 = vmatprep.subr.mxu0 0.0
        %3083 = vmatpush1.xpose.msra.mxu0 0.0
        %3084 = vmatprep.subr.mxu0 0.0
        %3085 = vmatpush1.xpose.msra.mxu0 0.0
        %3086 = vmatprep.subr.mxu0 0.0
        %3087 = vmatpush1.xpose.msra.mxu0 0.0
        %3088 = vmatprep.subr.mxu0 0.0
        %3089 = vmatpush1.xpose.msra.mxu0 0.0
        %3090 = vmatprep.subr.mxu0 0.0
        %3091 = vmatpush1.xpose.msra.mxu0 0.0
        %3092 = vmatprep.subr.mxu0 0.0
        %3093 = vmatpush1.xpose.msra.mxu0 0.0
        %3094 = vmatprep.subr.mxu0 0.0
        %3095 = vmatpush1.xpose.msra.mxu0 0.0
        %3096 = vmatprep.subr.mxu0 0.0
        %3097 = vmatpush1.xpose.msra.mxu0 0.0
        %3098 = vmatprep.subr.mxu0 0.0
        %3099 = vmatpush1.xpose.msra.mxu0 0.0
        %3100 = vmatprep.subr.mxu0 0.0
        %3101 = vmatpush1.xpose.msra.mxu0 0.0
        %3102 = vmatprep.subr.mxu0 0.0
        %3103 = vmatpush1.xpose.msra.mxu0 0.0
        %3104 = vmatprep.subr.mxu0 0.0
        %3105 = vmatpush1.xpose.msra.mxu0 0.0
        %3106 = vmatprep.subr.mxu0 0.0
        %3107 = vmatpush1.xpose.msra.mxu0 0.0
        %3108 = vmatprep.subr.mxu0 0.0
        %3109 = vmatpush1.xpose.msra.mxu0 0.0
        %3110 = vmatprep.mubr.f32.mxu0 0.0
        %3111 = vmatmul.mubr.f32.gmra.mrb[0].mxu0 %v3041
        %v3112 = vpop.f32.mrb[0].mxu0
        %v3113 = vadd.f32 0.0, %v3112
        %v3114 = vpop.f32.mrb[0].mxu0
        %3115 = vdwg.mxu0
        %v3117 = vsel %vm1179, %v2606, 0
        %v3120 = vsel %vm1179, %v2961, 0
        %3122 = vmatprep.subr.mxu0 0.0
        %3123 = vmatpush1.xpose.msra.mxu0 %v3120
        %3124 = vmatprep.subr.mxu0 0.0
        %3125 = vmatpush1.xpose.msra.mxu0 0.0
        %3126 = vmatprep.subr.mxu0 0.0
        %3127 = vmatpush1.xpose.msra.mxu0 0.0
        %3128 = vmatprep.subr.mxu0 0.0
        %3129 = vmatpush1.xpose.msra.mxu0 0.0
        %3130 = vmatprep.subr.mxu0 0.0
        %3131 = vmatpush1.xpose.msra.mxu0 0.0
        %3132 = vmatprep.subr.mxu0 0.0
        %3133 = vmatpush1.xpose.msra.mxu0 0.0
        %3134 = vmatprep.subr.mxu0 0.0
        %3135 = vmatpush1.xpose.msra.mxu0 0.0
        %3136 = vmatprep.subr.mxu0 0.0
        %3137 = vmatpush1.xpose.msra.mxu0 0.0
        %3138 = vmatprep.subr.mxu0 0.0
        %3139 = vmatpush1.xpose.msra.mxu0 0.0
        %3140 = vmatprep.subr.mxu0 0.0
        %3141 = vmatpush1.xpose.msra.mxu0 0.0
        %3142 = vmatprep.subr.mxu0 0.0
        %3143 = vmatpush1.xpose.msra.mxu0 0.0
        %3144 = vmatprep.subr.mxu0 0.0
        %3145 = vmatpush1.xpose.msra.mxu0 0.0
        %3146 = vmatprep.subr.mxu0 0.0
        %3147 = vmatpush1.xpose.msra.mxu0 0.0
        %3148 = vmatprep.subr.mxu0 0.0
        %3149 = vmatpush1.xpose.msra.mxu0 0.0
        %3150 = vmatprep.subr.mxu0 0.0
        %3151 = vmatpush1.xpose.msra.mxu0 0.0
        %3152 = vmatprep.subr.mxu0 0.0
        %3153 = vmatpush1.xpose.msra.mxu0 0.0
        %3154 = vmatprep.subr.mxu0 0.0
        %3155 = vmatpush1.xpose.msra.mxu0 0.0
        %3156 = vmatprep.subr.mxu0 0.0
        %3157 = vmatpush1.xpose.msra.mxu0 0.0
        %3158 = vmatprep.subr.mxu0 0.0
        %3159 = vmatpush1.xpose.msra.mxu0 0.0
        %3160 = vmatprep.subr.mxu0 0.0
        %3161 = vmatpush1.xpose.msra.mxu0 0.0
        %3162 = vmatprep.subr.mxu0 0.0
        %3163 = vmatpush1.xpose.msra.mxu0 0.0
        %3164 = vmatprep.subr.mxu0 0.0
        %3165 = vmatpush1.xpose.msra.mxu0 0.0
        %3166 = vmatprep.subr.mxu0 0.0
        %3167 = vmatpush1.xpose.msra.mxu0 0.0
        %3168 = vmatprep.subr.mxu0 0.0
        %3169 = vmatpush1.xpose.msra.mxu0 0.0
        %3170 = vmatprep.subr.mxu0 0.0
        %3171 = vmatpush1.xpose.msra.mxu0 0.0
        %3172 = vmatprep.subr.mxu0 0.0
        %3173 = vmatpush1.xpose.msra.mxu0 0.0
        %3174 = vmatprep.subr.mxu0 0.0
        %3175 = vmatpush1.xpose.msra.mxu0 0.0
        %3176 = vmatprep.subr.mxu0 0.0
        %3177 = vmatpush1.xpose.msra.mxu0 0.0
        %3178 = vmatprep.subr.mxu0 0.0
        %3179 = vmatpush1.xpose.msra.mxu0 0.0
        %3180 = vmatprep.subr.mxu0 0.0
        %3181 = vmatpush1.xpose.msra.mxu0 0.0
        %3182 = vmatprep.subr.mxu0 0.0
        %3183 = vmatpush1.xpose.msra.mxu0 0.0
        %3184 = vmatprep.subr.mxu0 0.0
        %3185 = vmatpush1.xpose.msra.mxu0 0.0
        %3186 = vmatprep.mubr.f32.mxu0 0.0
        %3187 = vmatmul.mubr.f32.gmra.mrb[0].mxu0 %v3117
        %v3188 = vpop.f32.mrb[0].mxu0
        %v3189 = vadd.f32 0.0, %v3188
        %v3190 = vpop.f32.mrb[0].mxu0
        %3191 = vdwg.mxu0
        %v3193 = vsel %vm1179, %v2607, 0
        %v3196 = vsel %vm1179, %v2963, 0
        %3198 = vmatprep.subr.mxu0 0.0
        %3199 = vmatpush1.xpose.msra.mxu0 %v3196
        %3200 = vmatprep.subr.mxu0 0.0
        %3201 = vmatpush1.xpose.msra.mxu0 0.0
        %3202 = vmatprep.subr.mxu0 0.0
        %3203 = vmatpush1.xpose.msra.mxu0 0.0
        %3204 = vmatprep.subr.mxu0 0.0
        %3205 = vmatpush1.xpose.msra.mxu0 0.0
        %3206 = vmatprep.subr.mxu0 0.0
        %3207 = vmatpush1.xpose.msra.mxu0 0.0
        %3208 = vmatprep.subr.mxu0 0.0
        %3209 = vmatpush1.xpose.msra.mxu0 0.0
        %3210 = vmatprep.subr.mxu0 0.0
        %3211 = vmatpush1.xpose.msra.mxu0 0.0
        %3212 = vmatprep.subr.mxu0 0.0
        %3213 = vmatpush1.xpose.msra.mxu0 0.0
        %3214 = vmatprep.subr.mxu0 0.0
        %3215 = vmatpush1.xpose.msra.mxu0 0.0
        %3216 = vmatprep.subr.mxu0 0.0
        %3217 = vmatpush1.xpose.msra.mxu0 0.0
        %3218 = vmatprep.subr.mxu0 0.0
        %3219 = vmatpush1.xpose.msra.mxu0 0.0
        %3220 = vmatprep.subr.mxu0 0.0
        %3221 = vmatpush1.xpose.msra.mxu0 0.0
        %3222 = vmatprep.subr.mxu0 0.0
        %3223 = vmatpush1.xpose.msra.mxu0 0.0
        %3224 = vmatprep.subr.mxu0 0.0
        %3225 = vmatpush1.xpose.msra.mxu0 0.0
        %3226 = vmatprep.subr.mxu0 0.0
        %3227 = vmatpush1.xpose.msra.mxu0 0.0
        %3228 = vmatprep.subr.mxu0 0.0
        %3229 = vmatpush1.xpose.msra.mxu0 0.0
        %3230 = vmatprep.subr.mxu0 0.0
        %3231 = vmatpush1.xpose.msra.mxu0 0.0
        %3232 = vmatprep.subr.mxu0 0.0
        %3233 = vmatpush1.xpose.msra.mxu0 0.0
        %3234 = vmatprep.subr.mxu0 0.0
        %3235 = vmatpush1.xpose.msra.mxu0 0.0
        %3236 = vmatprep.subr.mxu0 0.0
        %3237 = vmatpush1.xpose.msra.mxu0 0.0
        %3238 = vmatprep.subr.mxu0 0.0
        %3239 = vmatpush1.xpose.msra.mxu0 0.0
        %3240 = vmatprep.subr.mxu0 0.0
        %3241 = vmatpush1.xpose.msra.mxu0 0.0
        %3242 = vmatprep.subr.mxu0 0.0
        %3243 = vmatpush1.xpose.msra.mxu0 0.0
        %3244 = vmatprep.subr.mxu0 0.0
        %3245 = vmatpush1.xpose.msra.mxu0 0.0
        %3246 = vmatprep.subr.mxu0 0.0
        %3247 = vmatpush1.xpose.msra.mxu0 0.0
        %3248 = vmatprep.subr.mxu0 0.0
        %3249 = vmatpush1.xpose.msra.mxu0 0.0
        %3250 = vmatprep.subr.mxu0 0.0
        %3251 = vmatpush1.xpose.msra.mxu0 0.0
        %3252 = vmatprep.subr.mxu0 0.0
        %3253 = vmatpush1.xpose.msra.mxu0 0.0
        %3254 = vmatprep.subr.mxu0 0.0
        %3255 = vmatpush1.xpose.msra.mxu0 0.0
        %3256 = vmatprep.subr.mxu0 0.0
        %3257 = vmatpush1.xpose.msra.mxu0 0.0
        %3258 = vmatprep.subr.mxu0 0.0
        %3259 = vmatpush1.xpose.msra.mxu0 0.0
        %3260 = vmatprep.subr.mxu0 0.0
        %3261 = vmatpush1.xpose.msra.mxu0 0.0
        %3262 = vmatprep.mubr.f32.mxu0 0.0
        %3263 = vmatmul.mubr.f32.gmra.mrb[0].mxu0 %v3193
        %v3264 = vpop.f32.mrb[0].mxu0
        %v3265 = vadd.f32 0.0, %v3264
        %v3266 = vpop.f32.mrb[0].mxu0
        %3267 = vdwg.mxu0
        %3268 = vxpose.xlu0.b32.start [1/16] %v3037, 128
        %3269 = vxpose.xlu0.b32.cont [2/16] %v3113, 128
        %3270 = vxpose.xlu0.b32.cont [3/16] %v3189, 128
        %3271 = vxpose.xlu0.b32.cont [4/16] %v3265, 128
        %3272 = vxpose.xlu0.b32.cont [5/16] 0.0, 128
        %3273 = vxpose.xlu0.b32.cont [6/16] 0.0, 128
        %3274 = vxpose.xlu0.b32.cont [7/16] 0.0, 128
        %3275 = vxpose.xlu0.b32.cont [8/16] 0.0, 128
        %3276 = vxpose.xlu0.b32.cont [9/16] 0.0, 128
        %3277 = vxpose.xlu0.b32.cont [10/16] 0.0, 128
        %3278 = vxpose.xlu0.b32.cont [11/16] 0.0, 128
        %3279 = vxpose.xlu0.b32.cont [12/16] 0.0, 128
        %3280 = vxpose.xlu0.b32.cont [13/16] 0.0, 128
        %3281 = vxpose.xlu0.b32.cont [14/16] 0.0, 128
        %3282 = vxpose.xlu0.b32.cont [15/16] 0.0, 128
        %3283 = vxpose.xlu0.b32.end [16/16] 0.0, 128
        %v3284 = vpop.trf.xlu0
        %v3285 = vpop.trf.xlu0
        %v3286 = vpop.trf.xlu0
        %v3287 = vpop.trf.xlu0
        %v3288 = vpop.trf.xlu0
        %v3289 = vpop.trf.xlu0
        %v3290 = vpop.trf.xlu0
        %v3291 = vpop.trf.xlu0
        %v3292 = vpop.trf.xlu0
        %v3293 = vpop.trf.xlu0
        %v3294 = vpop.trf.xlu0
        %v3295 = vpop.trf.xlu0
        %v3296 = vpop.trf.xlu0
        %v3297 = vpop.trf.xlu0
        %v3298 = vpop.trf.xlu0
        %v3299 = vpop.trf.xlu0
        %s3300 = scalar_lea.vmem %s8, 32
        %v3301 = vld [vmem:[%s3300] sm:$0xff]
        %v3302 = vld [vmem:[%s3300 + $0x8] sm:$0xff]
        %v3303 = vld [vmem:[%s3300 + $0x10] sm:$0xff]
        %v3304 = vld [vmem:[%s3300 + $0x18] sm:$0xff]
        %v3305 = vld [vmem:[#allocation10 + $0x1] sm:$0x1]
        %v3306 = vlaneseq
        %v3307 = vshrl.u32 %v3306, 7
        %v3308 = vsub.s32 0, %v3307
        %v3309 = vrot.slane %v3305, %v3308
        %v3311 = vsel %vm705, %v3284, 0
        %3313 = vmatprep.subr.mxu0 0.0
        %3314 = vmatpush1.msra.mxu0 %v3301
        %3315 = vmatprep.subr.mxu0 0.0
        %3316 = vmatpush1.msra.mxu0 %v3302
        %3317 = vmatprep.subr.mxu0 0.0
        %3318 = vmatpush1.msra.mxu0 %v3303
        %3319 = vmatprep.subr.mxu0 0.0
        %3320 = vmatpush1.msra.mxu0 %v3304
        %3321 = vmatprep.subr.mxu0 0.0
        %3322 = vmatpush1.msra.mxu0 0.0
        %3323 = vmatprep.subr.mxu0 0.0
        %3324 = vmatpush1.msra.mxu0 0.0
        %3325 = vmatprep.subr.mxu0 0.0
        %3326 = vmatpush1.msra.mxu0 0.0
        %3327 = vmatprep.subr.mxu0 0.0
        %3328 = vmatpush1.msra.mxu0 0.0
        %3329 = vmatprep.subr.mxu0 0.0
        %3330 = vmatpush1.msra.mxu0 0.0
        %3331 = vmatprep.subr.mxu0 0.0
        %3332 = vmatpush1.msra.mxu0 0.0
        %3333 = vmatprep.subr.mxu0 0.0
        %3334 = vmatpush1.msra.mxu0 0.0
        %3335 = vmatprep.subr.mxu0 0.0
        %3336 = vmatpush1.msra.mxu0 0.0
        %3337 = vmatprep.subr.mxu0 0.0
        %3338 = vmatpush1.msra.mxu0 0.0
        %3339 = vmatprep.subr.mxu0 0.0
        %3340 = vmatpush1.msra.mxu0 0.0
        %3341 = vmatprep.subr.mxu0 0.0
        %3342 = vmatpush1.msra.mxu0 0.0
        %3343 = vmatprep.subr.mxu0 0.0
        %3344 = vmatpush1.msra.mxu0 0.0
        %3345 = vmatprep.subr.mxu0 0.0
        %3346 = vmatpush1.msra.mxu0 0.0
        %3347 = vmatprep.subr.mxu0 0.0
        %3348 = vmatpush1.msra.mxu0 0.0
        %3349 = vmatprep.subr.mxu0 0.0
        %3350 = vmatpush1.msra.mxu0 0.0
        %3351 = vmatprep.subr.mxu0 0.0
        %3352 = vmatpush1.msra.mxu0 0.0
        %3353 = vmatprep.subr.mxu0 0.0
        %3354 = vmatpush1.msra.mxu0 0.0
        %3355 = vmatprep.subr.mxu0 0.0
        %3356 = vmatpush1.msra.mxu0 0.0
        %3357 = vmatprep.subr.mxu0 0.0
        %3358 = vmatpush1.msra.mxu0 0.0
        %3359 = vmatprep.subr.mxu0 0.0
        %3360 = vmatpush1.msra.mxu0 0.0
        %3361 = vmatprep.subr.mxu0 0.0
        %3362 = vmatpush1.msra.mxu0 0.0
        %3363 = vmatprep.subr.mxu0 0.0
        %3364 = vmatpush1.msra.mxu0 0.0
        %3365 = vmatprep.subr.mxu0 0.0
        %3366 = vmatpush1.msra.mxu0 0.0
        %3367 = vmatprep.subr.mxu0 0.0
        %3368 = vmatpush1.msra.mxu0 0.0
        %3369 = vmatprep.subr.mxu0 0.0
        %3370 = vmatpush1.msra.mxu0 0.0
        %3371 = vmatprep.subr.mxu0 0.0
        %3372 = vmatpush1.msra.mxu0 0.0
        %3373 = vmatprep.subr.mxu0 0.0
        %3374 = vmatpush1.msra.mxu0 0.0
        %3375 = vmatprep.subr.mxu0 0.0
        %3376 = vmatpush1.msra.mxu0 0.0
        %3377 = vmatprep.mubr.f32.mxu0 0.0
        %3378 = vmatmul.mubr.f32.gmra.mrb[0].mxu0 %v3311
        %v3379 = vpop.f32.mrb[0].mxu0
        %v3380 = vadd.f32 %v3309, %v3379
        %v3381 = vpop.f32.mrb[0].mxu0
        %3382 = vdwg.mxu0
        %v3383 = vadd.f32 %v2142, %v3380
        %v3384 = vld [vmem:[#allocation11 + $0x1] sm:$0x1]
        %v3385 = vld [vmem:[%s11 + $0x1] sm:$0x1]
        %v3386 = vsel %vm705, %v3383, 0.0
        %3387 = vadd.xlane.f32.xlu0 %v3386
        %v3388 = vpop.xlane.xlu0 %3387
        %v3389 = vmul.f32 %v3388, %v709
        %v3390 = vsub.f32 %v3383, %v3389
        %v3391 = vmul.f32 %v3390, %v3390
        %v3392 = vsel %vm705, %v3391, 0.0
        %3393 = vadd.xlane.f32.xlu0 %v3392
        %v3394 = vpop.xlane.xlu0 %3393
        %v3395 = vmul.f32 %v3394, %v709
        %v3396 = vadd.f32 %v3395, 1e-05
        %v3397 = vrsqrt.pop %v3396
        %v3398 = vmul.f32 %v3390, %v3397
        %v3399 = vlaneseq
        %v3400 = vshrl.u32 %v3399, 7
        %v3401 = vsub.s32 0, %v3400
        %v3402 = vrot.slane %v3384, %v3401
        %v3403 = vmul.f32 %v3398, %v3402
        %v3404 = vlaneseq
        %v3405 = vshrl.u32 %v3404, 7
        %v3406 = vsub.s32 0, %v3405
        %v3407 = vrot.slane %v3385, %v3406
        %v3408 = vadd.f32 %v3403, %v3407
        %s3409 = scalar_lea.vmem %s12, 32
        %v3410 = vld [vmem:[%s3409] sm:$0xff]
        %v3411 = vld [vmem:[%s3409 + $0x8] sm:$0xff]
        %v3412 = vld [vmem:[%s3409 + $0x10] sm:$0xff]
        %v3413 = vld [vmem:[%s3409 + $0x18] sm:$0xff]
        %v3414 = vld [vmem:[%s13 + $0x1] sm:$0x1]
        %v3415 = vlaneseq
        %v3416 = vshrl.u32 %v3415, 7
        %v3417 = vsub.s32 0, %v3416
        %v3418 = vrot.slane %v3414, %v3417
        %v3420 = vsel %vm705, %v3408, 0
        %3422 = vmatprep.subr.mxu0 0.0
        %3423 = vmatpush1.msra.mxu0 %v3410
        %3424 = vmatprep.subr.mxu0 0.0
        %3425 = vmatpush1.msra.mxu0 %v3411
        %3426 = vmatprep.subr.mxu0 0.0
        %3427 = vmatpush1.msra.mxu0 %v3412
        %3428 = vmatprep.subr.mxu0 0.0
        %3429 = vmatpush1.msra.mxu0 %v3413
        %3430 = vmatprep.subr.mxu0 0.0
        %3431 = vmatpush1.msra.mxu0 0.0
        %3432 = vmatprep.subr.mxu0 0.0
        %3433 = vmatpush1.msra.mxu0 0.0
        %3434 = vmatprep.subr.mxu0 0.0
        %3435 = vmatpush1.msra.mxu0 0.0
        %3436 = vmatprep.subr.mxu0 0.0
        %3437 = vmatpush1.msra.mxu0 0.0
        %3438 = vmatprep.subr.mxu0 0.0
        %3439 = vmatpush1.msra.mxu0 0.0
        %3440 = vmatprep.subr.mxu0 0.0
        %3441 = vmatpush1.msra.mxu0 0.0
        %3442 = vmatprep.subr.mxu0 0.0
        %3443 = vmatpush1.msra.mxu0 0.0
        %3444 = vmatprep.subr.mxu0 0.0
        %3445 = vmatpush1.msra.mxu0 0.0
        %3446 = vmatprep.subr.mxu0 0.0
        %3447 = vmatpush1.msra.mxu0 0.0
        %3448 = vmatprep.subr.mxu0 0.0
        %3449 = vmatpush1.msra.mxu0 0.0
        %3450 = vmatprep.subr.mxu0 0.0
        %3451 = vmatpush1.msra.mxu0 0.0
        %3452 = vmatprep.subr.mxu0 0.0
        %3453 = vmatpush1.msra.mxu0 0.0
        %3454 = vmatprep.subr.mxu0 0.0
        %3455 = vmatpush1.msra.mxu0 0.0
        %3456 = vmatprep.subr.mxu0 0.0
        %3457 = vmatpush1.msra.mxu0 0.0
        %3458 = vmatprep.subr.mxu0 0.0
        %3459 = vmatpush1.msra.mxu0 0.0
        %3460 = vmatprep.subr.mxu0 0.0
        %3461 = vmatpush1.msra.mxu0 0.0
        %3462 = vmatprep.subr.mxu0 0.0
        %3463 = vmatpush1.msra.mxu0 0.0
        %3464 = vmatprep.subr.mxu0 0.0
        %3465 = vmatpush1.msra.mxu0 0.0
        %3466 = vmatprep.subr.mxu0 0.0
        %3467 = vmatpush1.msra.mxu0 0.0
        %3468 = vmatprep.subr.mxu0 0.0
        %3469 = vmatpush1.msra.mxu0 0.0
        %3470 = vmatprep.subr.mxu0 0.0
        %3471 = vmatpush1.msra.mxu0 0.0
        %3472 = vmatprep.subr.mxu0 0.0
        %3473 = vmatpush1.msra.mxu0 0.0
        %3474 = vmatprep.subr.mxu0 0.0
        %3475 = vmatpush1.msra.mxu0 0.0
        %3476 = vmatprep.subr.mxu0 0.0
        %3477 = vmatpush1.msra.mxu0 0.0
        %3478 = vmatprep.subr.mxu0 0.0
        %3479 = vmatpush1.msra.mxu0 0.0
        %3480 = vmatprep.subr.mxu0 0.0
        %3481 = vmatpush1.msra.mxu0 0.0
        %3482 = vmatprep.subr.mxu0 0.0
        %3483 = vmatpush1.msra.mxu0 0.0
        %3484 = vmatprep.subr.mxu0 0.0
        %3485 = vmatpush1.msra.mxu0 0.0
        %3486 = vmatprep.mubr.f32.mxu0 0.0
        %3487 = vmatmul.mubr.f32.gmra.mrb[0].mxu0 %v3420
        %v3488 = vpop.f32.mrb[0].mxu0
        %v3489 = vadd.f32 %v3418, %v3488
        %v3490 = vpop.f32.mrb[0].mxu0
        %3491 = vdwg.mxu0
        %v3492 = vmax.f32 %v3489, 0.0
        %s3493 = scalar_lea.vmem %s14, 128
        %v3494 = vld [vmem:[%s3493] sm:$0xff]
        %v3495 = vld [vmem:[%s3493 + $0x8] sm:$0xff]
        %v3496 = vld [vmem:[%s3493 + $0x10] sm:$0xff]
        %v3497 = vld [vmem:[%s3493 + $0x18] sm:$0xff]
        %v3498 = vld [vmem:[%s3493 + $0x20] sm:$0xff]
        %v3499 = vld [vmem:[%s3493 + $0x28] sm:$0xff]
        %v3500 = vld [vmem:[%s3493 + $0x30] sm:$0xff]
        %v3501 = vld [vmem:[%s3493 + $0x38] sm:$0xff]
        %v3502 = vld [vmem:[%s3493 + $0x40] sm:$0xff]
        %v3503 = vld [vmem:[%s3493 + $0x48] sm:$0xff]
        %v3504 = vld [vmem:[%s3493 + $0x50] sm:$0xff]
        %v3505 = vld [vmem:[%s3493 + $0x58] sm:$0xff]
        %v3506 = vld [vmem:[%s3493 + $0x60] sm:$0xff]
        %v3507 = vld [vmem:[%s3493 + $0x68] sm:$0xff]
        %v3508 = vld [vmem:[%s3493 + $0x70] sm:$0xff]
        %v3509 = vld [vmem:[%s3493 + $0x78] sm:$0xff]
        %v3510 = vld [vmem:[%s15 + $0x1] sm:$0x1]
        %v3511 = vlaneseq
        %v3512 = vshrl.u32 %v3511, 7
        %v3513 = vsub.s32 0, %v3512
        %v3514 = vrot.slane %v3510, %v3513
        %3515 = vmatprep.subr.mxu0 0.0
        %3516 = vmatpush1.msra.mxu0 %v3494
        %3517 = vmatprep.subr.mxu0 0.0
        %3518 = vmatpush1.msra.mxu0 %v3495
        %3519 = vmatprep.subr.mxu0 0.0
        %3520 = vmatpush1.msra.mxu0 %v3496
        %3521 = vmatprep.subr.mxu0 0.0
        %3522 = vmatpush1.msra.mxu0 %v3497
        %3523 = vmatprep.subr.mxu0 0.0
        %3524 = vmatpush1.msra.mxu0 %v3498
        %3525 = vmatprep.subr.mxu0 0.0
        %3526 = vmatpush1.msra.mxu0 %v3499
        %3527 = vmatprep.subr.mxu0 0.0
        %3528 = vmatpush1.msra.mxu0 %v3500
        %3529 = vmatprep.subr.mxu0 0.0
        %3530 = vmatpush1.msra.mxu0 %v3501
        %3531 = vmatprep.subr.mxu0 0.0
        %3532 = vmatpush1.msra.mxu0 %v3502
        %3533 = vmatprep.subr.mxu0 0.0
        %3534 = vmatpush1.msra.mxu0 %v3503
        %3535 = vmatprep.subr.mxu0 0.0
        %3536 = vmatpush1.msra.mxu0 %v3504
        %3537 = vmatprep.subr.mxu0 0.0
        %3538 = vmatpush1.msra.mxu0 %v3505
        %3539 = vmatprep.subr.mxu0 0.0
        %3540 = vmatpush1.msra.mxu0 %v3506
        %3541 = vmatprep.subr.mxu0 0.0
        %3542 = vmatpush1.msra.mxu0 %v3507
        %3543 = vmatprep.subr.mxu0 0.0
        %3544 = vmatpush1.msra.mxu0 %v3508
        %3545 = vmatprep.subr.mxu0 0.0
        %3546 = vmatpush1.msra.mxu0 %v3509
        %3547 = vmatprep.subr.mxu0 0.0
        %3548 = vmatpush1.msra.mxu0 0.0
        %3549 = vmatprep.subr.mxu0 0.0
        %3550 = vmatpush1.msra.mxu0 0.0
        %3551 = vmatprep.subr.mxu0 0.0
        %3552 = vmatpush1.msra.mxu0 0.0
        %3553 = vmatprep.subr.mxu0 0.0
        %3554 = vmatpush1.msra.mxu0 0.0
        %3555 = vmatprep.subr.mxu0 0.0
        %3556 = vmatpush1.msra.mxu0 0.0
        %3557 = vmatprep.subr.mxu0 0.0
        %3558 = vmatpush1.msra.mxu0 0.0
        %3559 = vmatprep.subr.mxu0 0.0
        %3560 = vmatpush1.msra.mxu0 0.0
        %3561 = vmatprep.subr.mxu0 0.0
        %3562 = vmatpush1.msra.mxu0 0.0
        %3563 = vmatprep.subr.mxu0 0.0
        %3564 = vmatpush1.msra.mxu0 0.0
        %3565 = vmatprep.subr.mxu0 0.0
        %3566 = vmatpush1.msra.mxu0 0.0
        %3567 = vmatprep.subr.mxu0 0.0
        %3568 = vmatpush1.msra.mxu0 0.0
        %3569 = vmatprep.subr.mxu0 0.0
        %3570 = vmatpush1.msra.mxu0 0.0
        %3571 = vmatprep.subr.mxu0 0.0
        %3572 = vmatpush1.msra.mxu0 0.0
        %3573 = vmatprep.subr.mxu0 0.0
        %3574 = vmatpush1.msra.mxu0 0.0
        %3575 = vmatprep.subr.mxu0 0.0
        %3576 = vmatpush1.msra.mxu0 0.0
        %3577 = vmatprep.subr.mxu0 0.0
        %3578 = vmatpush1.msra.mxu0 0.0
        %3579 = vmatprep.mubr.f32.mxu0 0.0
        %3580 = vmatmul.mubr.f32.gmra.mrb[0].mxu0 %v3492
        %v3581 = vpop.f32.mrb[0].mxu0
        %v3582 = vadd.f32 %v3514, %v3581
        %v3583 = vpop.f32.mrb[0].mxu0
        %3584 = vdwg.mxu0
        %v3585 = vadd.f32 %v3383, %v3582
        %v3586 = vld [vmem:[%s16] sm:$0x1]
        %v3587 = vld [vmem:[%s17] sm:$0x1]
        %v3588 = vsel %vm705, %v3585, 0.0
        %3589 = vadd.xlane.f32.xlu0 %v3588
        %v3590 = vpop.xlane.xlu0 %3589
        %v3591 = vmul.f32 %v3590, %v709
        %v3592 = vsub.f32 %v3585, %v3591
        %v3593 = vmul.f32 %v3592, %v3592
        %v3594 = vsel %vm705, %v3593, 0.0
        %3595 = vadd.xlane.f32.xlu0 %v3594
        %v3596 = vpop.xlane.xlu0 %3595
        %v3597 = vmul.f32 %v3596, %v709
        %v3598 = vadd.f32 %v3597, 1e-05
        %v3599 = vrsqrt.pop %v3598
        %v3600 = vmul.f32 %v3592, %v3599
        %v3602 = vlaneseq
        %v3603 = vshrl.u32 %v3602, 7
        %v3604 = vsub.s32 0, %v3603
        %v3605 = vrot.slane %v3586, %v3604
        %v3607 = vmul.f32 %v3600, %v3605
        %v3609 = vlaneseq
        %v3610 = vshrl.u32 %v3609, 7
        %v3611 = vsub.s32 0, %v3610
        %v3612 = vrot.slane %v3587, %v3611
        %v3614 = vadd.f32 %v3607, %v3612
        %v3615 = vld [vmem:[%s18] sm:$0xff]
        %v3616 = vld [vmem:[%s18 + $0x8] sm:$0xff]
        %v3617 = vld [vmem:[%s18 + $0x10] sm:$0xff]
        %v3618 = vld [vmem:[%s18 + $0x18] sm:$0xff]
        %v3619 = vld [vmem:[%s19] sm:$0x1]
        %v3621 = vlaneseq
        %v3622 = vshrl.u32 %v3621, 7
        %v3623 = vsub.s32 0, %v3622
        %v3624 = vrot.slane %v3619, %v3623
        %v3627 = vsel %vm705, %v3614, 0
        %3629 = vmatprep.subr.mxu0 0.0
        %3630 = vmatpush1.msra.mxu0 %v3615
        %3631 = vmatprep.subr.mxu0 0.0
        %3632 = vmatpush1.msra.mxu0 %v3616
        %3633 = vmatprep.subr.mxu0 0.0
        %3634 = vmatpush1.msra.mxu0 %v3617
        %3635 = vmatprep.subr.mxu0 0.0
        %3636 = vmatpush1.msra.mxu0 %v3618
        %3637 = vmatprep.subr.mxu0 0.0
        %3638 = vmatpush1.msra.mxu0 0.0
        %3639 = vmatprep.subr.mxu0 0.0
        %3640 = vmatpush1.msra.mxu0 0.0
        %3641 = vmatprep.subr.mxu0 0.0
        %3642 = vmatpush1.msra.mxu0 0.0
        %3643 = vmatprep.subr.mxu0 0.0
        %3644 = vmatpush1.msra.mxu0 0.0
        %3645 = vmatprep.subr.mxu0 0.0
        %3646 = vmatpush1.msra.mxu0 0.0
        %3647 = vmatprep.subr.mxu0 0.0
        %3648 = vmatpush1.msra.mxu0 0.0
        %3649 = vmatprep.subr.mxu0 0.0
        %3650 = vmatpush1.msra.mxu0 0.0
        %3651 = vmatprep.subr.mxu0 0.0
        %3652 = vmatpush1.msra.mxu0 0.0
        %3653 = vmatprep.subr.mxu0 0.0
        %3654 = vmatpush1.msra.mxu0 0.0
        %3655 = vmatprep.subr.mxu0 0.0
        %3656 = vmatpush1.msra.mxu0 0.0
        %3657 = vmatprep.subr.mxu0 0.0
        %3658 = vmatpush1.msra.mxu0 0.0
        %3659 = vmatprep.subr.mxu0 0.0
        %3660 = vmatpush1.msra.mxu0 0.0
        %3661 = vmatprep.subr.mxu0 0.0
        %3662 = vmatpush1.msra.mxu0 0.0
        %3663 = vmatprep.subr.mxu0 0.0
        %3664 = vmatpush1.msra.mxu0 0.0
        %3665 = vmatprep.subr.mxu0 0.0
        %3666 = vmatpush1.msra.mxu0 0.0
        %3667 = vmatprep.subr.mxu0 0.0
        %3668 = vmatpush1.msra.mxu0 0.0
        %3669 = vmatprep.subr.mxu0 0.0
        %3670 = vmatpush1.msra.mxu0 0.0
        %3671 = vmatprep.subr.mxu0 0.0
        %3672 = vmatpush1.msra.mxu0 0.0
        %3673 = vmatprep.subr.mxu0 0.0
        %3674 = vmatpush1.msra.mxu0 0.0
        %3675 = vmatprep.subr.mxu0 0.0
        %3676 = vmatpush1.msra.mxu0 0.0
        %3677 = vmatprep.subr.mxu0 0.0
        %3678 = vmatpush1.msra.mxu0 0.0
        %3679 = vmatprep.subr.mxu0 0.0
        %3680 = vmatpush1.msra.mxu0 0.0
        %3681 = vmatprep.subr.mxu0 0.0
        %3682 = vmatpush1.msra.mxu0 0.0
        %3683 = vmatprep.subr.mxu0 0.0
        %3684 = vmatpush1.msra.mxu0 0.0
        %3685 = vmatprep.subr.mxu0 0.0
        %3686 = vmatpush1.msra.mxu0 0.0
        %3687 = vmatprep.subr.mxu0 0.0
        %3688 = vmatpush1.msra.mxu0 0.0
        %3689 = vmatprep.subr.mxu0 0.0
        %3690 = vmatpush1.msra.mxu0 0.0
        %3691 = vmatprep.subr.mxu0 0.0
        %3692 = vmatpush1.msra.mxu0 0.0
        %3693 = vmatprep.mubr.f32.mxu0 0.0
        %3694 = vmatmul.mubr.f32.gmra.mrb[0].mxu0 %v3627
        %v3695 = vpop.f32.mrb[0].mxu0
        %v3696 = vadd.f32 %v3624, %v3695
        %v3697 = vpop.f32.mrb[0].mxu0
        %3698 = vdwg.mxu0
        %3699 = vst [vmem:[%s638] sm:$0xff] %v3696
        %s3700 = sand.u32 %s448, 1
        %s3701 = scalar_lea.sflag [#allocation7], %s3700
        %s3702 = sand.u32 %s448, 1
        %s3703 = smul.addr %s3702, 8
        %s3704 = scalar_lea.vmem [#allocation13], %s3703
        // Predicated region
        $region113: #{tpu_custom_call.1} parent=95 // pred_check
          %p3705 = pneg %p458
        $region114: #{tpu_custom_call.1} parent=95 // pred_check_branch
          %3707 = sbr.rel (%p3705) target = $region116
        $region115: #{tpu_custom_call.1} parent=95 // pred_region
          %s3709 = ssub.s32 128, 128
          %3710 = vsyncadd %s3701, %s3709
          %s3711 = smul.addr %s41, 128
          %s3712 = scalar_lea.hbm %s20, %s3711
          %s3714 = sshll.u32 %s3704, 4
          %s3715 = int_to_ptr.vmem [resolvable:$true] %s3714
          %3717 = dma.vmem_to_hbm [thread:$0]  %s3715, 128, %s3712, %s3701
        $region116: #{tpu_custom_call.1} parent=95 // pred_fallthru
          _
      $region96: #{tpu_custom_call.1} parent=5 // pred_fallthru
        _
      %p3718 = scmp.le.s32.totalorder 2, %s36
      // Predicated region
      $region117: #{tpu_custom_call.1} parent=5 // pred_check
        %p3719 = pneg %p3718
      $region118: #{tpu_custom_call.1} parent=5 // pred_check_branch
        %3721 = sbr.rel (%p3719) target = $region120
      $region119: #{tpu_custom_call.1} parent=5 // pred_region
        %s3722 = ssub.s32 %s36, 2
        // Predicated region
        $region121: #{tpu_custom_call.1} parent=119 // pred_check
          %p3723 = pneg %p464
        $region122: #{tpu_custom_call.1} parent=119 // pred_check_branch
          %3725 = sbr.rel (%p3723) target = $region124
        $region123: #{tpu_custom_call.1} parent=119 // pred_region
          %s3726 = sand.u32 %s449, 1
          %s3727 = scalar_lea.sflag [#allocation7], %s3726
          %s3728 = sand.u32 %s449, 1
          %s3729 = smul.addr %s3728, 8
          %s3730 = scalar_lea.vmem [#allocation13], %s3729
          %3731 = dma.done %s3727, 128
        $region124: #{tpu_custom_call.1} parent=119 // pred_fallthru
          _
      $region120: #{tpu_custom_call.1} parent=5 // pred_fallthru
        _
    $region6: #{tpu_custom_call.1} parent=1 // loop_footer
      %s40 = sadd.s32 1, %s36
    $region7: #{tpu_custom_call.1} parent=1 // loop_footer_branch
      %35 = sbr.rel target = $region3
    $region8: #{tpu_custom_call.1} parent=1 // loop_exit
      _
    %3732 = vsyncpa [#allocation6], 1
    %s3733 = scalar_lea.sflag [#allocation6], 1
    %3734 = vsyncpa %s3733, 1
    %3735 = vsyncpa [#allocation9], 1
    %3736 = vsyncpa [#allocation12], 1
    %3737 = vsyncpa [#allocation7], 1
    %s3738 = scalar_lea.sflag [#allocation7], 1
    %3739 = vsyncpa %s3738, 1

</llo_original>
